<compile_context>
chip_gen: v7x
topology: tpu7x:2x2x1
jax: 0.10.0
libtpu: 0.0.40
codegen_flags: <defaults>
</compile_context>

<pallas_src>
import functools

import jax
import jax.numpy as jnp
from jax import lax
from jax.experimental import pallas as pl
from jax.experimental.pallas import tpu as pltpu


# ------------------------------ fused kernel --------------------------------

def _downstep_kernel(x_ref, w1_ref, w2_ref, b2_ref, g_ref, b_ref,
                     pool_ref, down_ref, *,
                     N, H, W, H1, W1, inv_count):
    HW = H * W
    NHW = N * HW

    def lshift(v, s):
        # u[:, q] = v[:, (q + s) % NHW]; cyclic wrap lands only in garbage
        # columns (per-batch tail), which never reach a valid output.
        if s == 0:
            return v
        return pltpu.roll(v, NHW - s, axis=1)

    x = x_ref[...]                                        # (Ci, N*H*W)

    # ---- conv1 (bias dropped: exactly cancelled by train-mode BN) ----------
    # 9 full-width MXU dots; tap alignment via XLU lane rotations (no
    # unaligned value slices, no relayouts).
    acc1 = jnp.dot(w1_ref[0], x, preferred_element_type=jnp.float32)
    for k in range(1, 9):
        s = (k // 3) * W + (k % 3)                        # flat shift dh*W + dw
        acc1 = acc1 + lshift(
            jnp.dot(w1_ref[k], x, preferred_element_type=jnp.float32), s)

    # ---- validity mask built in-kernel (no constant DMA) -------------------
    q = lax.broadcasted_iota(jnp.int32, (1, NHW), 1)
    if (W & (W - 1)) == 0 and (HW & (HW - 1)) == 0:       # power-of-two fast path
        local = q & (HW - 1)                              # index within batch slot
        w_loc = q & (W - 1)                               # column within row
    else:
        local = q % HW
        w_loc = q % W
    mask = ((local < H1 * W) & (w_loc < W1)).astype(jnp.float32)   # (1, N*H*W)

    # ---- one-pass BatchNorm statistics (training mode, biased variance) ----
    am = acc1 * mask
    mean = jnp.sum(am, axis=1, keepdims=True) * inv_count           # (Co, 1)
    var = jnp.sum(am * acc1, axis=1, keepdims=True) * inv_count - mean * mean
    scale = g_ref[...] * lax.rsqrt(var + 1e-5)                      # (Co, 1)

    # BN + ReLU (garbage columns are normalised too -- harmless: finite values
    # that only ever feed garbage columns downstream).
    a = jnp.maximum((acc1 - mean) * scale + b_ref[...], 0.0)        # (Co, N*H*W)

    # ---- conv2 (+bias), same 9-tap roll-aligned scheme ----------------------
    acc2 = jnp.dot(w2_ref[0], a, preferred_element_type=jnp.float32) + b2_ref[...]
    for k in range(1, 9):
        s = (k // 3) * W + (k % 3)
        acc2 = acc2 + lshift(
            jnp.dot(w2_ref[k], a, preferred_element_type=jnp.float32), s)

    # ---- 2x2 / stride-2 maxpool on the over-width buffer --------------------
    vmax = jnp.maximum(acc2, lshift(acc2, W))             # vertical pair max
    hmax = jnp.maximum(vmax, lshift(vmax, 1))             # horizontal pair max

    # ---- lane-dense stores: full (Co, H*W) slab per batch element -----------
    # Lane offsets n*H*W and widths H*W are multiples of 128, so these value
    # slices are pure lane-tile selects and every vst is unmasked.
    for n in range(N):
        down_ref[n, :, :] = acc2[:, n * HW:(n + 1) * HW]
        pool_ref[n, :, :] = hmax[:, n * HW:(n + 1) * HW]


# ------------------------------- wrapper -------------------------------------

def downstep_forward(x_nchw, params):
    w1 = params["w1"]
    gamma, beta = params["gamma"], params["beta"]
    w2, b2 = params["w2"], params["b2"]
    # params["b1"] intentionally unused: a per-channel constant bias in front of
    # a *training-mode* BatchNorm cancels exactly in (y - batch_mean).
    # TODO(synk): eval-mode BN (running stats) would require re-adding b1.

    N, Ci, H, W = x_nchw.shape
    Co = w1.shape[0]
    H1, W1 = H - 2, W - 2          # after conv1 (3x3 VALID)
    H2, W2 = H1 - 2, W1 - 2        # after conv2
    Hp, Wp = H2 // 2, W2 // 2      # after 2x2/2 maxpool
    HW, NHW = H * W, N * H * W

    # Batch folded onto the lane axis: (Ci, N*H*W) with batch-major H*W slots.
    x_flat = (x_nchw.astype(jnp.float32)
              .transpose(1, 0, 2, 3)
              .reshape(Ci, NHW))
    w1_r = jnp.transpose(w1, (2, 3, 0, 1)).reshape(9, Co, Ci).astype(jnp.float32)
    w2_r = jnp.transpose(w2, (2, 3, 0, 1)).reshape(9, Co, Co).astype(jnp.float32)
    b2c = b2.reshape(Co, 1).astype(jnp.float32)
    gc = gamma.reshape(Co, 1).astype(jnp.float32)
    bc = beta.reshape(Co, 1).astype(jnp.float32)

    kernel = functools.partial(
        _downstep_kernel, N=N, H=H, W=W, H1=H1, W1=W1,
        inv_count=1.0 / float(N * H1 * W1))

    pool_raw, down_raw = pl.pallas_call(
        kernel,
        out_shape=(jax.ShapeDtypeStruct((N, Co, HW), jnp.float32),
                   jax.ShapeDtypeStruct((N, Co, HW), jnp.float32)),
        grid=(1,),
        in_specs=[
            pl.BlockSpec((Ci, NHW), lambda i: (0, 0)),
            pl.BlockSpec((9, Co, Ci), lambda i: (0, 0, 0)),
            pl.BlockSpec((9, Co, Co), lambda i: (0, 0, 0)),
            pl.BlockSpec((Co, 1), lambda i: (0, 0)),
            pl.BlockSpec((Co, 1), lambda i: (0, 0)),
            pl.BlockSpec((Co, 1), lambda i: (0, 0)),
        ],
        out_specs=(pl.BlockSpec((N, Co, HW), lambda i: (0, 0, 0)),
                   pl.BlockSpec((N, Co, HW), lambda i: (0, 0, 0))),
        compiler_params=pltpu.CompilerParams(
            dimension_semantics=("arbitrary",)),
    )(x_flat, w1_r, w2_r, b2c, gc, bc)

    # Wrapper-side extraction of the valid windows (layout plumbing only):
    # over-width flat index h*W + w  <->  position (h, w) of the HxW slab.
    down_full = down_raw.reshape(N, Co, H, W)
    pool_full = pool_raw.reshape(N, Co, H, W)
    x_down = down_full[:, :, :H2, :W2]
    x_pool = pool_full[:, :, 0:2 * Hp:2, 0:2 * Wp:2]
    return x_pool, x_down


# ----------------------- pure-JAX reference (check) --------------------------

def downstep_reference(x_nchw, params):
    w1, b1 = params["w1"], params["b1"]
    gamma, beta = params["gamma"], params["beta"]
    w2, b2 = params["w2"], params["b2"]

    def conv(x, w, b):
        dn = lax.conv_dimension_numbers(x.shape, w.shape, ("NCHW", "OIHW", "NCHW"))
        y = lax.conv_general_dilated(
            x, w, (1, 1), "VALID", dimension_numbers=dn,
            precision=lax.Precision.HIGHEST)
        return y + b[None, :, None, None]

    y = conv(x_nchw, w1, b1)
    mean = jnp.mean(y, axis=(0, 2, 3), keepdims=True)
    var = jnp.mean((y - mean) ** 2, axis=(0, 2, 3), keepdims=True)
    y = (y - mean) * lax.rsqrt(var + 1e-5)
    y = jnp.maximum(y * gamma[None, :, None, None] + beta[None, :, None, None], 0.0)
    xdown = conv(y, w2, b2)
    xpool = lax.reduce_window(xdown, -jnp.inf, lax.max,
                              (1, 1, 2, 2), (1, 1, 2, 2), "VALID")
    return xpool, xdown


# --------------------------------- main ---------------------------------------

if __name__ == "__main__":
    N, Ci, Co, H, W = 2, 4, 8, 16, 16

    key = jax.random.PRNGKey(0)
    k1, k2, k3, k4, kx = jax.random.split(key, 5)
    params = dict(
        w1=0.1 * jax.random.normal(k1, (Co, Ci, 3, 3), jnp.float32),
        b1=0.1 * jax.random.normal(k2, (Co,), jnp.float32),
        gamma=jnp.ones((Co,), jnp.float32),   # PyTorch BN default weight
        beta=jnp.zeros((Co,), jnp.float32),   # PyTorch BN default bias
        w2=0.1 * jax.random.normal(k3, (Co, Co, 3, 3), jnp.float32),
        b2=0.1 * jax.random.normal(k4, (Co,), jnp.float32),
    )
    x = jax.random.normal(kx, (N, Ci, H, W), jnp.float32)

    fwd = jax.jit(downstep_forward)
    x_pool, x_down = fwd(x, params)
    jax.block_until_ready((x_pool, x_down))

    # 16 -> conv 14 -> conv 12 -> pool 6
    assert x_pool.shape == (N, Co, 6, 6), x_pool.shape
    assert x_down.shape == (N, Co, 12, 12), x_down.shape

    ref_pool, ref_down = downstep_reference(x, params)
    assert jnp.allclose(x_down, ref_down, rtol=1e-2, atol=1e-2)
    assert jnp.allclose(x_pool, ref_pool, rtol=1e-2, atol=1e-2)

    print("KERNEL_OK")
</pallas_src>

<mosaic_0001>
module attributes {stable_mosaic.version = 11 : i64} {
  func.func @_downstep_kernel(%arg0: i32, %arg1: memref<4x512xf32, #tpu.memory_space<vmem>>, %arg2: memref<9x8x4xf32, #tpu.memory_space<vmem>>, %arg3: memref<9x8x8xf32, #tpu.memory_space<vmem>>, %arg4: memref<8x1xf32, #tpu.memory_space<vmem>>, %arg5: memref<8x1xf32, #tpu.memory_space<vmem>>, %arg6: memref<8x1xf32, #tpu.memory_space<vmem>>, %arg7: memref<2x8x256xf32, #tpu.memory_space<vmem>>, %arg8: memref<2x8x256xf32, #tpu.memory_space<vmem>>) attributes {dimension_semantics = [#tpu.dimension_semantics<arbitrary>], iteration_bounds = array<i64: 1>, scalar_prefetch = 0 : i64, scratch_operands = 0 : i64, tpu.core_type = #tpu.core_type<tc>, window_params = [{pipeline_mode = #tpu.pipeline_mode<synchronous>, transform_indices = @transform_0, window_bounds = array<i64: 4, 512>}, {pipeline_mode = #tpu.pipeline_mode<synchronous>, transform_indices = @transform_1, window_bounds = array<i64: 9, 8, 4>}, {pipeline_mode = #tpu.pipeline_mode<synchronous>, transform_indices = @transform_2, window_bounds = array<i64: 9, 8, 8>}, {pipeline_mode = #tpu.pipeline_mode<synchronous>, transform_indices = @transform_3, window_bounds = array<i64: 8, 1>}, {pipeline_mode = #tpu.pipeline_mode<synchronous>, transform_indices = @transform_4, window_bounds = array<i64: 8, 1>}, {pipeline_mode = #tpu.pipeline_mode<synchronous>, transform_indices = @transform_5, window_bounds = array<i64: 8, 1>}, {pipeline_mode = #tpu.pipeline_mode<synchronous>, transform_indices = @transform_6, window_bounds = array<i64: 2, 8, 256>}, {pipeline_mode = #tpu.pipeline_mode<synchronous>, transform_indices = @transform_7, window_bounds = array<i64: 2, 8, 256>}]} {
    %c0 = arith.constant 0 : index
    %c0_0 = arith.constant 0 : index
    %0 = vector.load %arg1[%c0, %c0_0] : memref<4x512xf32, #tpu.memory_space<vmem>>, vector<4x512xf32>
    %c0_1 = arith.constant 0 : index
    %c0_2 = arith.constant 0 : index
    %c0_3 = arith.constant 0 : index
    %1 = vector.load %arg2[%c0_1, %c0_2, %c0_3] : memref<9x8x4xf32, #tpu.memory_space<vmem>>, vector<1x8x4xf32>
    %2 = vector.shape_cast %1 : vector<1x8x4xf32> to vector<8x4xf32>
    %cst = arith.constant dense<0.000000e+00> : vector<8x512xf32>
    %3 = tpu.matmul %2, %0, %cst {dimension_numbers = #tpu.dot_dimension_numbers<[1], [0], [0], [1], [0, 0, 1, 1], [], []>} : vector<8x4xf32>, vector<4x512xf32>, vector<8x512xf32> -> vector<8x512xf32>
    %c1 = arith.constant 1 : index
    %c0_4 = arith.constant 0 : index
    %c0_5 = arith.constant 0 : index
    %4 = vector.load %arg2[%c1, %c0_4, %c0_5] : memref<9x8x4xf32, #tpu.memory_space<vmem>>, vector<1x8x4xf32>
    %5 = vector.shape_cast %4 : vector<1x8x4xf32> to vector<8x4xf32>
    %cst_6 = arith.constant dense<0.000000e+00> : vector<8x512xf32>
    %6 = tpu.matmul %5, %0, %cst_6 {dimension_numbers = #tpu.dot_dimension_numbers<[1], [0], [0], [1], [0, 0, 1, 1], [], []>} : vector<8x4xf32>, vector<4x512xf32>, vector<8x512xf32> -> vector<8x512xf32>
    %c511_i32 = arith.constant 511 : i32
    %7 = tpu.dynamic_rotate %6 by %c511_i32 dim 1 : vector<8x512xf32>, i32 -> vector<8x512xf32>
    %8 = arith.addf %3, %7 : vector<8x512xf32>
    %c2 = arith.constant 2 : index
    %c0_7 = arith.constant 0 : index
    %c0_8 = arith.constant 0 : index
    %9 = vector.load %arg2[%c2, %c0_7, %c0_8] : memref<9x8x4xf32, #tpu.memory_space<vmem>>, vector<1x8x4xf32>
    %10 = vector.shape_cast %9 : vector<1x8x4xf32> to vector<8x4xf32>
    %cst_9 = arith.constant dense<0.000000e+00> : vector<8x512xf32>
    %11 = tpu.matmul %10, %0, %cst_9 {dimension_numbers = #tpu.dot_dimension_numbers<[1], [0], [0], [1], [0, 0, 1, 1], [], []>} : vector<8x4xf32>, vector<4x512xf32>, vector<8x512xf32> -> vector<8x512xf32>
    %c510_i32 = arith.constant 510 : i32
    %12 = tpu.dynamic_rotate %11 by %c510_i32 dim 1 : vector<8x512xf32>, i32 -> vector<8x512xf32>
    %13 = arith.addf %8, %12 : vector<8x512xf32>
    %c3 = arith.constant 3 : index
    %c0_10 = arith.constant 0 : index
    %c0_11 = arith.constant 0 : index
    %14 = vector.load %arg2[%c3, %c0_10, %c0_11] : memref<9x8x4xf32, #tpu.memory_space<vmem>>, vector<1x8x4xf32>
    %15 = vector.shape_cast %14 : vector<1x8x4xf32> to vector<8x4xf32>
    %cst_12 = arith.constant dense<0.000000e+00> : vector<8x512xf32>
    %16 = tpu.matmul %15, %0, %cst_12 {dimension_numbers = #tpu.dot_dimension_numbers<[1], [0], [0], [1], [0, 0, 1, 1], [], []>} : vector<8x4xf32>, vector<4x512xf32>, vector<8x512xf32> -> vector<8x512xf32>
    %c496_i32 = arith.constant 496 : i32
    %17 = tpu.dynamic_rotate %16 by %c496_i32 dim 1 : vector<8x512xf32>, i32 -> vector<8x512xf32>
    %18 = arith.addf %13, %17 : vector<8x512xf32>
    %c4 = arith.constant 4 : index
    %c0_13 = arith.constant 0 : index
    %c0_14 = arith.constant 0 : index
    %19 = vector.load %arg2[%c4, %c0_13, %c0_14] : memref<9x8x4xf32, #tpu.memory_space<vmem>>, vector<1x8x4xf32>
    %20 = vector.shape_cast %19 : vector<1x8x4xf32> to vector<8x4xf32>
    %cst_15 = arith.constant dense<0.000000e+00> : vector<8x512xf32>
    %21 = tpu.matmul %20, %0, %cst_15 {dimension_numbers = #tpu.dot_dimension_numbers<[1], [0], [0], [1], [0, 0, 1, 1], [], []>} : vector<8x4xf32>, vector<4x512xf32>, vector<8x512xf32> -> vector<8x512xf32>
    %c495_i32 = arith.constant 495 : i32
    %22 = tpu.dynamic_rotate %21 by %c495_i32 dim 1 : vector<8x512xf32>, i32 -> vector<8x512xf32>
    %23 = arith.addf %18, %22 : vector<8x512xf32>
    %c5 = arith.constant 5 : index
    %c0_16 = arith.constant 0 : index
    %c0_17 = arith.constant 0 : index
    %24 = vector.load %arg2[%c5, %c0_16, %c0_17] : memref<9x8x4xf32, #tpu.memory_space<vmem>>, vector<1x8x4xf32>
    %25 = vector.shape_cast %24 : vector<1x8x4xf32> to vector<8x4xf32>
    %cst_18 = arith.constant dense<0.000000e+00> : vector<8x512xf32>
    %26 = tpu.matmul %25, %0, %cst_18 {dimension_numbers = #tpu.dot_dimension_numbers<[1], [0], [0], [1], [0, 0, 1, 1], [], []>} : vector<8x4xf32>, vector<4x512xf32>, vector<8x512xf32> -> vector<8x512xf32>
    %c494_i32 = arith.constant 494 : i32
    %27 = tpu.dynamic_rotate %26 by %c494_i32 dim 1 : vector<8x512xf32>, i32 -> vector<8x512xf32>
    %28 = arith.addf %23, %27 : vector<8x512xf32>
    %c6 = arith.constant 6 : index
    %c0_19 = arith.constant 0 : index
    %c0_20 = arith.constant 0 : index
    %29 = vector.load %arg2[%c6, %c0_19, %c0_20] : memref<9x8x4xf32, #tpu.memory_space<vmem>>, vector<1x8x4xf32>
    %30 = vector.shape_cast %29 : vector<1x8x4xf32> to vector<8x4xf32>
    %cst_21 = arith.constant dense<0.000000e+00> : vector<8x512xf32>
    %31 = tpu.matmul %30, %0, %cst_21 {dimension_numbers = #tpu.dot_dimension_numbers<[1], [0], [0], [1], [0, 0, 1, 1], [], []>} : vector<8x4xf32>, vector<4x512xf32>, vector<8x512xf32> -> vector<8x512xf32>
    %c480_i32 = arith.constant 480 : i32
    %32 = tpu.dynamic_rotate %31 by %c480_i32 dim 1 : vector<8x512xf32>, i32 -> vector<8x512xf32>
    %33 = arith.addf %28, %32 : vector<8x512xf32>
    %c7 = arith.constant 7 : index
    %c0_22 = arith.constant 0 : index
    %c0_23 = arith.constant 0 : index
    %34 = vector.load %arg2[%c7, %c0_22, %c0_23] : memref<9x8x4xf32, #tpu.memory_space<vmem>>, vector<1x8x4xf32>
    %35 = vector.shape_cast %34 : vector<1x8x4xf32> to vector<8x4xf32>
    %cst_24 = arith.constant dense<0.000000e+00> : vector<8x512xf32>
    %36 = tpu.matmul %35, %0, %cst_24 {dimension_numbers = #tpu.dot_dimension_numbers<[1], [0], [0], [1], [0, 0, 1, 1], [], []>} : vector<8x4xf32>, vector<4x512xf32>, vector<8x512xf32> -> vector<8x512xf32>
    %c479_i32 = arith.constant 479 : i32
    %37 = tpu.dynamic_rotate %36 by %c479_i32 dim 1 : vector<8x512xf32>, i32 -> vector<8x512xf32>
    %38 = arith.addf %33, %37 : vector<8x512xf32>
    %c8 = arith.constant 8 : index
    %c0_25 = arith.constant 0 : index
    %c0_26 = arith.constant 0 : index
    %39 = vector.load %arg2[%c8, %c0_25, %c0_26] : memref<9x8x4xf32, #tpu.memory_space<vmem>>, vector<1x8x4xf32>
    %40 = vector.shape_cast %39 : vector<1x8x4xf32> to vector<8x4xf32>
    %cst_27 = arith.constant dense<0.000000e+00> : vector<8x512xf32>
    %41 = tpu.matmul %40, %0, %cst_27 {dimension_numbers = #tpu.dot_dimension_numbers<[1], [0], [0], [1], [0, 0, 1, 1], [], []>} : vector<8x4xf32>, vector<4x512xf32>, vector<8x512xf32> -> vector<8x512xf32>
    %c478_i32 = arith.constant 478 : i32
    %42 = tpu.dynamic_rotate %41 by %c478_i32 dim 1 : vector<8x512xf32>, i32 -> vector<8x512xf32>
    %43 = arith.addf %38, %42 : vector<8x512xf32>
    %44 = tpu.iota {dimensions = array<i32: 1>} : vector<1x512xi32>
    %c255_i32 = arith.constant 255 : i32
    %45 = vector.broadcast %c255_i32 : i32 to vector<1x512xi32>
    %46 = arith.andi %44, %45 : vector<1x512xi32>
    %c15_i32 = arith.constant 15 : i32
    %47 = vector.broadcast %c15_i32 : i32 to vector<1x512xi32>
    %48 = arith.andi %44, %47 : vector<1x512xi32>
    %c224_i32 = arith.constant 224 : i32
    %49 = vector.broadcast %c224_i32 : i32 to vector<1x512xi32>
    %50 = arith.cmpi slt, %46, %49 : vector<1x512xi32>
    %c14_i32 = arith.constant 14 : i32
    %51 = vector.broadcast %c14_i32 : i32 to vector<1x512xi32>
    %52 = arith.cmpi slt, %48, %51 : vector<1x512xi32>
    %53 = arith.andi %50, %52 : vector<1x512xi1>
    %54 = arith.extui %53 : vector<1x512xi1> to vector<1x512xi32>
    %55 = arith.sitofp %54 : vector<1x512xi32> to vector<1x512xf32>
    %56 = vector.broadcast %55 : vector<1x512xf32> to vector<8x512xf32>
    %57 = arith.mulf %43, %56 : vector<8x512xf32>
    %cst_28 = arith.constant dense<0.000000e+00> : vector<8xf32>
    %58 = vector.multi_reduction <add>, %57, %cst_28 [1] : vector<8x512xf32> to vector<8xf32>
    %59 = vector.shape_cast %58 : vector<8xf32> to vector<8x1xf32>
    %cst_29 = arith.constant 0.00255102036 : f32
    %60 = vector.broadcast %cst_29 : f32 to vector<8x1xf32>
    %61 = arith.mulf %59, %60 : vector<8x1xf32>
    %62 = arith.mulf %57, %43 : vector<8x512xf32>
    %cst_30 = arith.constant dense<0.000000e+00> : vector<8xf32>
    %63 = vector.multi_reduction <add>, %62, %cst_30 [1] : vector<8x512xf32> to vector<8xf32>
    %64 = vector.shape_cast %63 : vector<8xf32> to vector<8x1xf32>
    %cst_31 = arith.constant 0.00255102036 : f32
    %65 = vector.broadcast %cst_31 : f32 to vector<8x1xf32>
    %66 = arith.mulf %64, %65 : vector<8x1xf32>
    %67 = arith.mulf %61, %61 : vector<8x1xf32>
    %68 = arith.subf %66, %67 : vector<8x1xf32>
    %c0_32 = arith.constant 0 : index
    %c0_33 = arith.constant 0 : index
    %69 = vector.load %arg5[%c0_32, %c0_33] : memref<8x1xf32, #tpu.memory_space<vmem>>, vector<8x1xf32>
    %cst_34 = arith.constant 9.99999974E-6 : f32
    %70 = vector.broadcast %cst_34 : f32 to vector<8x1xf32>
    %71 = arith.addf %68, %70 : vector<8x1xf32>
    %72 = math.rsqrt %71 : vector<8x1xf32>
    %73 = arith.mulf %69, %72 : vector<8x1xf32>
    %74 = vector.broadcast %61 : vector<8x1xf32> to vector<8x512xf32>
    %75 = arith.subf %43, %74 : vector<8x512xf32>
    %76 = vector.broadcast %73 : vector<8x1xf32> to vector<8x512xf32>
    %77 = arith.mulf %75, %76 : vector<8x512xf32>
    %c0_35 = arith.constant 0 : index
    %c0_36 = arith.constant 0 : index
    %78 = vector.load %arg6[%c0_35, %c0_36] : memref<8x1xf32, #tpu.memory_space<vmem>>, vector<8x1xf32>
    %79 = vector.broadcast %78 : vector<8x1xf32> to vector<8x512xf32>
    %80 = arith.addf %77, %79 : vector<8x512xf32>
    %cst_37 = arith.constant 0.000000e+00 : f32
    %81 = vector.broadcast %cst_37 : f32 to vector<8x512xf32>
    %82 = arith.maximumf %80, %81 : vector<8x512xf32>
    %c0_38 = arith.constant 0 : index
    %c0_39 = arith.constant 0 : index
    %c0_40 = arith.constant 0 : index
    %83 = vector.load %arg3[%c0_38, %c0_39, %c0_40] : memref<9x8x8xf32, #tpu.memory_space<vmem>>, vector<1x8x8xf32>
    %84 = vector.shape_cast %83 : vector<1x8x8xf32> to vector<8x8xf32>
    %cst_41 = arith.constant dense<0.000000e+00> : vector<8x512xf32>
    %85 = tpu.matmul %84, %82, %cst_41 {dimension_numbers = #tpu.dot_dimension_numbers<[1], [0], [0], [1], [0, 0, 1, 1], [], []>} : vector<8x8xf32>, vector<8x512xf32>, vector<8x512xf32> -> vector<8x512xf32>
    %c0_42 = arith.constant 0 : index
    %c0_43 = arith.constant 0 : index
    %86 = vector.load %arg4[%c0_42, %c0_43] : memref<8x1xf32, #tpu.memory_space<vmem>>, vector<8x1xf32>
    %87 = vector.broadcast %86 : vector<8x1xf32> to vector<8x512xf32>
    %88 = arith.addf %85, %87 : vector<8x512xf32>
    %c1_44 = arith.constant 1 : index
    %c0_45 = arith.constant 0 : index
    %c0_46 = arith.constant 0 : index
    %89 = vector.load %arg3[%c1_44, %c0_45, %c0_46] : memref<9x8x8xf32, #tpu.memory_space<vmem>>, vector<1x8x8xf32>
    %90 = vector.shape_cast %89 : vector<1x8x8xf32> to vector<8x8xf32>
    %cst_47 = arith.constant dense<0.000000e+00> : vector<8x512xf32>
    %91 = tpu.matmul %90, %82, %cst_47 {dimension_numbers = #tpu.dot_dimension_numbers<[1], [0], [0], [1], [0, 0, 1, 1], [], []>} : vector<8x8xf32>, vector<8x512xf32>, vector<8x512xf32> -> vector<8x512xf32>
    %c511_i32_48 = arith.constant 511 : i32
    %92 = tpu.dynamic_rotate %91 by %c511_i32_48 dim 1 : vector<8x512xf32>, i32 -> vector<8x512xf32>
    %93 = arith.addf %88, %92 : vector<8x512xf32>
    %c2_49 = arith.constant 2 : index
    %c0_50 = arith.constant 0 : index
    %c0_51 = arith.constant 0 : index
    %94 = vector.load %arg3[%c2_49, %c0_50, %c0_51] : memref<9x8x8xf32, #tpu.memory_space<vmem>>, vector<1x8x8xf32>
    %95 = vector.shape_cast %94 : vector<1x8x8xf32> to vector<8x8xf32>
    %cst_52 = arith.constant dense<0.000000e+00> : vector<8x512xf32>
    %96 = tpu.matmul %95, %82, %cst_52 {dimension_numbers = #tpu.dot_dimension_numbers<[1], [0], [0], [1], [0, 0, 1, 1], [], []>} : vector<8x8xf32>, vector<8x512xf32>, vector<8x512xf32> -> vector<8x512xf32>
    %c510_i32_53 = arith.constant 510 : i32
    %97 = tpu.dynamic_rotate %96 by %c510_i32_53 dim 1 : vector<8x512xf32>, i32 -> vector<8x512xf32>
    %98 = arith.addf %93, %97 : vector<8x512xf32>
    %c3_54 = arith.constant 3 : index
    %c0_55 = arith.constant 0 : index
    %c0_56 = arith.constant 0 : index
    %99 = vector.load %arg3[%c3_54, %c0_55, %c0_56] : memref<9x8x8xf32, #tpu.memory_space<vmem>>, vector<1x8x8xf32>
    %100 = vector.shape_cast %99 : vector<1x8x8xf32> to vector<8x8xf32>
    %cst_57 = arith.constant dense<0.000000e+00> : vector<8x512xf32>
    %101 = tpu.matmul %100, %82, %cst_57 {dimension_numbers = #tpu.dot_dimension_numbers<[1], [0], [0], [1], [0, 0, 1, 1], [], []>} : vector<8x8xf32>, vector<8x512xf32>, vector<8x512xf32> -> vector<8x512xf32>
    %c496_i32_58 = arith.constant 496 : i32
    %102 = tpu.dynamic_rotate %101 by %c496_i32_58 dim 1 : vector<8x512xf32>, i32 -> vector<8x512xf32>
    %103 = arith.addf %98, %102 : vector<8x512xf32>
    %c4_59 = arith.constant 4 : index
    %c0_60 = arith.constant 0 : index
    %c0_61 = arith.constant 0 : index
    %104 = vector.load %arg3[%c4_59, %c0_60, %c0_61] : memref<9x8x8xf32, #tpu.memory_space<vmem>>, vector<1x8x8xf32>
    %105 = vector.shape_cast %104 : vector<1x8x8xf32> to vector<8x8xf32>
    %cst_62 = arith.constant dense<0.000000e+00> : vector<8x512xf32>
    %106 = tpu.matmul %105, %82, %cst_62 {dimension_numbers = #tpu.dot_dimension_numbers<[1], [0], [0], [1], [0, 0, 1, 1], [], []>} : vector<8x8xf32>, vector<8x512xf32>, vector<8x512xf32> -> vector<8x512xf32>
    %c495_i32_63 = arith.constant 495 : i32
    %107 = tpu.dynamic_rotate %106 by %c495_i32_63 dim 1 : vector<8x512xf32>, i32 -> vector<8x512xf32>
    %108 = arith.addf %103, %107 : vector<8x512xf32>
    %c5_64 = arith.constant 5 : index
    %c0_65 = arith.constant 0 : index
    %c0_66 = arith.constant 0 : index
    %109 = vector.load %arg3[%c5_64, %c0_65, %c0_66] : memref<9x8x8xf32, #tpu.memory_space<vmem>>, vector<1x8x8xf32>
    %110 = vector.shape_cast %109 : vector<1x8x8xf32> to vector<8x8xf32>
    %cst_67 = arith.constant dense<0.000000e+00> : vector<8x512xf32>
    %111 = tpu.matmul %110, %82, %cst_67 {dimension_numbers = #tpu.dot_dimension_numbers<[1], [0], [0], [1], [0, 0, 1, 1], [], []>} : vector<8x8xf32>, vector<8x512xf32>, vector<8x512xf32> -> vector<8x512xf32>
    %c494_i32_68 = arith.constant 494 : i32
    %112 = tpu.dynamic_rotate %111 by %c494_i32_68 dim 1 : vector<8x512xf32>, i32 -> vector<8x512xf32>
    %113 = arith.addf %108, %112 : vector<8x512xf32>
    %c6_69 = arith.constant 6 : index
    %c0_70 = arith.constant 0 : index
    %c0_71 = arith.constant 0 : index
    %114 = vector.load %arg3[%c6_69, %c0_70, %c0_71] : memref<9x8x8xf32, #tpu.memory_space<vmem>>, vector<1x8x8xf32>
    %115 = vector.shape_cast %114 : vector<1x8x8xf32> to vector<8x8xf32>
    %cst_72 = arith.constant dense<0.000000e+00> : vector<8x512xf32>
    %116 = tpu.matmul %115, %82, %cst_72 {dimension_numbers = #tpu.dot_dimension_numbers<[1], [0], [0], [1], [0, 0, 1, 1], [], []>} : vector<8x8xf32>, vector<8x512xf32>, vector<8x512xf32> -> vector<8x512xf32>
    %c480_i32_73 = arith.constant 480 : i32
    %117 = tpu.dynamic_rotate %116 by %c480_i32_73 dim 1 : vector<8x512xf32>, i32 -> vector<8x512xf32>
    %118 = arith.addf %113, %117 : vector<8x512xf32>
    %c7_74 = arith.constant 7 : index
    %c0_75 = arith.constant 0 : index
    %c0_76 = arith.constant 0 : index
    %119 = vector.load %arg3[%c7_74, %c0_75, %c0_76] : memref<9x8x8xf32, #tpu.memory_space<vmem>>, vector<1x8x8xf32>
    %120 = vector.shape_cast %119 : vector<1x8x8xf32> to vector<8x8xf32>
    %cst_77 = arith.constant dense<0.000000e+00> : vector<8x512xf32>
    %121 = tpu.matmul %120, %82, %cst_77 {dimension_numbers = #tpu.dot_dimension_numbers<[1], [0], [0], [1], [0, 0, 1, 1], [], []>} : vector<8x8xf32>, vector<8x512xf32>, vector<8x512xf32> -> vector<8x512xf32>
    %c479_i32_78 = arith.constant 479 : i32
    %122 = tpu.dynamic_rotate %121 by %c479_i32_78 dim 1 : vector<8x512xf32>, i32 -> vector<8x512xf32>
    %123 = arith.addf %118, %122 : vector<8x512xf32>
    %c8_79 = arith.constant 8 : index
    %c0_80 = arith.constant 0 : index
    %c0_81 = arith.constant 0 : index
    %124 = vector.load %arg3[%c8_79, %c0_80, %c0_81] : memref<9x8x8xf32, #tpu.memory_space<vmem>>, vector<1x8x8xf32>
    %125 = vector.shape_cast %124 : vector<1x8x8xf32> to vector<8x8xf32>
    %cst_82 = arith.constant dense<0.000000e+00> : vector<8x512xf32>
    %126 = tpu.matmul %125, %82, %cst_82 {dimension_numbers = #tpu.dot_dimension_numbers<[1], [0], [0], [1], [0, 0, 1, 1], [], []>} : vector<8x8xf32>, vector<8x512xf32>, vector<8x512xf32> -> vector<8x512xf32>
    %c478_i32_83 = arith.constant 478 : i32
    %127 = tpu.dynamic_rotate %126 by %c478_i32_83 dim 1 : vector<8x512xf32>, i32 -> vector<8x512xf32>
    %128 = arith.addf %123, %127 : vector<8x512xf32>
    %c496_i32_84 = arith.constant 496 : i32
    %129 = tpu.dynamic_rotate %128 by %c496_i32_84 dim 1 : vector<8x512xf32>, i32 -> vector<8x512xf32>
    %130 = arith.maximumf %128, %129 : vector<8x512xf32>
    %c511_i32_85 = arith.constant 511 : i32
    %131 = tpu.dynamic_rotate %130 by %c511_i32_85 dim 1 : vector<8x512xf32>, i32 -> vector<8x512xf32>
    %132 = arith.maximumf %130, %131 : vector<8x512xf32>
    %133 = vector.extract_strided_slice %128 {offsets = [0, 0], sizes = [8, 256], strides = [1, 1]} : vector<8x512xf32> to vector<8x256xf32>
    %c0_86 = arith.constant 0 : index
    %c0_87 = arith.constant 0 : index
    %c0_88 = arith.constant 0 : index
    %134 = vector.load %arg8[%c0_86, %c0_87, %c0_88] : memref<2x8x256xf32, #tpu.memory_space<vmem>>, vector<1x8x256xf32>
    %135 = vector.shape_cast %134 : vector<1x8x256xf32> to vector<8x256xf32>
    %136 = vector.shape_cast %133 : vector<8x256xf32> to vector<1x8x256xf32>
    tpu.vector_store %arg8[%c0_86, %c0_87, %c0_88], %136 {strides = array<i32>} : memref<2x8x256xf32, #tpu.memory_space<vmem>>, vector<1x8x256xf32>,
    %137 = vector.extract_strided_slice %132 {offsets = [0, 0], sizes = [8, 256], strides = [1, 1]} : vector<8x512xf32> to vector<8x256xf32>
    %c0_89 = arith.constant 0 : index
    %c0_90 = arith.constant 0 : index
    %c0_91 = arith.constant 0 : index
    %138 = vector.load %arg7[%c0_89, %c0_90, %c0_91] : memref<2x8x256xf32, #tpu.memory_space<vmem>>, vector<1x8x256xf32>
    %139 = vector.shape_cast %138 : vector<1x8x256xf32> to vector<8x256xf32>
    %140 = vector.shape_cast %137 : vector<8x256xf32> to vector<1x8x256xf32>
    tpu.vector_store %arg7[%c0_89, %c0_90, %c0_91], %140 {strides = array<i32>} : memref<2x8x256xf32, #tpu.memory_space<vmem>>, vector<1x8x256xf32>,
    %141 = vector.extract_strided_slice %128 {offsets = [0, 256], sizes = [8, 256], strides = [1, 1]} : vector<8x512xf32> to vector<8x256xf32>
    %c1_92 = arith.constant 1 : index
    %c0_93 = arith.constant 0 : index
    %c0_94 = arith.constant 0 : index
    %142 = vector.load %arg8[%c1_92, %c0_93, %c0_94] : memref<2x8x256xf32, #tpu.memory_space<vmem>>, vector<1x8x256xf32>
    %143 = vector.shape_cast %142 : vector<1x8x256xf32> to vector<8x256xf32>
    %144 = vector.shape_cast %141 : vector<8x256xf32> to vector<1x8x256xf32>
    tpu.vector_store %arg8[%c1_92, %c0_93, %c0_94], %144 {strides = array<i32>} : memref<2x8x256xf32, #tpu.memory_space<vmem>>, vector<1x8x256xf32>,
    %145 = vector.extract_strided_slice %132 {offsets = [0, 256], sizes = [8, 256], strides = [1, 1]} : vector<8x512xf32> to vector<8x256xf32>
    %c1_95 = arith.constant 1 : index
    %c0_96 = arith.constant 0 : index
    %c0_97 = arith.constant 0 : index
    %146 = vector.load %arg7[%c1_95, %c0_96, %c0_97] : memref<2x8x256xf32, #tpu.memory_space<vmem>>, vector<1x8x256xf32>
    %147 = vector.shape_cast %146 : vector<1x8x256xf32> to vector<8x256xf32>
    %148 = vector.shape_cast %145 : vector<8x256xf32> to vector<1x8x256xf32>
    tpu.vector_store %arg7[%c1_95, %c0_96, %c0_97], %148 {strides = array<i32>} : memref<2x8x256xf32, #tpu.memory_space<vmem>>, vector<1x8x256xf32>,
    return
  }
  func.func @transform_0(%arg0: i32) -> (i32, i32) {
    %c0_i32 = arith.constant 0 : i32
    %c0_i32_0 = arith.constant 0 : i32
    %c0_i32_1 = arith.constant 0 : i32
    return %c0_i32, %c0_i32_0 : i32, i32
  }
  func.func @transform_1(%arg0: i32) -> (i32, i32, i32) {
    %c0_i32 = arith.constant 0 : i32
    %c0_i32_0 = arith.constant 0 : i32
    %c0_i32_1 = arith.constant 0 : i32
    %c0_i32_2 = arith.constant 0 : i32
    return %c0_i32, %c0_i32_0, %c0_i32_1 : i32, i32, i32
  }
  func.func @transform_2(%arg0: i32) -> (i32, i32, i32) {
    %c0_i32 = arith.constant 0 : i32
    %c0_i32_0 = arith.constant 0 : i32
    %c0_i32_1 = arith.constant 0 : i32
    %c0_i32_2 = arith.constant 0 : i32
    return %c0_i32, %c0_i32_0, %c0_i32_1 : i32, i32, i32
  }
  func.func @transform_3(%arg0: i32) -> (i32, i32) {
    %c0_i32 = arith.constant 0 : i32
    %c0_i32_0 = arith.constant 0 : i32
    %c0_i32_1 = arith.constant 0 : i32
    return %c0_i32, %c0_i32_0 : i32, i32
  }
  func.func @transform_4(%arg0: i32) -> (i32, i32) {
    %c0_i32 = arith.constant 0 : i32
    %c0_i32_0 = arith.constant 0 : i32
    %c0_i32_1 = arith.constant 0 : i32
    return %c0_i32, %c0_i32_0 : i32, i32
  }
  func.func @transform_5(%arg0: i32) -> (i32, i32) {
    %c0_i32 = arith.constant 0 : i32
    %c0_i32_0 = arith.constant 0 : i32
    %c0_i32_1 = arith.constant 0 : i32
    return %c0_i32, %c0_i32_0 : i32, i32
  }
  func.func @transform_6(%arg0: i32) -> (i32, i32, i32) {
    %c0_i32 = arith.constant 0 : i32
    %c0_i32_0 = arith.constant 0 : i32
    %c0_i32_1 = arith.constant 0 : i32
    %c0_i32_2 = arith.constant 0 : i32
    return %c0_i32, %c0_i32_0, %c0_i32_1 : i32, i32, i32
  }
  func.func @transform_7(%arg0: i32) -> (i32, i32, i32) {
    %c0_i32 = arith.constant 0 : i32
    %c0_i32_0 = arith.constant 0 : i32
    %c0_i32_1 = arith.constant 0 : i32
    %c0_i32_2 = arith.constant 0 : i32
    return %c0_i32, %c0_i32_0, %c0_i32_1 : i32, i32, i32
  }
}

</mosaic_0001>

<llo_original>
// kernel: downstep_forward.1
$region0: #{downstep_forward.1}
  #allocation0 [shape = 'u32[]', space=smem, size = 0x4, offset = 0x4, fixed_abs, tag = 'smem constant byte address 0x4 - core index']
  #allocation1 [shape = 'u32[144,128]{1,0:T(1,128)}', space=vmem, size = 0x12000, scoped, tag = 'internal scratch']
  %s0 = inlined_call_operand.vmem [shape: f32[4,512], index: 0, kind: input, shape index: {}]
  %s1 = inlined_call_operand.vmem [shape: f32[9,8,4], index: 1, kind: input, shape index: {}]
  %s2 = inlined_call_operand.vmem [shape: f32[9,8,8], index: 2, kind: input, shape index: {}]
  %s3 = inlined_call_operand.vmem [shape: f32[8,1], index: 3, kind: input, shape index: {}]
  %s4 = inlined_call_operand.vmem [shape: f32[8,1], index: 4, kind: input, shape index: {}]
  %s5 = inlined_call_operand.vmem [shape: f32[8,1], index: 5, kind: input, shape index: {}]
  %s6 = inlined_call_operand.vmem [shape: f32[2,8,256], index: 6, kind: output, shape index: {0}]
  %s7 = inlined_call_operand.vmem [shape: f32[2,8,256], index: 7, kind: output, shape index: {1}]
  %8 = xla_tuple %s6, %s7
  %s9 = sld [smem:[#allocation0]]
  $region42: #{downstep_forward.1} parent=0
    _
  %s11 = ssub.s32 1, %s9
  %s12 = scalar_select 0, %s11, %s9
  // Predicated region
  $region2: #{downstep_forward.1} parent=0 // pred_check
    _
  $region3: #{downstep_forward.1} parent=0 // pred_check_branch
    %14 = sbr.rel (0) target = $region5
  $region4: #{downstep_forward.1} parent=0 // pred_region
    _
  $region5: #{downstep_forward.1} parent=0 // pred_fallthru
    _
  // Predicated region
  $region6: #{downstep_forward.1} parent=0 // pred_check
    _
  $region7: #{downstep_forward.1} parent=0 // pred_check_branch
    %16 = sbr.rel (0) target = $region9
  $region8: #{downstep_forward.1} parent=0 // pred_region
    _
  $region9: #{downstep_forward.1} parent=0 // pred_fallthru
    _
  // Predicated region
  $region10: #{downstep_forward.1} parent=0 // pred_check
    _
  $region11: #{downstep_forward.1} parent=0 // pred_check_branch
    %18 = sbr.rel (0) target = $region13
  $region12: #{downstep_forward.1} parent=0 // pred_region
    _
  $region13: #{downstep_forward.1} parent=0 // pred_fallthru
    _
  // Predicated region
  $region14: #{downstep_forward.1} parent=0 // pred_check
    _
  $region15: #{downstep_forward.1} parent=0 // pred_check_branch
    %20 = sbr.rel (0) target = $region17
  $region16: #{downstep_forward.1} parent=0 // pred_region
    _
  $region17: #{downstep_forward.1} parent=0 // pred_fallthru
    _
  // Predicated region
  $region18: #{downstep_forward.1} parent=0 // pred_check
    _
  $region19: #{downstep_forward.1} parent=0 // pred_check_branch
    %22 = sbr.rel (0) target = $region21
  $region20: #{downstep_forward.1} parent=0 // pred_region
    _
  $region21: #{downstep_forward.1} parent=0 // pred_fallthru
    _
  // Predicated region
  $region22: #{downstep_forward.1} parent=0 // pred_check
    _
  $region23: #{downstep_forward.1} parent=0 // pred_check_branch
    %24 = sbr.rel (0) target = $region25
  $region24: #{downstep_forward.1} parent=0 // pred_region
    _
  $region25: #{downstep_forward.1} parent=0 // pred_fallthru
    _
  %v25 = vld [vmem:[%s0] sm:$0xff]
  %v26 = vld [vmem:[%s0 + $0x8] sm:$0xff]
  %v27 = vld [vmem:[%s1] sm:$0xff]
  %s28 = scalar_lea.vmem %s1, 8
  %v29 = vld [vmem:[%s28] sm:$0xff]
  %v32 = vcombine.high %v25, %v25
  %v33 = vcombine.high %v26, %v26
  %vm34 = vcmask 31744
  %v36 = vsel %vm34, %v29, 0
  %vm38 = vcmask 1043456
  %v39 = vsel %vm38, %v25, 0
  %v41 = vsel %vm38, %v32, 0
  %v43 = vsel %vm38, %v26, 0
  %v45 = vsel %vm38, %v33, 0
  %47 = vmatprep.subr.mxu0 %v41
  %48 = vmatpush1.msra.mxu0 %v39
  %49 = vmatprep.subr.mxu0 0.0
  %50 = vmatpush1.msra.mxu0 0.0
  %51 = vmatprep.subr.mxu0 0.0
  %52 = vmatpush1.msra.mxu0 0.0
  %53 = vmatprep.subr.mxu0 0.0
  %54 = vmatpush1.msra.mxu0 0.0
  %55 = vmatprep.subr.mxu0 0.0
  %56 = vmatpush1.msra.mxu0 0.0
  %57 = vmatprep.subr.mxu0 0.0
  %58 = vmatpush1.msra.mxu0 0.0
  %59 = vmatprep.subr.mxu0 0.0
  %60 = vmatpush1.msra.mxu0 0.0
  %61 = vmatprep.subr.mxu0 0.0
  %62 = vmatpush1.msra.mxu0 0.0
  %63 = vmatprep.subr.mxu0 0.0
  %64 = vmatpush1.msra.mxu0 0.0
  %65 = vmatprep.subr.mxu0 0.0
  %66 = vmatpush1.msra.mxu0 0.0
  %67 = vmatprep.subr.mxu0 0.0
  %68 = vmatpush1.msra.mxu0 0.0
  %69 = vmatprep.subr.mxu0 0.0
  %70 = vmatpush1.msra.mxu0 0.0
  %71 = vmatprep.subr.mxu0 0.0
  %72 = vmatpush1.msra.mxu0 0.0
  %73 = vmatprep.subr.mxu0 0.0
  %74 = vmatpush1.msra.mxu0 0.0
  %75 = vmatprep.subr.mxu0 0.0
  %76 = vmatpush1.msra.mxu0 0.0
  %77 = vmatprep.subr.mxu0 0.0
  %78 = vmatpush1.msra.mxu0 0.0
  %79 = vmatprep.subr.mxu0 0.0
  %80 = vmatpush1.msra.mxu0 0.0
  %81 = vmatprep.subr.mxu0 0.0
  %82 = vmatpush1.msra.mxu0 0.0
  %83 = vmatprep.subr.mxu0 0.0
  %84 = vmatpush1.msra.mxu0 0.0
  %85 = vmatprep.subr.mxu0 0.0
  %86 = vmatpush1.msra.mxu0 0.0
  %87 = vmatprep.subr.mxu0 0.0
  %88 = vmatpush1.msra.mxu0 0.0
  %89 = vmatprep.subr.mxu0 0.0
  %90 = vmatpush1.msra.mxu0 0.0
  %91 = vmatprep.subr.mxu0 0.0
  %92 = vmatpush1.msra.mxu0 0.0
  %93 = vmatprep.subr.mxu0 0.0
  %94 = vmatpush1.msra.mxu0 0.0
  %95 = vmatprep.subr.mxu0 0.0
  %96 = vmatpush1.msra.mxu0 0.0
  %97 = vmatprep.subr.mxu0 0.0
  %98 = vmatpush1.msra.mxu0 0.0
  %99 = vmatprep.subr.mxu0 0.0
  %100 = vmatpush1.msra.mxu0 0.0
  %101 = vmatprep.subr.mxu0 0.0
  %102 = vmatpush1.msra.mxu0 0.0
  %103 = vmatprep.subr.mxu0 0.0
  %104 = vmatpush1.msra.mxu0 0.0
  %105 = vmatprep.subr.mxu0 0.0
  %106 = vmatpush1.msra.mxu0 0.0
  %107 = vmatprep.subr.mxu0 0.0
  %108 = vmatpush1.msra.mxu0 0.0
  %109 = vmatprep.subr.mxu0 0.0
  %110 = vmatpush1.msra.mxu0 0.0
  %111 = vmatprep.mubr.f32.mxu0 0.0
  %112 = vmatmul.mubr.f32.gmra.mrb[0].mxu0 %v36
  %v113 = vpop.f32.mrb[0].mxu0
  %v114 = vadd.f32 0.0, %v113
  %v115 = vpop.f32.mrb[0].mxu0
  %v116 = vadd.f32 0.0, %v115
  %117 = vdwg.mxu0
  %118 = vmatprep.subr.mxu0 %v45
  %119 = vmatpush1.msra.mxu0 %v43
  %120 = vmatprep.subr.mxu0 0.0
  %121 = vmatpush1.msra.mxu0 0.0
  %122 = vmatprep.subr.mxu0 0.0
  %123 = vmatpush1.msra.mxu0 0.0
  %124 = vmatprep.subr.mxu0 0.0
  %125 = vmatpush1.msra.mxu0 0.0
  %126 = vmatprep.subr.mxu0 0.0
  %127 = vmatpush1.msra.mxu0 0.0
  %128 = vmatprep.subr.mxu0 0.0
  %129 = vmatpush1.msra.mxu0 0.0
  %130 = vmatprep.subr.mxu0 0.0
  %131 = vmatpush1.msra.mxu0 0.0
  %132 = vmatprep.subr.mxu0 0.0
  %133 = vmatpush1.msra.mxu0 0.0
  %134 = vmatprep.subr.mxu0 0.0
  %135 = vmatpush1.msra.mxu0 0.0
  %136 = vmatprep.subr.mxu0 0.0
  %137 = vmatpush1.msra.mxu0 0.0
  %138 = vmatprep.subr.mxu0 0.0
  %139 = vmatpush1.msra.mxu0 0.0
  %140 = vmatprep.subr.mxu0 0.0
  %141 = vmatpush1.msra.mxu0 0.0
  %142 = vmatprep.subr.mxu0 0.0
  %143 = vmatpush1.msra.mxu0 0.0
  %144 = vmatprep.subr.mxu0 0.0
  %145 = vmatpush1.msra.mxu0 0.0
  %146 = vmatprep.subr.mxu0 0.0
  %147 = vmatpush1.msra.mxu0 0.0
  %148 = vmatprep.subr.mxu0 0.0
  %149 = vmatpush1.msra.mxu0 0.0
  %150 = vmatprep.subr.mxu0 0.0
  %151 = vmatpush1.msra.mxu0 0.0
  %152 = vmatprep.subr.mxu0 0.0
  %153 = vmatpush1.msra.mxu0 0.0
  %154 = vmatprep.subr.mxu0 0.0
  %155 = vmatpush1.msra.mxu0 0.0
  %156 = vmatprep.subr.mxu0 0.0
  %157 = vmatpush1.msra.mxu0 0.0
  %158 = vmatprep.subr.mxu0 0.0
  %159 = vmatpush1.msra.mxu0 0.0
  %160 = vmatprep.subr.mxu0 0.0
  %161 = vmatpush1.msra.mxu0 0.0
  %162 = vmatprep.subr.mxu0 0.0
  %163 = vmatpush1.msra.mxu0 0.0
  %164 = vmatprep.subr.mxu0 0.0
  %165 = vmatpush1.msra.mxu0 0.0
  %166 = vmatprep.subr.mxu0 0.0
  %167 = vmatpush1.msra.mxu0 0.0
  %168 = vmatprep.subr.mxu0 0.0
  %169 = vmatpush1.msra.mxu0 0.0
  %170 = vmatprep.subr.mxu0 0.0
  %171 = vmatpush1.msra.mxu0 0.0
  %172 = vmatprep.subr.mxu0 0.0
  %173 = vmatpush1.msra.mxu0 0.0
  %174 = vmatprep.subr.mxu0 0.0
  %175 = vmatpush1.msra.mxu0 0.0
  %176 = vmatprep.subr.mxu0 0.0
  %177 = vmatpush1.msra.mxu0 0.0
  %178 = vmatprep.subr.mxu0 0.0
  %179 = vmatpush1.msra.mxu0 0.0
  %180 = vmatprep.subr.mxu0 0.0
  %181 = vmatpush1.msra.mxu0 0.0
  %182 = vmatprep.mubr.f32.mxu0 0.0
  %183 = vmatmul.mubr.f32.gmra.mrb[0].mxu0 %v36
  %v184 = vpop.f32.mrb[0].mxu0
  %v185 = vadd.f32 0.0, %v184
  %v186 = vpop.f32.mrb[0].mxu0
  %v187 = vadd.f32 0.0, %v186
  %188 = vdwg.mxu0
  %189 = vrot.lane.b32.xlu0 %v114, 127
  %v190 = vpop.permute.xlu0 %189
  %191 = vrot.lane.b32.xlu0 %v116, 127
  %v192 = vpop.permute.xlu0 %191
  %193 = vrot.lane.b32.xlu0 %v185, 127
  %v194 = vpop.permute.xlu0 %193
  %195 = vrot.lane.b32.xlu0 %v187, 127
  %v196 = vpop.permute.xlu0 %195
  %v197 = vlaneseq
  %v198 = vand.u32 %v197, 127
  %vm199 = vcmp.lt.s32.totalorder %v198, 127
  %v200 = vsel %vm199, %v194, %v196
  %v201 = vsel %vm199, %v192, %v194
  %v202 = vsel %vm199, %v190, %v192
  %v203 = vsel %vm199, %v196, %v190
  %v205 = vsel %vm34, %v27, 0
  %207 = vmatprep.subr.mxu0 %v41
  %208 = vmatpush1.msra.mxu0 %v39
  %209 = vmatprep.subr.mxu0 0.0
  %210 = vmatpush1.msra.mxu0 0.0
  %211 = vmatprep.subr.mxu0 0.0
  %212 = vmatpush1.msra.mxu0 0.0
  %213 = vmatprep.subr.mxu0 0.0
  %214 = vmatpush1.msra.mxu0 0.0
  %215 = vmatprep.subr.mxu0 0.0
  %216 = vmatpush1.msra.mxu0 0.0
  %217 = vmatprep.subr.mxu0 0.0
  %218 = vmatpush1.msra.mxu0 0.0
  %219 = vmatprep.subr.mxu0 0.0
  %220 = vmatpush1.msra.mxu0 0.0
  %221 = vmatprep.subr.mxu0 0.0
  %222 = vmatpush1.msra.mxu0 0.0
  %223 = vmatprep.subr.mxu0 0.0
  %224 = vmatpush1.msra.mxu0 0.0
  %225 = vmatprep.subr.mxu0 0.0
  %226 = vmatpush1.msra.mxu0 0.0
  %227 = vmatprep.subr.mxu0 0.0
  %228 = vmatpush1.msra.mxu0 0.0
  %229 = vmatprep.subr.mxu0 0.0
  %230 = vmatpush1.msra.mxu0 0.0
  %231 = vmatprep.subr.mxu0 0.0
  %232 = vmatpush1.msra.mxu0 0.0
  %233 = vmatprep.subr.mxu0 0.0
  %234 = vmatpush1.msra.mxu0 0.0
  %235 = vmatprep.subr.mxu0 0.0
  %236 = vmatpush1.msra.mxu0 0.0
  %237 = vmatprep.subr.mxu0 0.0
  %238 = vmatpush1.msra.mxu0 0.0
  %239 = vmatprep.subr.mxu0 0.0
  %240 = vmatpush1.msra.mxu0 0.0
  %241 = vmatprep.subr.mxu0 0.0
  %242 = vmatpush1.msra.mxu0 0.0
  %243 = vmatprep.subr.mxu0 0.0
  %244 = vmatpush1.msra.mxu0 0.0
  %245 = vmatprep.subr.mxu0 0.0
  %246 = vmatpush1.msra.mxu0 0.0
  %247 = vmatprep.subr.mxu0 0.0
  %248 = vmatpush1.msra.mxu0 0.0
  %249 = vmatprep.subr.mxu0 0.0
  %250 = vmatpush1.msra.mxu0 0.0
  %251 = vmatprep.subr.mxu0 0.0
  %252 = vmatpush1.msra.mxu0 0.0
  %253 = vmatprep.subr.mxu0 0.0
  %254 = vmatpush1.msra.mxu0 0.0
  %255 = vmatprep.subr.mxu0 0.0
  %256 = vmatpush1.msra.mxu0 0.0
  %257 = vmatprep.subr.mxu0 0.0
  %258 = vmatpush1.msra.mxu0 0.0
  %259 = vmatprep.subr.mxu0 0.0
  %260 = vmatpush1.msra.mxu0 0.0
  %261 = vmatprep.subr.mxu0 0.0
  %262 = vmatpush1.msra.mxu0 0.0
  %263 = vmatprep.subr.mxu0 0.0
  %264 = vmatpush1.msra.mxu0 0.0
  %265 = vmatprep.subr.mxu0 0.0
  %266 = vmatpush1.msra.mxu0 0.0
  %267 = vmatprep.subr.mxu0 0.0
  %268 = vmatpush1.msra.mxu0 0.0
  %269 = vmatprep.subr.mxu0 0.0
  %270 = vmatpush1.msra.mxu0 0.0
  %271 = vmatprep.mubr.f32.mxu0 0.0
  %272 = vmatmul.mubr.f32.gmra.mrb[0].mxu0 %v205
  %v273 = vpop.f32.mrb[0].mxu0
  %v274 = vadd.f32 %v202, %v273
  %v275 = vpop.f32.mrb[0].mxu0
  %v276 = vadd.f32 %v201, %v275
  %277 = vdwg.mxu0
  %278 = vmatprep.subr.mxu0 %v45
  %279 = vmatpush1.msra.mxu0 %v43
  %280 = vmatprep.subr.mxu0 0.0
  %281 = vmatpush1.msra.mxu0 0.0
  %282 = vmatprep.subr.mxu0 0.0
  %283 = vmatpush1.msra.mxu0 0.0
  %284 = vmatprep.subr.mxu0 0.0
  %285 = vmatpush1.msra.mxu0 0.0
  %286 = vmatprep.subr.mxu0 0.0
  %287 = vmatpush1.msra.mxu0 0.0
  %288 = vmatprep.subr.mxu0 0.0
  %289 = vmatpush1.msra.mxu0 0.0
  %290 = vmatprep.subr.mxu0 0.0
  %291 = vmatpush1.msra.mxu0 0.0
  %292 = vmatprep.subr.mxu0 0.0
  %293 = vmatpush1.msra.mxu0 0.0
  %294 = vmatprep.subr.mxu0 0.0
  %295 = vmatpush1.msra.mxu0 0.0
  %296 = vmatprep.subr.mxu0 0.0
  %297 = vmatpush1.msra.mxu0 0.0
  %298 = vmatprep.subr.mxu0 0.0
  %299 = vmatpush1.msra.mxu0 0.0
  %300 = vmatprep.subr.mxu0 0.0
  %301 = vmatpush1.msra.mxu0 0.0
  %302 = vmatprep.subr.mxu0 0.0
  %303 = vmatpush1.msra.mxu0 0.0
  %304 = vmatprep.subr.mxu0 0.0
  %305 = vmatpush1.msra.mxu0 0.0
  %306 = vmatprep.subr.mxu0 0.0
  %307 = vmatpush1.msra.mxu0 0.0
  %308 = vmatprep.subr.mxu0 0.0
  %309 = vmatpush1.msra.mxu0 0.0
  %310 = vmatprep.subr.mxu0 0.0
  %311 = vmatpush1.msra.mxu0 0.0
  %312 = vmatprep.subr.mxu0 0.0
  %313 = vmatpush1.msra.mxu0 0.0
  %314 = vmatprep.subr.mxu0 0.0
  %315 = vmatpush1.msra.mxu0 0.0
  %316 = vmatprep.subr.mxu0 0.0
  %317 = vmatpush1.msra.mxu0 0.0
  %318 = vmatprep.subr.mxu0 0.0
  %319 = vmatpush1.msra.mxu0 0.0
  %320 = vmatprep.subr.mxu0 0.0
  %321 = vmatpush1.msra.mxu0 0.0
  %322 = vmatprep.subr.mxu0 0.0
  %323 = vmatpush1.msra.mxu0 0.0
  %324 = vmatprep.subr.mxu0 0.0
  %325 = vmatpush1.msra.mxu0 0.0
  %326 = vmatprep.subr.mxu0 0.0
  %327 = vmatpush1.msra.mxu0 0.0
  %328 = vmatprep.subr.mxu0 0.0
  %329 = vmatpush1.msra.mxu0 0.0
  %330 = vmatprep.subr.mxu0 0.0
  %331 = vmatpush1.msra.mxu0 0.0
  %332 = vmatprep.subr.mxu0 0.0
  %333 = vmatpush1.msra.mxu0 0.0
  %334 = vmatprep.subr.mxu0 0.0
  %335 = vmatpush1.msra.mxu0 0.0
  %336 = vmatprep.subr.mxu0 0.0
  %337 = vmatpush1.msra.mxu0 0.0
  %338 = vmatprep.subr.mxu0 0.0
  %339 = vmatpush1.msra.mxu0 0.0
  %340 = vmatprep.subr.mxu0 0.0
  %341 = vmatpush1.msra.mxu0 0.0
  %342 = vmatprep.mubr.f32.mxu0 0.0
  %343 = vmatmul.mubr.f32.gmra.mrb[0].mxu0 %v205
  %v344 = vpop.f32.mrb[0].mxu0
  %v345 = vadd.f32 %v200, %v344
  %v346 = vpop.f32.mrb[0].mxu0
  %v347 = vadd.f32 %v203, %v346
  %348 = vdwg.mxu0
  %s349 = scalar_lea.vmem %s1, 16
  %v350 = vld [vmem:[%s349] sm:$0xff]
  %v352 = vsel %vm34, %v350, 0
  %354 = vmatprep.subr.mxu0 %v41
  %355 = vmatpush1.msra.mxu0 %v39
  %356 = vmatprep.subr.mxu0 0.0
  %357 = vmatpush1.msra.mxu0 0.0
  %358 = vmatprep.subr.mxu0 0.0
  %359 = vmatpush1.msra.mxu0 0.0
  %360 = vmatprep.subr.mxu0 0.0
  %361 = vmatpush1.msra.mxu0 0.0
  %362 = vmatprep.subr.mxu0 0.0
  %363 = vmatpush1.msra.mxu0 0.0
  %364 = vmatprep.subr.mxu0 0.0
  %365 = vmatpush1.msra.mxu0 0.0
  %366 = vmatprep.subr.mxu0 0.0
  %367 = vmatpush1.msra.mxu0 0.0
  %368 = vmatprep.subr.mxu0 0.0
  %369 = vmatpush1.msra.mxu0 0.0
  %370 = vmatprep.subr.mxu0 0.0
  %371 = vmatpush1.msra.mxu0 0.0
  %372 = vmatprep.subr.mxu0 0.0
  %373 = vmatpush1.msra.mxu0 0.0
  %374 = vmatprep.subr.mxu0 0.0
  %375 = vmatpush1.msra.mxu0 0.0
  %376 = vmatprep.subr.mxu0 0.0
  %377 = vmatpush1.msra.mxu0 0.0
  %378 = vmatprep.subr.mxu0 0.0
  %379 = vmatpush1.msra.mxu0 0.0
  %380 = vmatprep.subr.mxu0 0.0
  %381 = vmatpush1.msra.mxu0 0.0
  %382 = vmatprep.subr.mxu0 0.0
  %383 = vmatpush1.msra.mxu0 0.0
  %384 = vmatprep.subr.mxu0 0.0
  %385 = vmatpush1.msra.mxu0 0.0
  %386 = vmatprep.subr.mxu0 0.0
  %387 = vmatpush1.msra.mxu0 0.0
  %388 = vmatprep.subr.mxu0 0.0
  %389 = vmatpush1.msra.mxu0 0.0
  %390 = vmatprep.subr.mxu0 0.0
  %391 = vmatpush1.msra.mxu0 0.0
  %392 = vmatprep.subr.mxu0 0.0
  %393 = vmatpush1.msra.mxu0 0.0
  %394 = vmatprep.subr.mxu0 0.0
  %395 = vmatpush1.msra.mxu0 0.0
  %396 = vmatprep.subr.mxu0 0.0
  %397 = vmatpush1.msra.mxu0 0.0
  %398 = vmatprep.subr.mxu0 0.0
  %399 = vmatpush1.msra.mxu0 0.0
  %400 = vmatprep.subr.mxu0 0.0
  %401 = vmatpush1.msra.mxu0 0.0
  %402 = vmatprep.subr.mxu0 0.0
  %403 = vmatpush1.msra.mxu0 0.0
  %404 = vmatprep.subr.mxu0 0.0
  %405 = vmatpush1.msra.mxu0 0.0
  %406 = vmatprep.subr.mxu0 0.0
  %407 = vmatpush1.msra.mxu0 0.0
  %408 = vmatprep.subr.mxu0 0.0
  %409 = vmatpush1.msra.mxu0 0.0
  %410 = vmatprep.subr.mxu0 0.0
  %411 = vmatpush1.msra.mxu0 0.0
  %412 = vmatprep.subr.mxu0 0.0
  %413 = vmatpush1.msra.mxu0 0.0
  %414 = vmatprep.subr.mxu0 0.0
  %415 = vmatpush1.msra.mxu0 0.0
  %416 = vmatprep.subr.mxu0 0.0
  %417 = vmatpush1.msra.mxu0 0.0
  %418 = vmatprep.mubr.f32.mxu0 0.0
  %419 = vmatmul.mubr.f32.gmra.mrb[0].mxu0 %v352
  %v420 = vpop.f32.mrb[0].mxu0
  %v421 = vadd.f32 0.0, %v420
  %v422 = vpop.f32.mrb[0].mxu0
  %v423 = vadd.f32 0.0, %v422
  %424 = vdwg.mxu0
  %425 = vmatprep.subr.mxu0 %v45
  %426 = vmatpush1.msra.mxu0 %v43
  %427 = vmatprep.subr.mxu0 0.0
  %428 = vmatpush1.msra.mxu0 0.0
  %429 = vmatprep.subr.mxu0 0.0
  %430 = vmatpush1.msra.mxu0 0.0
  %431 = vmatprep.subr.mxu0 0.0
  %432 = vmatpush1.msra.mxu0 0.0
  %433 = vmatprep.subr.mxu0 0.0
  %434 = vmatpush1.msra.mxu0 0.0
  %435 = vmatprep.subr.mxu0 0.0
  %436 = vmatpush1.msra.mxu0 0.0
  %437 = vmatprep.subr.mxu0 0.0
  %438 = vmatpush1.msra.mxu0 0.0
  %439 = vmatprep.subr.mxu0 0.0
  %440 = vmatpush1.msra.mxu0 0.0
  %441 = vmatprep.subr.mxu0 0.0
  %442 = vmatpush1.msra.mxu0 0.0
  %443 = vmatprep.subr.mxu0 0.0
  %444 = vmatpush1.msra.mxu0 0.0
  %445 = vmatprep.subr.mxu0 0.0
  %446 = vmatpush1.msra.mxu0 0.0
  %447 = vmatprep.subr.mxu0 0.0
  %448 = vmatpush1.msra.mxu0 0.0
  %449 = vmatprep.subr.mxu0 0.0
  %450 = vmatpush1.msra.mxu0 0.0
  %451 = vmatprep.subr.mxu0 0.0
  %452 = vmatpush1.msra.mxu0 0.0
  %453 = vmatprep.subr.mxu0 0.0
  %454 = vmatpush1.msra.mxu0 0.0
  %455 = vmatprep.subr.mxu0 0.0
  %456 = vmatpush1.msra.mxu0 0.0
  %457 = vmatprep.subr.mxu0 0.0
  %458 = vmatpush1.msra.mxu0 0.0
  %459 = vmatprep.subr.mxu0 0.0
  %460 = vmatpush1.msra.mxu0 0.0
  %461 = vmatprep.subr.mxu0 0.0
  %462 = vmatpush1.msra.mxu0 0.0
  %463 = vmatprep.subr.mxu0 0.0
  %464 = vmatpush1.msra.mxu0 0.0
  %465 = vmatprep.subr.mxu0 0.0
  %466 = vmatpush1.msra.mxu0 0.0
  %467 = vmatprep.subr.mxu0 0.0
  %468 = vmatpush1.msra.mxu0 0.0
  %469 = vmatprep.subr.mxu0 0.0
  %470 = vmatpush1.msra.mxu0 0.0
  %471 = vmatprep.subr.mxu0 0.0
  %472 = vmatpush1.msra.mxu0 0.0
  %473 = vmatprep.subr.mxu0 0.0
  %474 = vmatpush1.msra.mxu0 0.0
  %475 = vmatprep.subr.mxu0 0.0
  %476 = vmatpush1.msra.mxu0 0.0
  %477 = vmatprep.subr.mxu0 0.0
  %478 = vmatpush1.msra.mxu0 0.0
  %479 = vmatprep.subr.mxu0 0.0
  %480 = vmatpush1.msra.mxu0 0.0
  %481 = vmatprep.subr.mxu0 0.0
  %482 = vmatpush1.msra.mxu0 0.0
  %483 = vmatprep.subr.mxu0 0.0
  %484 = vmatpush1.msra.mxu0 0.0
  %485 = vmatprep.subr.mxu0 0.0
  %486 = vmatpush1.msra.mxu0 0.0
  %487 = vmatprep.subr.mxu0 0.0
  %488 = vmatpush1.msra.mxu0 0.0
  %489 = vmatprep.mubr.f32.mxu0 0.0
  %490 = vmatmul.mubr.f32.gmra.mrb[0].mxu0 %v352
  %v491 = vpop.f32.mrb[0].mxu0
  %v492 = vadd.f32 0.0, %v491
  %v493 = vpop.f32.mrb[0].mxu0
  %v494 = vadd.f32 0.0, %v493
  %495 = vdwg.mxu0
  %496 = vrot.lane.b32.xlu0 %v421, 126
  %v497 = vpop.permute.xlu0 %496
  %498 = vrot.lane.b32.xlu0 %v423, 126
  %v499 = vpop.permute.xlu0 %498
  %500 = vrot.lane.b32.xlu0 %v492, 126
  %v501 = vpop.permute.xlu0 %500
  %502 = vrot.lane.b32.xlu0 %v494, 126
  %v503 = vpop.permute.xlu0 %502
  %vm504 = vcmp.lt.s32.totalorder %v198, 126
  %v505 = vsel %vm504, %v501, %v503
  %v506 = vsel %vm504, %v499, %v501
  %v507 = vsel %vm504, %v497, %v499
  %v508 = vsel %vm504, %v503, %v497
  %v509 = vadd.f32 %v274, %v507
  %v510 = vadd.f32 %v276, %v506
  %v511 = vadd.f32 %v345, %v505
  %v512 = vadd.f32 %v347, %v508
  %s513 = scalar_lea.vmem %s1, 24
  %v514 = vld [vmem:[%s513] sm:$0xff]
  %v516 = vsel %vm34, %v514, 0
  %518 = vmatprep.subr.mxu0 %v41
  %519 = vmatpush1.msra.mxu0 %v39
  %520 = vmatprep.subr.mxu0 0.0
  %521 = vmatpush1.msra.mxu0 0.0
  %522 = vmatprep.subr.mxu0 0.0
  %523 = vmatpush1.msra.mxu0 0.0
  %524 = vmatprep.subr.mxu0 0.0
  %525 = vmatpush1.msra.mxu0 0.0
  %526 = vmatprep.subr.mxu0 0.0
  %527 = vmatpush1.msra.mxu0 0.0
  %528 = vmatprep.subr.mxu0 0.0
  %529 = vmatpush1.msra.mxu0 0.0
  %530 = vmatprep.subr.mxu0 0.0
  %531 = vmatpush1.msra.mxu0 0.0
  %532 = vmatprep.subr.mxu0 0.0
  %533 = vmatpush1.msra.mxu0 0.0
  %534 = vmatprep.subr.mxu0 0.0
  %535 = vmatpush1.msra.mxu0 0.0
  %536 = vmatprep.subr.mxu0 0.0
  %537 = vmatpush1.msra.mxu0 0.0
  %538 = vmatprep.subr.mxu0 0.0
  %539 = vmatpush1.msra.mxu0 0.0
  %540 = vmatprep.subr.mxu0 0.0
  %541 = vmatpush1.msra.mxu0 0.0
  %542 = vmatprep.subr.mxu0 0.0
  %543 = vmatpush1.msra.mxu0 0.0
  %544 = vmatprep.subr.mxu0 0.0
  %545 = vmatpush1.msra.mxu0 0.0
  %546 = vmatprep.subr.mxu0 0.0
  %547 = vmatpush1.msra.mxu0 0.0
  %548 = vmatprep.subr.mxu0 0.0
  %549 = vmatpush1.msra.mxu0 0.0
  %550 = vmatprep.subr.mxu0 0.0
  %551 = vmatpush1.msra.mxu0 0.0
  %552 = vmatprep.subr.mxu0 0.0
  %553 = vmatpush1.msra.mxu0 0.0
  %554 = vmatprep.subr.mxu0 0.0
  %555 = vmatpush1.msra.mxu0 0.0
  %556 = vmatprep.subr.mxu0 0.0
  %557 = vmatpush1.msra.mxu0 0.0
  %558 = vmatprep.subr.mxu0 0.0
  %559 = vmatpush1.msra.mxu0 0.0
  %560 = vmatprep.subr.mxu0 0.0
  %561 = vmatpush1.msra.mxu0 0.0
  %562 = vmatprep.subr.mxu0 0.0
  %563 = vmatpush1.msra.mxu0 0.0
  %564 = vmatprep.subr.mxu0 0.0
  %565 = vmatpush1.msra.mxu0 0.0
  %566 = vmatprep.subr.mxu0 0.0
  %567 = vmatpush1.msra.mxu0 0.0
  %568 = vmatprep.subr.mxu0 0.0
  %569 = vmatpush1.msra.mxu0 0.0
  %570 = vmatprep.subr.mxu0 0.0
  %571 = vmatpush1.msra.mxu0 0.0
  %572 = vmatprep.subr.mxu0 0.0
  %573 = vmatpush1.msra.mxu0 0.0
  %574 = vmatprep.subr.mxu0 0.0
  %575 = vmatpush1.msra.mxu0 0.0
  %576 = vmatprep.subr.mxu0 0.0
  %577 = vmatpush1.msra.mxu0 0.0
  %578 = vmatprep.subr.mxu0 0.0
  %579 = vmatpush1.msra.mxu0 0.0
  %580 = vmatprep.subr.mxu0 0.0
  %581 = vmatpush1.msra.mxu0 0.0
  %582 = vmatprep.mubr.f32.mxu0 0.0
  %583 = vmatmul.mubr.f32.gmra.mrb[0].mxu0 %v516
  %v584 = vpop.f32.mrb[0].mxu0
  %v585 = vadd.f32 0.0, %v584
  %v586 = vpop.f32.mrb[0].mxu0
  %v587 = vadd.f32 0.0, %v586
  %588 = vdwg.mxu0
  %589 = vmatprep.subr.mxu0 %v45
  %590 = vmatpush1.msra.mxu0 %v43
  %591 = vmatprep.subr.mxu0 0.0
  %592 = vmatpush1.msra.mxu0 0.0
  %593 = vmatprep.subr.mxu0 0.0
  %594 = vmatpush1.msra.mxu0 0.0
  %595 = vmatprep.subr.mxu0 0.0
  %596 = vmatpush1.msra.mxu0 0.0
  %597 = vmatprep.subr.mxu0 0.0
  %598 = vmatpush1.msra.mxu0 0.0
  %599 = vmatprep.subr.mxu0 0.0
  %600 = vmatpush1.msra.mxu0 0.0
  %601 = vmatprep.subr.mxu0 0.0
  %602 = vmatpush1.msra.mxu0 0.0
  %603 = vmatprep.subr.mxu0 0.0
  %604 = vmatpush1.msra.mxu0 0.0
  %605 = vmatprep.subr.mxu0 0.0
  %606 = vmatpush1.msra.mxu0 0.0
  %607 = vmatprep.subr.mxu0 0.0
  %608 = vmatpush1.msra.mxu0 0.0
  %609 = vmatprep.subr.mxu0 0.0
  %610 = vmatpush1.msra.mxu0 0.0
  %611 = vmatprep.subr.mxu0 0.0
  %612 = vmatpush1.msra.mxu0 0.0
  %613 = vmatprep.subr.mxu0 0.0
  %614 = vmatpush1.msra.mxu0 0.0
  %615 = vmatprep.subr.mxu0 0.0
  %616 = vmatpush1.msra.mxu0 0.0
  %617 = vmatprep.subr.mxu0 0.0
  %618 = vmatpush1.msra.mxu0 0.0
  %619 = vmatprep.subr.mxu0 0.0
  %620 = vmatpush1.msra.mxu0 0.0
  %621 = vmatprep.subr.mxu0 0.0
  %622 = vmatpush1.msra.mxu0 0.0
  %623 = vmatprep.subr.mxu0 0.0
  %624 = vmatpush1.msra.mxu0 0.0
  %625 = vmatprep.subr.mxu0 0.0
  %626 = vmatpush1.msra.mxu0 0.0
  %627 = vmatprep.subr.mxu0 0.0
  %628 = vmatpush1.msra.mxu0 0.0
  %629 = vmatprep.subr.mxu0 0.0
  %630 = vmatpush1.msra.mxu0 0.0
  %631 = vmatprep.subr.mxu0 0.0
  %632 = vmatpush1.msra.mxu0 0.0
  %633 = vmatprep.subr.mxu0 0.0
  %634 = vmatpush1.msra.mxu0 0.0
  %635 = vmatprep.subr.mxu0 0.0
  %636 = vmatpush1.msra.mxu0 0.0
  %637 = vmatprep.subr.mxu0 0.0
  %638 = vmatpush1.msra.mxu0 0.0
  %639 = vmatprep.subr.mxu0 0.0
  %640 = vmatpush1.msra.mxu0 0.0
  %641 = vmatprep.subr.mxu0 0.0
  %642 = vmatpush1.msra.mxu0 0.0
  %643 = vmatprep.subr.mxu0 0.0
  %644 = vmatpush1.msra.mxu0 0.0
  %645 = vmatprep.subr.mxu0 0.0
  %646 = vmatpush1.msra.mxu0 0.0
  %647 = vmatprep.subr.mxu0 0.0
  %648 = vmatpush1.msra.mxu0 0.0
  %649 = vmatprep.subr.mxu0 0.0
  %650 = vmatpush1.msra.mxu0 0.0
  %651 = vmatprep.subr.mxu0 0.0
  %652 = vmatpush1.msra.mxu0 0.0
  %653 = vmatprep.mubr.f32.mxu0 0.0
  %654 = vmatmul.mubr.f32.gmra.mrb[0].mxu0 %v516
  %v655 = vpop.f32.mrb[0].mxu0
  %v656 = vadd.f32 0.0, %v655
  %v657 = vpop.f32.mrb[0].mxu0
  %v658 = vadd.f32 0.0, %v657
  %659 = vdwg.mxu0
  %660 = vrot.lane.b32.xlu0 %v585, 112
  %v661 = vpop.permute.xlu0 %660
  %662 = vrot.lane.b32.xlu0 %v587, 112
  %v663 = vpop.permute.xlu0 %662
  %664 = vrot.lane.b32.xlu0 %v656, 112
  %v665 = vpop.permute.xlu0 %664
  %666 = vrot.lane.b32.xlu0 %v658, 112
  %v667 = vpop.permute.xlu0 %666
  %vm668 = vcmp.lt.s32.totalorder %v198, 112
  %v669 = vsel %vm668, %v665, %v667
  %v670 = vsel %vm668, %v663, %v665
  %v671 = vsel %vm668, %v661, %v663
  %v672 = vsel %vm668, %v667, %v661
  %v673 = vadd.f32 %v509, %v671
  %v674 = vadd.f32 %v510, %v670
  %v675 = vadd.f32 %v511, %v669
  %v676 = vadd.f32 %v512, %v672
  %s677 = scalar_lea.vmem %s1, 32
  %v678 = vld [vmem:[%s677] sm:$0xff]
  %v680 = vsel %vm34, %v678, 0
  %682 = vmatprep.subr.mxu0 %v41
  %683 = vmatpush1.msra.mxu0 %v39
  %684 = vmatprep.subr.mxu0 0.0
  %685 = vmatpush1.msra.mxu0 0.0
  %686 = vmatprep.subr.mxu0 0.0
  %687 = vmatpush1.msra.mxu0 0.0
  %688 = vmatprep.subr.mxu0 0.0
  %689 = vmatpush1.msra.mxu0 0.0
  %690 = vmatprep.subr.mxu0 0.0
  %691 = vmatpush1.msra.mxu0 0.0
  %692 = vmatprep.subr.mxu0 0.0
  %693 = vmatpush1.msra.mxu0 0.0
  %694 = vmatprep.subr.mxu0 0.0
  %695 = vmatpush1.msra.mxu0 0.0
  %696 = vmatprep.subr.mxu0 0.0
  %697 = vmatpush1.msra.mxu0 0.0
  %698 = vmatprep.subr.mxu0 0.0
  %699 = vmatpush1.msra.mxu0 0.0
  %700 = vmatprep.subr.mxu0 0.0
  %701 = vmatpush1.msra.mxu0 0.0
  %702 = vmatprep.subr.mxu0 0.0
  %703 = vmatpush1.msra.mxu0 0.0
  %704 = vmatprep.subr.mxu0 0.0
  %705 = vmatpush1.msra.mxu0 0.0
  %706 = vmatprep.subr.mxu0 0.0
  %707 = vmatpush1.msra.mxu0 0.0
  %708 = vmatprep.subr.mxu0 0.0
  %709 = vmatpush1.msra.mxu0 0.0
  %710 = vmatprep.subr.mxu0 0.0
  %711 = vmatpush1.msra.mxu0 0.0
  %712 = vmatprep.subr.mxu0 0.0
  %713 = vmatpush1.msra.mxu0 0.0
  %714 = vmatprep.subr.mxu0 0.0
  %715 = vmatpush1.msra.mxu0 0.0
  %716 = vmatprep.subr.mxu0 0.0
  %717 = vmatpush1.msra.mxu0 0.0
  %718 = vmatprep.subr.mxu0 0.0
  %719 = vmatpush1.msra.mxu0 0.0
  %720 = vmatprep.subr.mxu0 0.0
  %721 = vmatpush1.msra.mxu0 0.0
  %722 = vmatprep.subr.mxu0 0.0
  %723 = vmatpush1.msra.mxu0 0.0
  %724 = vmatprep.subr.mxu0 0.0
  %725 = vmatpush1.msra.mxu0 0.0
  %726 = vmatprep.subr.mxu0 0.0
  %727 = vmatpush1.msra.mxu0 0.0
  %728 = vmatprep.subr.mxu0 0.0
  %729 = vmatpush1.msra.mxu0 0.0
  %730 = vmatprep.subr.mxu0 0.0
  %731 = vmatpush1.msra.mxu0 0.0
  %732 = vmatprep.subr.mxu0 0.0
  %733 = vmatpush1.msra.mxu0 0.0
  %734 = vmatprep.subr.mxu0 0.0
  %735 = vmatpush1.msra.mxu0 0.0
  %736 = vmatprep.subr.mxu0 0.0
  %737 = vmatpush1.msra.mxu0 0.0
  %738 = vmatprep.subr.mxu0 0.0
  %739 = vmatpush1.msra.mxu0 0.0
  %740 = vmatprep.subr.mxu0 0.0
  %741 = vmatpush1.msra.mxu0 0.0
  %742 = vmatprep.subr.mxu0 0.0
  %743 = vmatpush1.msra.mxu0 0.0
  %744 = vmatprep.subr.mxu0 0.0
  %745 = vmatpush1.msra.mxu0 0.0
  %746 = vmatprep.mubr.f32.mxu0 0.0
  %747 = vmatmul.mubr.f32.gmra.mrb[0].mxu0 %v680
  %v748 = vpop.f32.mrb[0].mxu0
  %v749 = vadd.f32 0.0, %v748
  %v750 = vpop.f32.mrb[0].mxu0
  %v751 = vadd.f32 0.0, %v750
  %752 = vdwg.mxu0
  %753 = vmatprep.subr.mxu0 %v45
  %754 = vmatpush1.msra.mxu0 %v43
  %755 = vmatprep.subr.mxu0 0.0
  %756 = vmatpush1.msra.mxu0 0.0
  %757 = vmatprep.subr.mxu0 0.0
  %758 = vmatpush1.msra.mxu0 0.0
  %759 = vmatprep.subr.mxu0 0.0
  %760 = vmatpush1.msra.mxu0 0.0
  %761 = vmatprep.subr.mxu0 0.0
  %762 = vmatpush1.msra.mxu0 0.0
  %763 = vmatprep.subr.mxu0 0.0
  %764 = vmatpush1.msra.mxu0 0.0
  %765 = vmatprep.subr.mxu0 0.0
  %766 = vmatpush1.msra.mxu0 0.0
  %767 = vmatprep.subr.mxu0 0.0
  %768 = vmatpush1.msra.mxu0 0.0
  %769 = vmatprep.subr.mxu0 0.0
  %770 = vmatpush1.msra.mxu0 0.0
  %771 = vmatprep.subr.mxu0 0.0
  %772 = vmatpush1.msra.mxu0 0.0
  %773 = vmatprep.subr.mxu0 0.0
  %774 = vmatpush1.msra.mxu0 0.0
  %775 = vmatprep.subr.mxu0 0.0
  %776 = vmatpush1.msra.mxu0 0.0
  %777 = vmatprep.subr.mxu0 0.0
  %778 = vmatpush1.msra.mxu0 0.0
  %779 = vmatprep.subr.mxu0 0.0
  %780 = vmatpush1.msra.mxu0 0.0
  %781 = vmatprep.subr.mxu0 0.0
  %782 = vmatpush1.msra.mxu0 0.0
  %783 = vmatprep.subr.mxu0 0.0
  %784 = vmatpush1.msra.mxu0 0.0
  %785 = vmatprep.subr.mxu0 0.0
  %786 = vmatpush1.msra.mxu0 0.0
  %787 = vmatprep.subr.mxu0 0.0
  %788 = vmatpush1.msra.mxu0 0.0
  %789 = vmatprep.subr.mxu0 0.0
  %790 = vmatpush1.msra.mxu0 0.0
  %791 = vmatprep.subr.mxu0 0.0
  %792 = vmatpush1.msra.mxu0 0.0
  %793 = vmatprep.subr.mxu0 0.0
  %794 = vmatpush1.msra.mxu0 0.0
  %795 = vmatprep.subr.mxu0 0.0
  %796 = vmatpush1.msra.mxu0 0.0
  %797 = vmatprep.subr.mxu0 0.0
  %798 = vmatpush1.msra.mxu0 0.0
  %799 = vmatprep.subr.mxu0 0.0
  %800 = vmatpush1.msra.mxu0 0.0
  %801 = vmatprep.subr.mxu0 0.0
  %802 = vmatpush1.msra.mxu0 0.0
  %803 = vmatprep.subr.mxu0 0.0
  %804 = vmatpush1.msra.mxu0 0.0
  %805 = vmatprep.subr.mxu0 0.0
  %806 = vmatpush1.msra.mxu0 0.0
  %807 = vmatprep.subr.mxu0 0.0
  %808 = vmatpush1.msra.mxu0 0.0
  %809 = vmatprep.subr.mxu0 0.0
  %810 = vmatpush1.msra.mxu0 0.0
  %811 = vmatprep.subr.mxu0 0.0
  %812 = vmatpush1.msra.mxu0 0.0
  %813 = vmatprep.subr.mxu0 0.0
  %814 = vmatpush1.msra.mxu0 0.0
  %815 = vmatprep.subr.mxu0 0.0
  %816 = vmatpush1.msra.mxu0 0.0
  %817 = vmatprep.mubr.f32.mxu0 0.0
  %818 = vmatmul.mubr.f32.gmra.mrb[0].mxu0 %v680
  %v819 = vpop.f32.mrb[0].mxu0
  %v820 = vadd.f32 0.0, %v819
  %v821 = vpop.f32.mrb[0].mxu0
  %v822 = vadd.f32 0.0, %v821
  %823 = vdwg.mxu0
  %824 = vrot.lane.b32.xlu0 %v749, 111
  %v825 = vpop.permute.xlu0 %824
  %826 = vrot.lane.b32.xlu0 %v751, 111
  %v827 = vpop.permute.xlu0 %826
  %828 = vrot.lane.b32.xlu0 %v820, 111
  %v829 = vpop.permute.xlu0 %828
  %830 = vrot.lane.b32.xlu0 %v822, 111
  %v831 = vpop.permute.xlu0 %830
  %vm832 = vcmp.lt.s32.totalorder %v198, 111
  %v833 = vsel %vm832, %v829, %v831
  %v834 = vsel %vm832, %v827, %v829
  %v835 = vsel %vm832, %v825, %v827
  %v836 = vsel %vm832, %v831, %v825
  %v837 = vadd.f32 %v673, %v835
  %v838 = vadd.f32 %v674, %v834
  %v839 = vadd.f32 %v675, %v833
  %v840 = vadd.f32 %v676, %v836
  %s841 = scalar_lea.vmem %s1, 40
  %v842 = vld [vmem:[%s841] sm:$0xff]
  %v844 = vsel %vm34, %v842, 0
  %846 = vmatprep.subr.mxu0 %v41
  %847 = vmatpush1.msra.mxu0 %v39
  %848 = vmatprep.subr.mxu0 0.0
  %849 = vmatpush1.msra.mxu0 0.0
  %850 = vmatprep.subr.mxu0 0.0
  %851 = vmatpush1.msra.mxu0 0.0
  %852 = vmatprep.subr.mxu0 0.0
  %853 = vmatpush1.msra.mxu0 0.0
  %854 = vmatprep.subr.mxu0 0.0
  %855 = vmatpush1.msra.mxu0 0.0
  %856 = vmatprep.subr.mxu0 0.0
  %857 = vmatpush1.msra.mxu0 0.0
  %858 = vmatprep.subr.mxu0 0.0
  %859 = vmatpush1.msra.mxu0 0.0
  %860 = vmatprep.subr.mxu0 0.0
  %861 = vmatpush1.msra.mxu0 0.0
  %862 = vmatprep.subr.mxu0 0.0
  %863 = vmatpush1.msra.mxu0 0.0
  %864 = vmatprep.subr.mxu0 0.0
  %865 = vmatpush1.msra.mxu0 0.0
  %866 = vmatprep.subr.mxu0 0.0
  %867 = vmatpush1.msra.mxu0 0.0
  %868 = vmatprep.subr.mxu0 0.0
  %869 = vmatpush1.msra.mxu0 0.0
  %870 = vmatprep.subr.mxu0 0.0
  %871 = vmatpush1.msra.mxu0 0.0
  %872 = vmatprep.subr.mxu0 0.0
  %873 = vmatpush1.msra.mxu0 0.0
  %874 = vmatprep.subr.mxu0 0.0
  %875 = vmatpush1.msra.mxu0 0.0
  %876 = vmatprep.subr.mxu0 0.0
  %877 = vmatpush1.msra.mxu0 0.0
  %878 = vmatprep.subr.mxu0 0.0
  %879 = vmatpush1.msra.mxu0 0.0
  %880 = vmatprep.subr.mxu0 0.0
  %881 = vmatpush1.msra.mxu0 0.0
  %882 = vmatprep.subr.mxu0 0.0
  %883 = vmatpush1.msra.mxu0 0.0
  %884 = vmatprep.subr.mxu0 0.0
  %885 = vmatpush1.msra.mxu0 0.0
  %886 = vmatprep.subr.mxu0 0.0
  %887 = vmatpush1.msra.mxu0 0.0
  %888 = vmatprep.subr.mxu0 0.0
  %889 = vmatpush1.msra.mxu0 0.0
  %890 = vmatprep.subr.mxu0 0.0
  %891 = vmatpush1.msra.mxu0 0.0
  %892 = vmatprep.subr.mxu0 0.0
  %893 = vmatpush1.msra.mxu0 0.0
  %894 = vmatprep.subr.mxu0 0.0
  %895 = vmatpush1.msra.mxu0 0.0
  %896 = vmatprep.subr.mxu0 0.0
  %897 = vmatpush1.msra.mxu0 0.0
  %898 = vmatprep.subr.mxu0 0.0
  %899 = vmatpush1.msra.mxu0 0.0
  %900 = vmatprep.subr.mxu0 0.0
  %901 = vmatpush1.msra.mxu0 0.0
  %902 = vmatprep.subr.mxu0 0.0
  %903 = vmatpush1.msra.mxu0 0.0
  %904 = vmatprep.subr.mxu0 0.0
  %905 = vmatpush1.msra.mxu0 0.0
  %906 = vmatprep.subr.mxu0 0.0
  %907 = vmatpush1.msra.mxu0 0.0
  %908 = vmatprep.subr.mxu0 0.0
  %909 = vmatpush1.msra.mxu0 0.0
  %910 = vmatprep.mubr.f32.mxu0 0.0
  %911 = vmatmul.mubr.f32.gmra.mrb[0].mxu0 %v844
  %v912 = vpop.f32.mrb[0].mxu0
  %v913 = vadd.f32 0.0, %v912
  %v914 = vpop.f32.mrb[0].mxu0
  %v915 = vadd.f32 0.0, %v914
  %916 = vdwg.mxu0
  %917 = vmatprep.subr.mxu0 %v45
  %918 = vmatpush1.msra.mxu0 %v43
  %919 = vmatprep.subr.mxu0 0.0
  %920 = vmatpush1.msra.mxu0 0.0
  %921 = vmatprep.subr.mxu0 0.0
  %922 = vmatpush1.msra.mxu0 0.0
  %923 = vmatprep.subr.mxu0 0.0
  %924 = vmatpush1.msra.mxu0 0.0
  %925 = vmatprep.subr.mxu0 0.0
  %926 = vmatpush1.msra.mxu0 0.0
  %927 = vmatprep.subr.mxu0 0.0
  %928 = vmatpush1.msra.mxu0 0.0
  %929 = vmatprep.subr.mxu0 0.0
  %930 = vmatpush1.msra.mxu0 0.0
  %931 = vmatprep.subr.mxu0 0.0
  %932 = vmatpush1.msra.mxu0 0.0
  %933 = vmatprep.subr.mxu0 0.0
  %934 = vmatpush1.msra.mxu0 0.0
  %935 = vmatprep.subr.mxu0 0.0
  %936 = vmatpush1.msra.mxu0 0.0
  %937 = vmatprep.subr.mxu0 0.0
  %938 = vmatpush1.msra.mxu0 0.0
  %939 = vmatprep.subr.mxu0 0.0
  %940 = vmatpush1.msra.mxu0 0.0
  %941 = vmatprep.subr.mxu0 0.0
  %942 = vmatpush1.msra.mxu0 0.0
  %943 = vmatprep.subr.mxu0 0.0
  %944 = vmatpush1.msra.mxu0 0.0
  %945 = vmatprep.subr.mxu0 0.0
  %946 = vmatpush1.msra.mxu0 0.0
  %947 = vmatprep.subr.mxu0 0.0
  %948 = vmatpush1.msra.mxu0 0.0
  %949 = vmatprep.subr.mxu0 0.0
  %950 = vmatpush1.msra.mxu0 0.0
  %951 = vmatprep.subr.mxu0 0.0
  %952 = vmatpush1.msra.mxu0 0.0
  %953 = vmatprep.subr.mxu0 0.0
  %954 = vmatpush1.msra.mxu0 0.0
  %955 = vmatprep.subr.mxu0 0.0
  %956 = vmatpush1.msra.mxu0 0.0
  %957 = vmatprep.subr.mxu0 0.0
  %958 = vmatpush1.msra.mxu0 0.0
  %959 = vmatprep.subr.mxu0 0.0
  %960 = vmatpush1.msra.mxu0 0.0
  %961 = vmatprep.subr.mxu0 0.0
  %962 = vmatpush1.msra.mxu0 0.0
  %963 = vmatprep.subr.mxu0 0.0
  %964 = vmatpush1.msra.mxu0 0.0
  %965 = vmatprep.subr.mxu0 0.0
  %966 = vmatpush1.msra.mxu0 0.0
  %967 = vmatprep.subr.mxu0 0.0
  %968 = vmatpush1.msra.mxu0 0.0
  %969 = vmatprep.subr.mxu0 0.0
  %970 = vmatpush1.msra.mxu0 0.0
  %971 = vmatprep.subr.mxu0 0.0
  %972 = vmatpush1.msra.mxu0 0.0
  %973 = vmatprep.subr.mxu0 0.0
  %974 = vmatpush1.msra.mxu0 0.0
  %975 = vmatprep.subr.mxu0 0.0
  %976 = vmatpush1.msra.mxu0 0.0
  %977 = vmatprep.subr.mxu0 0.0
  %978 = vmatpush1.msra.mxu0 0.0
  %979 = vmatprep.subr.mxu0 0.0
  %980 = vmatpush1.msra.mxu0 0.0
  %981 = vmatprep.mubr.f32.mxu0 0.0
  %982 = vmatmul.mubr.f32.gmra.mrb[0].mxu0 %v844
  %v983 = vpop.f32.mrb[0].mxu0
  %v984 = vadd.f32 0.0, %v983
  %v985 = vpop.f32.mrb[0].mxu0
  %v986 = vadd.f32 0.0, %v985
  %987 = vdwg.mxu0
  %988 = vrot.lane.b32.xlu0 %v913, 110
  %v989 = vpop.permute.xlu0 %988
  %990 = vrot.lane.b32.xlu0 %v915, 110
  %v991 = vpop.permute.xlu0 %990
  %992 = vrot.lane.b32.xlu0 %v984, 110
  %v993 = vpop.permute.xlu0 %992
  %994 = vrot.lane.b32.xlu0 %v986, 110
  %v995 = vpop.permute.xlu0 %994
  %vm996 = vcmp.lt.s32.totalorder %v198, 110
  %v997 = vsel %vm996, %v993, %v995
  %v998 = vsel %vm996, %v991, %v993
  %v999 = vsel %vm996, %v989, %v991
  %v1000 = vsel %vm996, %v995, %v989
  %v1001 = vadd.f32 %v837, %v999
  %v1002 = vadd.f32 %v838, %v998
  %v1003 = vadd.f32 %v839, %v997
  %v1004 = vadd.f32 %v840, %v1000
  %s1005 = scalar_lea.vmem %s1, 48
  %v1006 = vld [vmem:[%s1005] sm:$0xff]
  %v1008 = vsel %vm34, %v1006, 0
  %1010 = vmatprep.subr.mxu0 %v41
  %1011 = vmatpush1.msra.mxu0 %v39
  %1012 = vmatprep.subr.mxu0 0.0
  %1013 = vmatpush1.msra.mxu0 0.0
  %1014 = vmatprep.subr.mxu0 0.0
  %1015 = vmatpush1.msra.mxu0 0.0
  %1016 = vmatprep.subr.mxu0 0.0
  %1017 = vmatpush1.msra.mxu0 0.0
  %1018 = vmatprep.subr.mxu0 0.0
  %1019 = vmatpush1.msra.mxu0 0.0
  %1020 = vmatprep.subr.mxu0 0.0
  %1021 = vmatpush1.msra.mxu0 0.0
  %1022 = vmatprep.subr.mxu0 0.0
  %1023 = vmatpush1.msra.mxu0 0.0
  %1024 = vmatprep.subr.mxu0 0.0
  %1025 = vmatpush1.msra.mxu0 0.0
  %1026 = vmatprep.subr.mxu0 0.0
  %1027 = vmatpush1.msra.mxu0 0.0
  %1028 = vmatprep.subr.mxu0 0.0
  %1029 = vmatpush1.msra.mxu0 0.0
  %1030 = vmatprep.subr.mxu0 0.0
  %1031 = vmatpush1.msra.mxu0 0.0
  %1032 = vmatprep.subr.mxu0 0.0
  %1033 = vmatpush1.msra.mxu0 0.0
  %1034 = vmatprep.subr.mxu0 0.0
  %1035 = vmatpush1.msra.mxu0 0.0
  %1036 = vmatprep.subr.mxu0 0.0
  %1037 = vmatpush1.msra.mxu0 0.0
  %1038 = vmatprep.subr.mxu0 0.0
  %1039 = vmatpush1.msra.mxu0 0.0
  %1040 = vmatprep.subr.mxu0 0.0
  %1041 = vmatpush1.msra.mxu0 0.0
  %1042 = vmatprep.subr.mxu0 0.0
  %1043 = vmatpush1.msra.mxu0 0.0
  %1044 = vmatprep.subr.mxu0 0.0
  %1045 = vmatpush1.msra.mxu0 0.0
  %1046 = vmatprep.subr.mxu0 0.0
  %1047 = vmatpush1.msra.mxu0 0.0
  %1048 = vmatprep.subr.mxu0 0.0
  %1049 = vmatpush1.msra.mxu0 0.0
  %1050 = vmatprep.subr.mxu0 0.0
  %1051 = vmatpush1.msra.mxu0 0.0
  %1052 = vmatprep.subr.mxu0 0.0
  %1053 = vmatpush1.msra.mxu0 0.0
  %1054 = vmatprep.subr.mxu0 0.0
  %1055 = vmatpush1.msra.mxu0 0.0
  %1056 = vmatprep.subr.mxu0 0.0
  %1057 = vmatpush1.msra.mxu0 0.0
  %1058 = vmatprep.subr.mxu0 0.0
  %1059 = vmatpush1.msra.mxu0 0.0
  %1060 = vmatprep.subr.mxu0 0.0
  %1061 = vmatpush1.msra.mxu0 0.0
  %1062 = vmatprep.subr.mxu0 0.0
  %1063 = vmatpush1.msra.mxu0 0.0
  %1064 = vmatprep.subr.mxu0 0.0
  %1065 = vmatpush1.msra.mxu0 0.0
  %1066 = vmatprep.subr.mxu0 0.0
  %1067 = vmatpush1.msra.mxu0 0.0
  %1068 = vmatprep.subr.mxu0 0.0
  %1069 = vmatpush1.msra.mxu0 0.0
  %1070 = vmatprep.subr.mxu0 0.0
  %1071 = vmatpush1.msra.mxu0 0.0
  %1072 = vmatprep.subr.mxu0 0.0
  %1073 = vmatpush1.msra.mxu0 0.0
  %1074 = vmatprep.mubr.f32.mxu0 0.0
  %1075 = vmatmul.mubr.f32.gmra.mrb[0].mxu0 %v1008
  %v1076 = vpop.f32.mrb[0].mxu0
  %v1077 = vadd.f32 0.0, %v1076
  %v1078 = vpop.f32.mrb[0].mxu0
  %v1079 = vadd.f32 0.0, %v1078
  %1080 = vdwg.mxu0
  %1081 = vmatprep.subr.mxu0 %v45
  %1082 = vmatpush1.msra.mxu0 %v43
  %1083 = vmatprep.subr.mxu0 0.0
  %1084 = vmatpush1.msra.mxu0 0.0
  %1085 = vmatprep.subr.mxu0 0.0
  %1086 = vmatpush1.msra.mxu0 0.0
  %1087 = vmatprep.subr.mxu0 0.0
  %1088 = vmatpush1.msra.mxu0 0.0
  %1089 = vmatprep.subr.mxu0 0.0
  %1090 = vmatpush1.msra.mxu0 0.0
  %1091 = vmatprep.subr.mxu0 0.0
  %1092 = vmatpush1.msra.mxu0 0.0
  %1093 = vmatprep.subr.mxu0 0.0
  %1094 = vmatpush1.msra.mxu0 0.0
  %1095 = vmatprep.subr.mxu0 0.0
  %1096 = vmatpush1.msra.mxu0 0.0
  %1097 = vmatprep.subr.mxu0 0.0
  %1098 = vmatpush1.msra.mxu0 0.0
  %1099 = vmatprep.subr.mxu0 0.0
  %1100 = vmatpush1.msra.mxu0 0.0
  %1101 = vmatprep.subr.mxu0 0.0
  %1102 = vmatpush1.msra.mxu0 0.0
  %1103 = vmatprep.subr.mxu0 0.0
  %1104 = vmatpush1.msra.mxu0 0.0
  %1105 = vmatprep.subr.mxu0 0.0
  %1106 = vmatpush1.msra.mxu0 0.0
  %1107 = vmatprep.subr.mxu0 0.0
  %1108 = vmatpush1.msra.mxu0 0.0
  %1109 = vmatprep.subr.mxu0 0.0
  %1110 = vmatpush1.msra.mxu0 0.0
  %1111 = vmatprep.subr.mxu0 0.0
  %1112 = vmatpush1.msra.mxu0 0.0
  %1113 = vmatprep.subr.mxu0 0.0
  %1114 = vmatpush1.msra.mxu0 0.0
  %1115 = vmatprep.subr.mxu0 0.0
  %1116 = vmatpush1.msra.mxu0 0.0
  %1117 = vmatprep.subr.mxu0 0.0
  %1118 = vmatpush1.msra.mxu0 0.0
  %1119 = vmatprep.subr.mxu0 0.0
  %1120 = vmatpush1.msra.mxu0 0.0
  %1121 = vmatprep.subr.mxu0 0.0
  %1122 = vmatpush1.msra.mxu0 0.0
  %1123 = vmatprep.subr.mxu0 0.0
  %1124 = vmatpush1.msra.mxu0 0.0
  %1125 = vmatprep.subr.mxu0 0.0
  %1126 = vmatpush1.msra.mxu0 0.0
  %1127 = vmatprep.subr.mxu0 0.0
  %1128 = vmatpush1.msra.mxu0 0.0
  %1129 = vmatprep.subr.mxu0 0.0
  %1130 = vmatpush1.msra.mxu0 0.0
  %1131 = vmatprep.subr.mxu0 0.0
  %1132 = vmatpush1.msra.mxu0 0.0
  %1133 = vmatprep.subr.mxu0 0.0
  %1134 = vmatpush1.msra.mxu0 0.0
  %1135 = vmatprep.subr.mxu0 0.0
  %1136 = vmatpush1.msra.mxu0 0.0
  %1137 = vmatprep.subr.mxu0 0.0
  %1138 = vmatpush1.msra.mxu0 0.0
  %1139 = vmatprep.subr.mxu0 0.0
  %1140 = vmatpush1.msra.mxu0 0.0
  %1141 = vmatprep.subr.mxu0 0.0
  %1142 = vmatpush1.msra.mxu0 0.0
  %1143 = vmatprep.subr.mxu0 0.0
  %1144 = vmatpush1.msra.mxu0 0.0
  %1145 = vmatprep.mubr.f32.mxu0 0.0
  %1146 = vmatmul.mubr.f32.gmra.mrb[0].mxu0 %v1008
  %v1147 = vpop.f32.mrb[0].mxu0
  %v1148 = vadd.f32 0.0, %v1147
  %v1149 = vpop.f32.mrb[0].mxu0
  %v1150 = vadd.f32 0.0, %v1149
  %1151 = vdwg.mxu0
  %1152 = vrot.lane.b32.xlu0 %v1077, 96
  %v1153 = vpop.permute.xlu0 %1152
  %1154 = vrot.lane.b32.xlu0 %v1079, 96
  %v1155 = vpop.permute.xlu0 %1154
  %1156 = vrot.lane.b32.xlu0 %v1148, 96
  %v1157 = vpop.permute.xlu0 %1156
  %1158 = vrot.lane.b32.xlu0 %v1150, 96
  %v1159 = vpop.permute.xlu0 %1158
  %vm1160 = vcmp.lt.s32.totalorder %v198, 96
  %v1161 = vsel %vm1160, %v1157, %v1159
  %v1162 = vsel %vm1160, %v1155, %v1157
  %v1163 = vsel %vm1160, %v1153, %v1155
  %v1164 = vsel %vm1160, %v1159, %v1153
  %v1165 = vadd.f32 %v1001, %v1163
  %v1166 = vadd.f32 %v1002, %v1162
  %v1167 = vadd.f32 %v1003, %v1161
  %v1168 = vadd.f32 %v1004, %v1164
  %s1169 = scalar_lea.vmem %s1, 56
  %v1170 = vld [vmem:[%s1169] sm:$0xff]
  %v1172 = vsel %vm34, %v1170, 0
  %1174 = vmatprep.subr.mxu0 %v41
  %1175 = vmatpush1.msra.mxu0 %v39
  %1176 = vmatprep.subr.mxu0 0.0
  %1177 = vmatpush1.msra.mxu0 0.0
  %1178 = vmatprep.subr.mxu0 0.0
  %1179 = vmatpush1.msra.mxu0 0.0
  %1180 = vmatprep.subr.mxu0 0.0
  %1181 = vmatpush1.msra.mxu0 0.0
  %1182 = vmatprep.subr.mxu0 0.0
  %1183 = vmatpush1.msra.mxu0 0.0
  %1184 = vmatprep.subr.mxu0 0.0
  %1185 = vmatpush1.msra.mxu0 0.0
  %1186 = vmatprep.subr.mxu0 0.0
  %1187 = vmatpush1.msra.mxu0 0.0
  %1188 = vmatprep.subr.mxu0 0.0
  %1189 = vmatpush1.msra.mxu0 0.0
  %1190 = vmatprep.subr.mxu0 0.0
  %1191 = vmatpush1.msra.mxu0 0.0
  %1192 = vmatprep.subr.mxu0 0.0
  %1193 = vmatpush1.msra.mxu0 0.0
  %1194 = vmatprep.subr.mxu0 0.0
  %1195 = vmatpush1.msra.mxu0 0.0
  %1196 = vmatprep.subr.mxu0 0.0
  %1197 = vmatpush1.msra.mxu0 0.0
  %1198 = vmatprep.subr.mxu0 0.0
  %1199 = vmatpush1.msra.mxu0 0.0
  %1200 = vmatprep.subr.mxu0 0.0
  %1201 = vmatpush1.msra.mxu0 0.0
  %1202 = vmatprep.subr.mxu0 0.0
  %1203 = vmatpush1.msra.mxu0 0.0
  %1204 = vmatprep.subr.mxu0 0.0
  %1205 = vmatpush1.msra.mxu0 0.0
  %1206 = vmatprep.subr.mxu0 0.0
  %1207 = vmatpush1.msra.mxu0 0.0
  %1208 = vmatprep.subr.mxu0 0.0
  %1209 = vmatpush1.msra.mxu0 0.0
  %1210 = vmatprep.subr.mxu0 0.0
  %1211 = vmatpush1.msra.mxu0 0.0
  %1212 = vmatprep.subr.mxu0 0.0
  %1213 = vmatpush1.msra.mxu0 0.0
  %1214 = vmatprep.subr.mxu0 0.0
  %1215 = vmatpush1.msra.mxu0 0.0
  %1216 = vmatprep.subr.mxu0 0.0
  %1217 = vmatpush1.msra.mxu0 0.0
  %1218 = vmatprep.subr.mxu0 0.0
  %1219 = vmatpush1.msra.mxu0 0.0
  %1220 = vmatprep.subr.mxu0 0.0
  %1221 = vmatpush1.msra.mxu0 0.0
  %1222 = vmatprep.subr.mxu0 0.0
  %1223 = vmatpush1.msra.mxu0 0.0
  %1224 = vmatprep.subr.mxu0 0.0
  %1225 = vmatpush1.msra.mxu0 0.0
  %1226 = vmatprep.subr.mxu0 0.0
  %1227 = vmatpush1.msra.mxu0 0.0
  %1228 = vmatprep.subr.mxu0 0.0
  %1229 = vmatpush1.msra.mxu0 0.0
  %1230 = vmatprep.subr.mxu0 0.0
  %1231 = vmatpush1.msra.mxu0 0.0
  %1232 = vmatprep.subr.mxu0 0.0
  %1233 = vmatpush1.msra.mxu0 0.0
  %1234 = vmatprep.subr.mxu0 0.0
  %1235 = vmatpush1.msra.mxu0 0.0
  %1236 = vmatprep.subr.mxu0 0.0
  %1237 = vmatpush1.msra.mxu0 0.0
  %1238 = vmatprep.mubr.f32.mxu0 0.0
  %1239 = vmatmul.mubr.f32.gmra.mrb[0].mxu0 %v1172
  %v1240 = vpop.f32.mrb[0].mxu0
  %v1241 = vadd.f32 0.0, %v1240
  %v1242 = vpop.f32.mrb[0].mxu0
  %v1243 = vadd.f32 0.0, %v1242
  %1244 = vdwg.mxu0
  %1245 = vmatprep.subr.mxu0 %v45
  %1246 = vmatpush1.msra.mxu0 %v43
  %1247 = vmatprep.subr.mxu0 0.0
  %1248 = vmatpush1.msra.mxu0 0.0
  %1249 = vmatprep.subr.mxu0 0.0
  %1250 = vmatpush1.msra.mxu0 0.0
  %1251 = vmatprep.subr.mxu0 0.0
  %1252 = vmatpush1.msra.mxu0 0.0
  %1253 = vmatprep.subr.mxu0 0.0
  %1254 = vmatpush1.msra.mxu0 0.0
  %1255 = vmatprep.subr.mxu0 0.0
  %1256 = vmatpush1.msra.mxu0 0.0
  %1257 = vmatprep.subr.mxu0 0.0
  %1258 = vmatpush1.msra.mxu0 0.0
  %1259 = vmatprep.subr.mxu0 0.0
  %1260 = vmatpush1.msra.mxu0 0.0
  %1261 = vmatprep.subr.mxu0 0.0
  %1262 = vmatpush1.msra.mxu0 0.0
  %1263 = vmatprep.subr.mxu0 0.0
  %1264 = vmatpush1.msra.mxu0 0.0
  %1265 = vmatprep.subr.mxu0 0.0
  %1266 = vmatpush1.msra.mxu0 0.0
  %1267 = vmatprep.subr.mxu0 0.0
  %1268 = vmatpush1.msra.mxu0 0.0
  %1269 = vmatprep.subr.mxu0 0.0
  %1270 = vmatpush1.msra.mxu0 0.0
  %1271 = vmatprep.subr.mxu0 0.0
  %1272 = vmatpush1.msra.mxu0 0.0
  %1273 = vmatprep.subr.mxu0 0.0
  %1274 = vmatpush1.msra.mxu0 0.0
  %1275 = vmatprep.subr.mxu0 0.0
  %1276 = vmatpush1.msra.mxu0 0.0
  %1277 = vmatprep.subr.mxu0 0.0
  %1278 = vmatpush1.msra.mxu0 0.0
  %1279 = vmatprep.subr.mxu0 0.0
  %1280 = vmatpush1.msra.mxu0 0.0
  %1281 = vmatprep.subr.mxu0 0.0
  %1282 = vmatpush1.msra.mxu0 0.0
  %1283 = vmatprep.subr.mxu0 0.0
  %1284 = vmatpush1.msra.mxu0 0.0
  %1285 = vmatprep.subr.mxu0 0.0
  %1286 = vmatpush1.msra.mxu0 0.0
  %1287 = vmatprep.subr.mxu0 0.0
  %1288 = vmatpush1.msra.mxu0 0.0
  %1289 = vmatprep.subr.mxu0 0.0
  %1290 = vmatpush1.msra.mxu0 0.0
  %1291 = vmatprep.subr.mxu0 0.0
  %1292 = vmatpush1.msra.mxu0 0.0
  %1293 = vmatprep.subr.mxu0 0.0
  %1294 = vmatpush1.msra.mxu0 0.0
  %1295 = vmatprep.subr.mxu0 0.0
  %1296 = vmatpush1.msra.mxu0 0.0
  %1297 = vmatprep.subr.mxu0 0.0
  %1298 = vmatpush1.msra.mxu0 0.0
  %1299 = vmatprep.subr.mxu0 0.0
  %1300 = vmatpush1.msra.mxu0 0.0
  %1301 = vmatprep.subr.mxu0 0.0
  %1302 = vmatpush1.msra.mxu0 0.0
  %1303 = vmatprep.subr.mxu0 0.0
  %1304 = vmatpush1.msra.mxu0 0.0
  %1305 = vmatprep.subr.mxu0 0.0
  %1306 = vmatpush1.msra.mxu0 0.0
  %1307 = vmatprep.subr.mxu0 0.0
  %1308 = vmatpush1.msra.mxu0 0.0
  %1309 = vmatprep.mubr.f32.mxu0 0.0
  %1310 = vmatmul.mubr.f32.gmra.mrb[0].mxu0 %v1172
  %v1311 = vpop.f32.mrb[0].mxu0
  %v1312 = vadd.f32 0.0, %v1311
  %v1313 = vpop.f32.mrb[0].mxu0
  %v1314 = vadd.f32 0.0, %v1313
  %1315 = vdwg.mxu0
  %1316 = vrot.lane.b32.xlu0 %v1241, 95
  %v1317 = vpop.permute.xlu0 %1316
  %1318 = vrot.lane.b32.xlu0 %v1243, 95
  %v1319 = vpop.permute.xlu0 %1318
  %1320 = vrot.lane.b32.xlu0 %v1312, 95
  %v1321 = vpop.permute.xlu0 %1320
  %1322 = vrot.lane.b32.xlu0 %v1314, 95
  %v1323 = vpop.permute.xlu0 %1322
  %vm1324 = vcmp.lt.s32.totalorder %v198, 95
  %v1325 = vsel %vm1324, %v1321, %v1323
  %v1326 = vsel %vm1324, %v1319, %v1321
  %v1327 = vsel %vm1324, %v1317, %v1319
  %v1328 = vsel %vm1324, %v1323, %v1317
  %v1329 = vadd.f32 %v1165, %v1327
  %v1330 = vadd.f32 %v1166, %v1326
  %v1331 = vadd.f32 %v1167, %v1325
  %v1332 = vadd.f32 %v1168, %v1328
  %s1333 = scalar_lea.vmem %s1, 64
  %v1334 = vld [vmem:[%s1333] sm:$0xff]
  %v1336 = vsel %vm34, %v1334, 0
  %1338 = vmatprep.subr.mxu0 %v41
  %1339 = vmatpush1.msra.mxu0 %v39
  %1340 = vmatprep.subr.mxu0 0.0
  %1341 = vmatpush1.msra.mxu0 0.0
  %1342 = vmatprep.subr.mxu0 0.0
  %1343 = vmatpush1.msra.mxu0 0.0
  %1344 = vmatprep.subr.mxu0 0.0
  %1345 = vmatpush1.msra.mxu0 0.0
  %1346 = vmatprep.subr.mxu0 0.0
  %1347 = vmatpush1.msra.mxu0 0.0
  %1348 = vmatprep.subr.mxu0 0.0
  %1349 = vmatpush1.msra.mxu0 0.0
  %1350 = vmatprep.subr.mxu0 0.0
  %1351 = vmatpush1.msra.mxu0 0.0
  %1352 = vmatprep.subr.mxu0 0.0
  %1353 = vmatpush1.msra.mxu0 0.0
  %1354 = vmatprep.subr.mxu0 0.0
  %1355 = vmatpush1.msra.mxu0 0.0
  %1356 = vmatprep.subr.mxu0 0.0
  %1357 = vmatpush1.msra.mxu0 0.0
  %1358 = vmatprep.subr.mxu0 0.0
  %1359 = vmatpush1.msra.mxu0 0.0
  %1360 = vmatprep.subr.mxu0 0.0
  %1361 = vmatpush1.msra.mxu0 0.0
  %1362 = vmatprep.subr.mxu0 0.0
  %1363 = vmatpush1.msra.mxu0 0.0
  %1364 = vmatprep.subr.mxu0 0.0
  %1365 = vmatpush1.msra.mxu0 0.0
  %1366 = vmatprep.subr.mxu0 0.0
  %1367 = vmatpush1.msra.mxu0 0.0
  %1368 = vmatprep.subr.mxu0 0.0
  %1369 = vmatpush1.msra.mxu0 0.0
  %1370 = vmatprep.subr.mxu0 0.0
  %1371 = vmatpush1.msra.mxu0 0.0
  %1372 = vmatprep.subr.mxu0 0.0
  %1373 = vmatpush1.msra.mxu0 0.0
  %1374 = vmatprep.subr.mxu0 0.0
  %1375 = vmatpush1.msra.mxu0 0.0
  %1376 = vmatprep.subr.mxu0 0.0
  %1377 = vmatpush1.msra.mxu0 0.0
  %1378 = vmatprep.subr.mxu0 0.0
  %1379 = vmatpush1.msra.mxu0 0.0
  %1380 = vmatprep.subr.mxu0 0.0
  %1381 = vmatpush1.msra.mxu0 0.0
  %1382 = vmatprep.subr.mxu0 0.0
  %1383 = vmatpush1.msra.mxu0 0.0
  %1384 = vmatprep.subr.mxu0 0.0
  %1385 = vmatpush1.msra.mxu0 0.0
  %1386 = vmatprep.subr.mxu0 0.0
  %1387 = vmatpush1.msra.mxu0 0.0
  %1388 = vmatprep.subr.mxu0 0.0
  %1389 = vmatpush1.msra.mxu0 0.0
  %1390 = vmatprep.subr.mxu0 0.0
  %1391 = vmatpush1.msra.mxu0 0.0
  %1392 = vmatprep.subr.mxu0 0.0
  %1393 = vmatpush1.msra.mxu0 0.0
  %1394 = vmatprep.subr.mxu0 0.0
  %1395 = vmatpush1.msra.mxu0 0.0
  %1396 = vmatprep.subr.mxu0 0.0
  %1397 = vmatpush1.msra.mxu0 0.0
  %1398 = vmatprep.subr.mxu0 0.0
  %1399 = vmatpush1.msra.mxu0 0.0
  %1400 = vmatprep.subr.mxu0 0.0
  %1401 = vmatpush1.msra.mxu0 0.0
  %1402 = vmatprep.mubr.f32.mxu0 0.0
  %1403 = vmatmul.mubr.f32.gmra.mrb[0].mxu0 %v1336
  %v1404 = vpop.f32.mrb[0].mxu0
  %v1405 = vadd.f32 0.0, %v1404
  %v1406 = vpop.f32.mrb[0].mxu0
  %v1407 = vadd.f32 0.0, %v1406
  %1408 = vdwg.mxu0
  %1409 = vmatprep.subr.mxu0 %v45
  %1410 = vmatpush1.msra.mxu0 %v43
  %1411 = vmatprep.subr.mxu0 0.0
  %1412 = vmatpush1.msra.mxu0 0.0
  %1413 = vmatprep.subr.mxu0 0.0
  %1414 = vmatpush1.msra.mxu0 0.0
  %1415 = vmatprep.subr.mxu0 0.0
  %1416 = vmatpush1.msra.mxu0 0.0
  %1417 = vmatprep.subr.mxu0 0.0
  %1418 = vmatpush1.msra.mxu0 0.0
  %1419 = vmatprep.subr.mxu0 0.0
  %1420 = vmatpush1.msra.mxu0 0.0
  %1421 = vmatprep.subr.mxu0 0.0
  %1422 = vmatpush1.msra.mxu0 0.0
  %1423 = vmatprep.subr.mxu0 0.0
  %1424 = vmatpush1.msra.mxu0 0.0
  %1425 = vmatprep.subr.mxu0 0.0
  %1426 = vmatpush1.msra.mxu0 0.0
  %1427 = vmatprep.subr.mxu0 0.0
  %1428 = vmatpush1.msra.mxu0 0.0
  %1429 = vmatprep.subr.mxu0 0.0
  %1430 = vmatpush1.msra.mxu0 0.0
  %1431 = vmatprep.subr.mxu0 0.0
  %1432 = vmatpush1.msra.mxu0 0.0
  %1433 = vmatprep.subr.mxu0 0.0
  %1434 = vmatpush1.msra.mxu0 0.0
  %1435 = vmatprep.subr.mxu0 0.0
  %1436 = vmatpush1.msra.mxu0 0.0
  %1437 = vmatprep.subr.mxu0 0.0
  %1438 = vmatpush1.msra.mxu0 0.0
  %1439 = vmatprep.subr.mxu0 0.0
  %1440 = vmatpush1.msra.mxu0 0.0
  %1441 = vmatprep.subr.mxu0 0.0
  %1442 = vmatpush1.msra.mxu0 0.0
  %1443 = vmatprep.subr.mxu0 0.0
  %1444 = vmatpush1.msra.mxu0 0.0
  %1445 = vmatprep.subr.mxu0 0.0
  %1446 = vmatpush1.msra.mxu0 0.0
  %1447 = vmatprep.subr.mxu0 0.0
  %1448 = vmatpush1.msra.mxu0 0.0
  %1449 = vmatprep.subr.mxu0 0.0
  %1450 = vmatpush1.msra.mxu0 0.0
  %1451 = vmatprep.subr.mxu0 0.0
  %1452 = vmatpush1.msra.mxu0 0.0
  %1453 = vmatprep.subr.mxu0 0.0
  %1454 = vmatpush1.msra.mxu0 0.0
  %1455 = vmatprep.subr.mxu0 0.0
  %1456 = vmatpush1.msra.mxu0 0.0
  %1457 = vmatprep.subr.mxu0 0.0
  %1458 = vmatpush1.msra.mxu0 0.0
  %1459 = vmatprep.subr.mxu0 0.0
  %1460 = vmatpush1.msra.mxu0 0.0
  %1461 = vmatprep.subr.mxu0 0.0
  %1462 = vmatpush1.msra.mxu0 0.0
  %1463 = vmatprep.subr.mxu0 0.0
  %1464 = vmatpush1.msra.mxu0 0.0
  %1465 = vmatprep.subr.mxu0 0.0
  %1466 = vmatpush1.msra.mxu0 0.0
  %1467 = vmatprep.subr.mxu0 0.0
  %1468 = vmatpush1.msra.mxu0 0.0
  %1469 = vmatprep.subr.mxu0 0.0
  %1470 = vmatpush1.msra.mxu0 0.0
  %1471 = vmatprep.subr.mxu0 0.0
  %1472 = vmatpush1.msra.mxu0 0.0
  %1473 = vmatprep.mubr.f32.mxu0 0.0
  %1474 = vmatmul.mubr.f32.gmra.mrb[0].mxu0 %v1336
  %v1475 = vpop.f32.mrb[0].mxu0
  %v1476 = vadd.f32 0.0, %v1475
  %v1477 = vpop.f32.mrb[0].mxu0
  %v1478 = vadd.f32 0.0, %v1477
  %1479 = vdwg.mxu0
  %1480 = vrot.lane.b32.xlu0 %v1405, 94
  %v1481 = vpop.permute.xlu0 %1480
  %1482 = vrot.lane.b32.xlu0 %v1407, 94
  %v1483 = vpop.permute.xlu0 %1482
  %1484 = vrot.lane.b32.xlu0 %v1476, 94
  %v1485 = vpop.permute.xlu0 %1484
  %1486 = vrot.lane.b32.xlu0 %v1478, 94
  %v1487 = vpop.permute.xlu0 %1486
  %vm1488 = vcmp.lt.s32.totalorder %v198, 94
  %v1489 = vsel %vm1488, %v1485, %v1487
  %v1490 = vsel %vm1488, %v1483, %v1485
  %v1491 = vsel %vm1488, %v1481, %v1483
  %v1492 = vsel %vm1488, %v1487, %v1481
  %v1493 = vadd.f32 %v1329, %v1491
  %v1494 = vadd.f32 %v1330, %v1490
  %v1495 = vadd.f32 %v1331, %v1489
  %v1496 = vadd.f32 %v1332, %v1492
  %v1497 = vadd.s32 %v198, 128
  %v1498 = vadd.s32 %v198, 256
  %v1499 = vadd.s32 %v198, 384
  %v1500 = vand.u32 %v198, 255
  %v1501 = vand.u32 %v1497, 255
  %v1502 = vand.u32 %v1498, 255
  %v1503 = vand.u32 %v1499, 255
  %v1504 = vand.u32 %v198, 15
  %v1505 = vand.u32 %v1497, 15
  %v1506 = vand.u32 %v1498, 15
  %v1507 = vand.u32 %v1499, 15
  %vm1508 = vcmp.lt.s32.totalorder %v1500, 224
  %vm1509 = vcmp.lt.s32.totalorder %v1501, 224
  %vm1510 = vcmp.lt.s32.totalorder %v1502, 224
  %vm1511 = vcmp.lt.s32.totalorder %v1503, 224
  %vm1512 = vcmp.lt.s32.totalorder %v1504, 14
  %vm1513 = vcmp.lt.s32.totalorder %v1505, 14
  %vm1514 = vcmp.lt.s32.totalorder %v1506, 14
  %vm1515 = vcmp.lt.s32.totalorder %v1507, 14
  %vm1516 = vmand %vm1508, %vm1512
  %vm1517 = vmand %vm1509, %vm1513
  %vm1518 = vmand %vm1510, %vm1514
  %vm1519 = vmand %vm1511, %vm1515
  %v1520 = vsel %vm1516, 1, 0
  %v1521 = vsel %vm1517, 1, 0
  %v1522 = vsel %vm1518, 1, 0
  %v1523 = vsel %vm1519, 1, 0
  %v1524 = vcvt.s32.f32 %v1520
  %v1525 = vcvt.s32.f32 %v1521
  %v1526 = vcvt.s32.f32 %v1522
  %v1527 = vcvt.s32.f32 %v1523
  %v1528 = vmul.f32 %v1493, %v1524
  %v1529 = vmul.f32 %v1494, %v1525
  %v1530 = vmul.f32 %v1495, %v1526
  %v1531 = vmul.f32 %v1496, %v1527
  %v1532 = vadd.f32 %v1528, %v1529
  %v1533 = vadd.f32 %v1532, %v1530
  %v1534 = vadd.f32 %v1533, %v1531
  %1535 = vadd.xlane.f32.xlu0 %v1534
  %v1536 = vpop.xlane.xlu0 %1535
  %v1537 = vmul.f32 %v1536, 0.0025510204
  %v1538 = vmul.f32 %v1528, %v1493
  %v1539 = vmul.f32 %v1529, %v1494
  %v1540 = vmul.f32 %v1530, %v1495
  %v1541 = vmul.f32 %v1531, %v1496
  %v1542 = vadd.f32 %v1538, %v1539
  %v1543 = vadd.f32 %v1542, %v1540
  %v1544 = vadd.f32 %v1543, %v1541
  %1545 = vadd.xlane.f32.xlu0 %v1544
  %v1546 = vpop.xlane.xlu0 %1545
  %v1547 = vmul.f32 %v1546, 0.0025510204
  %v1548 = vmul.f32 %v1537, %v1537
  %v1549 = vsub.f32 %v1547, %v1548
  %v1550 = vld [vmem:[%s4] sm:$0xff]
  %v1551 = vadd.f32 %v1549, 1e-05
  %v1552 = vrsqrt.pop %v1551
  %v1553 = vmul.f32 %v1550, %v1552
  %v1554 = vsub.f32 %v1493, %v1537
  %v1555 = vsub.f32 %v1494, %v1537
  %v1556 = vsub.f32 %v1495, %v1537
  %v1557 = vsub.f32 %v1496, %v1537
  %1559 = vset.pattern.permute.xlu0 0
  %1560 = vperm.xlu0 %1559, %v1553
  %v1561 = vpop.permute.xlu0 %1560
  %v1563 = vmul.f32 %v1554, %v1561
  %v1564 = vmul.f32 %v1555, %v1561
  %v1565 = vmul.f32 %v1556, %v1561
  %v1566 = vmul.f32 %v1557, %v1561
  %v1567 = vld [vmem:[%s5] sm:$0xff]
  %1569 = vset.pattern.permute.xlu0 0
  %1570 = vperm.xlu0 %1569, %v1567
  %v1571 = vpop.permute.xlu0 %1570
  %v1573 = vadd.f32 %v1563, %v1571
  %v1574 = vadd.f32 %v1564, %v1571
  %v1575 = vadd.f32 %v1565, %v1571
  %v1576 = vadd.f32 %v1566, %v1571
  %v1577 = vmax.f32 %v1573, 0.0
  %v1578 = vmax.f32 %v1574, 0.0
  %v1579 = vmax.f32 %v1575, 0.0
  %v1580 = vmax.f32 %v1576, 0.0
  %v1581 = vld [vmem:[%s2] sm:$0xff]
  %v1582 = vld [vmem:[%s3] sm:$0xff]
  %1584 = vset.pattern.permute.xlu0 0
  %1585 = vperm.xlu0 %1584, %v1582
  %v1586 = vpop.permute.xlu0 %1585
  %vm1588 = vcmask 64512
  %v1590 = vsel %vm1588, %v1581, 0
  %1592 = vmatprep.subr.mxu0 %v1578
  %1593 = vmatpush1.msra.mxu0 %v1577
  %1594 = vmatprep.subr.mxu0 0.0
  %1595 = vmatpush1.msra.mxu0 0.0
  %1596 = vmatprep.subr.mxu0 0.0
  %1597 = vmatpush1.msra.mxu0 0.0
  %1598 = vmatprep.subr.mxu0 0.0
  %1599 = vmatpush1.msra.mxu0 0.0
  %1600 = vmatprep.subr.mxu0 0.0
  %1601 = vmatpush1.msra.mxu0 0.0
  %1602 = vmatprep.subr.mxu0 0.0
  %1603 = vmatpush1.msra.mxu0 0.0
  %1604 = vmatprep.subr.mxu0 0.0
  %1605 = vmatpush1.msra.mxu0 0.0
  %1606 = vmatprep.subr.mxu0 0.0
  %1607 = vmatpush1.msra.mxu0 0.0
  %1608 = vmatprep.subr.mxu0 0.0
  %1609 = vmatpush1.msra.mxu0 0.0
  %1610 = vmatprep.subr.mxu0 0.0
  %1611 = vmatpush1.msra.mxu0 0.0
  %1612 = vmatprep.subr.mxu0 0.0
  %1613 = vmatpush1.msra.mxu0 0.0
  %1614 = vmatprep.subr.mxu0 0.0
  %1615 = vmatpush1.msra.mxu0 0.0
  %1616 = vmatprep.subr.mxu0 0.0
  %1617 = vmatpush1.msra.mxu0 0.0
  %1618 = vmatprep.subr.mxu0 0.0
  %1619 = vmatpush1.msra.mxu0 0.0
  %1620 = vmatprep.subr.mxu0 0.0
  %1621 = vmatpush1.msra.mxu0 0.0
  %1622 = vmatprep.subr.mxu0 0.0
  %1623 = vmatpush1.msra.mxu0 0.0
  %1624 = vmatprep.subr.mxu0 0.0
  %1625 = vmatpush1.msra.mxu0 0.0
  %1626 = vmatprep.subr.mxu0 0.0
  %1627 = vmatpush1.msra.mxu0 0.0
  %1628 = vmatprep.subr.mxu0 0.0
  %1629 = vmatpush1.msra.mxu0 0.0
  %1630 = vmatprep.subr.mxu0 0.0
  %1631 = vmatpush1.msra.mxu0 0.0
  %1632 = vmatprep.subr.mxu0 0.0
  %1633 = vmatpush1.msra.mxu0 0.0
  %1634 = vmatprep.subr.mxu0 0.0
  %1635 = vmatpush1.msra.mxu0 0.0
  %1636 = vmatprep.subr.mxu0 0.0
  %1637 = vmatpush1.msra.mxu0 0.0
  %1638 = vmatprep.subr.mxu0 0.0
  %1639 = vmatpush1.msra.mxu0 0.0
  %1640 = vmatprep.subr.mxu0 0.0
  %1641 = vmatpush1.msra.mxu0 0.0
  %1642 = vmatprep.subr.mxu0 0.0
  %1643 = vmatpush1.msra.mxu0 0.0
  %1644 = vmatprep.subr.mxu0 0.0
  %1645 = vmatpush1.msra.mxu0 0.0
  %1646 = vmatprep.subr.mxu0 0.0
  %1647 = vmatpush1.msra.mxu0 0.0
  %1648 = vmatprep.subr.mxu0 0.0
  %1649 = vmatpush1.msra.mxu0 0.0
  %1650 = vmatprep.subr.mxu0 0.0
  %1651 = vmatpush1.msra.mxu0 0.0
  %1652 = vmatprep.subr.mxu0 0.0
  %1653 = vmatpush1.msra.mxu0 0.0
  %1654 = vmatprep.subr.mxu0 0.0
  %1655 = vmatpush1.msra.mxu0 0.0
  %1656 = vmatprep.mubr.f32.mxu0 0.0
  %1657 = vmatmul.mubr.f32.gmra.mrb[0].mxu0 %v1590
  %v1658 = vpop.f32.mrb[0].mxu0
  %v1659 = vadd.f32 %v1586, %v1658
  %v1660 = vpop.f32.mrb[0].mxu0
  %v1661 = vadd.f32 %v1586, %v1660
  %1662 = vdwg.mxu0
  %1663 = vmatprep.subr.mxu0 %v1580
  %1664 = vmatpush1.msra.mxu0 %v1579
  %1665 = vmatprep.subr.mxu0 0.0
  %1666 = vmatpush1.msra.mxu0 0.0
  %1667 = vmatprep.subr.mxu0 0.0
  %1668 = vmatpush1.msra.mxu0 0.0
  %1669 = vmatprep.subr.mxu0 0.0
  %1670 = vmatpush1.msra.mxu0 0.0
  %1671 = vmatprep.subr.mxu0 0.0
  %1672 = vmatpush1.msra.mxu0 0.0
  %1673 = vmatprep.subr.mxu0 0.0
  %1674 = vmatpush1.msra.mxu0 0.0
  %1675 = vmatprep.subr.mxu0 0.0
  %1676 = vmatpush1.msra.mxu0 0.0
  %1677 = vmatprep.subr.mxu0 0.0
  %1678 = vmatpush1.msra.mxu0 0.0
  %1679 = vmatprep.subr.mxu0 0.0
  %1680 = vmatpush1.msra.mxu0 0.0
  %1681 = vmatprep.subr.mxu0 0.0
  %1682 = vmatpush1.msra.mxu0 0.0
  %1683 = vmatprep.subr.mxu0 0.0
  %1684 = vmatpush1.msra.mxu0 0.0
  %1685 = vmatprep.subr.mxu0 0.0
  %1686 = vmatpush1.msra.mxu0 0.0
  %1687 = vmatprep.subr.mxu0 0.0
  %1688 = vmatpush1.msra.mxu0 0.0
  %1689 = vmatprep.subr.mxu0 0.0
  %1690 = vmatpush1.msra.mxu0 0.0
  %1691 = vmatprep.subr.mxu0 0.0
  %1692 = vmatpush1.msra.mxu0 0.0
  %1693 = vmatprep.subr.mxu0 0.0
  %1694 = vmatpush1.msra.mxu0 0.0
  %1695 = vmatprep.subr.mxu0 0.0
  %1696 = vmatpush1.msra.mxu0 0.0
  %1697 = vmatprep.subr.mxu0 0.0
  %1698 = vmatpush1.msra.mxu0 0.0
  %1699 = vmatprep.subr.mxu0 0.0
  %1700 = vmatpush1.msra.mxu0 0.0
  %1701 = vmatprep.subr.mxu0 0.0
  %1702 = vmatpush1.msra.mxu0 0.0
  %1703 = vmatprep.subr.mxu0 0.0
  %1704 = vmatpush1.msra.mxu0 0.0
  %1705 = vmatprep.subr.mxu0 0.0
  %1706 = vmatpush1.msra.mxu0 0.0
  %1707 = vmatprep.subr.mxu0 0.0
  %1708 = vmatpush1.msra.mxu0 0.0
  %1709 = vmatprep.subr.mxu0 0.0
  %1710 = vmatpush1.msra.mxu0 0.0
  %1711 = vmatprep.subr.mxu0 0.0
  %1712 = vmatpush1.msra.mxu0 0.0
  %1713 = vmatprep.subr.mxu0 0.0
  %1714 = vmatpush1.msra.mxu0 0.0
  %1715 = vmatprep.subr.mxu0 0.0
  %1716 = vmatpush1.msra.mxu0 0.0
  %1717 = vmatprep.subr.mxu0 0.0
  %1718 = vmatpush1.msra.mxu0 0.0
  %1719 = vmatprep.subr.mxu0 0.0
  %1720 = vmatpush1.msra.mxu0 0.0
  %1721 = vmatprep.subr.mxu0 0.0
  %1722 = vmatpush1.msra.mxu0 0.0
  %1723 = vmatprep.subr.mxu0 0.0
  %1724 = vmatpush1.msra.mxu0 0.0
  %1725 = vmatprep.subr.mxu0 0.0
  %1726 = vmatpush1.msra.mxu0 0.0
  %1727 = vmatprep.mubr.f32.mxu0 0.0
  %1728 = vmatmul.mubr.f32.gmra.mrb[0].mxu0 %v1590
  %v1729 = vpop.f32.mrb[0].mxu0
  %v1730 = vadd.f32 %v1586, %v1729
  %v1731 = vpop.f32.mrb[0].mxu0
  %v1732 = vadd.f32 %v1586, %v1731
  %1733 = vdwg.mxu0
  %s1734 = scalar_lea.vmem %s2, 8
  %v1735 = vld [vmem:[%s1734] sm:$0xff]
  %v1737 = vsel %vm1588, %v1735, 0
  %1739 = vmatprep.subr.mxu0 %v1578
  %1740 = vmatpush1.msra.mxu0 %v1577
  %1741 = vmatprep.subr.mxu0 0.0
  %1742 = vmatpush1.msra.mxu0 0.0
  %1743 = vmatprep.subr.mxu0 0.0
  %1744 = vmatpush1.msra.mxu0 0.0
  %1745 = vmatprep.subr.mxu0 0.0
  %1746 = vmatpush1.msra.mxu0 0.0
  %1747 = vmatprep.subr.mxu0 0.0
  %1748 = vmatpush1.msra.mxu0 0.0
  %1749 = vmatprep.subr.mxu0 0.0
  %1750 = vmatpush1.msra.mxu0 0.0
  %1751 = vmatprep.subr.mxu0 0.0
  %1752 = vmatpush1.msra.mxu0 0.0
  %1753 = vmatprep.subr.mxu0 0.0
  %1754 = vmatpush1.msra.mxu0 0.0
  %1755 = vmatprep.subr.mxu0 0.0
  %1756 = vmatpush1.msra.mxu0 0.0
  %1757 = vmatprep.subr.mxu0 0.0
  %1758 = vmatpush1.msra.mxu0 0.0
  %1759 = vmatprep.subr.mxu0 0.0
  %1760 = vmatpush1.msra.mxu0 0.0
  %1761 = vmatprep.subr.mxu0 0.0
  %1762 = vmatpush1.msra.mxu0 0.0
  %1763 = vmatprep.subr.mxu0 0.0
  %1764 = vmatpush1.msra.mxu0 0.0
  %1765 = vmatprep.subr.mxu0 0.0
  %1766 = vmatpush1.msra.mxu0 0.0
  %1767 = vmatprep.subr.mxu0 0.0
  %1768 = vmatpush1.msra.mxu0 0.0
  %1769 = vmatprep.subr.mxu0 0.0
  %1770 = vmatpush1.msra.mxu0 0.0
  %1771 = vmatprep.subr.mxu0 0.0
  %1772 = vmatpush1.msra.mxu0 0.0
  %1773 = vmatprep.subr.mxu0 0.0
  %1774 = vmatpush1.msra.mxu0 0.0
  %1775 = vmatprep.subr.mxu0 0.0
  %1776 = vmatpush1.msra.mxu0 0.0
  %1777 = vmatprep.subr.mxu0 0.0
  %1778 = vmatpush1.msra.mxu0 0.0
  %1779 = vmatprep.subr.mxu0 0.0
  %1780 = vmatpush1.msra.mxu0 0.0
  %1781 = vmatprep.subr.mxu0 0.0
  %1782 = vmatpush1.msra.mxu0 0.0
  %1783 = vmatprep.subr.mxu0 0.0
  %1784 = vmatpush1.msra.mxu0 0.0
  %1785 = vmatprep.subr.mxu0 0.0
  %1786 = vmatpush1.msra.mxu0 0.0
  %1787 = vmatprep.subr.mxu0 0.0
  %1788 = vmatpush1.msra.mxu0 0.0
  %1789 = vmatprep.subr.mxu0 0.0
  %1790 = vmatpush1.msra.mxu0 0.0
  %1791 = vmatprep.subr.mxu0 0.0
  %1792 = vmatpush1.msra.mxu0 0.0
  %1793 = vmatprep.subr.mxu0 0.0
  %1794 = vmatpush1.msra.mxu0 0.0
  %1795 = vmatprep.subr.mxu0 0.0
  %1796 = vmatpush1.msra.mxu0 0.0
  %1797 = vmatprep.subr.mxu0 0.0
  %1798 = vmatpush1.msra.mxu0 0.0
  %1799 = vmatprep.subr.mxu0 0.0
  %1800 = vmatpush1.msra.mxu0 0.0
  %1801 = vmatprep.subr.mxu0 0.0
  %1802 = vmatpush1.msra.mxu0 0.0
  %1803 = vmatprep.mubr.f32.mxu0 0.0
  %1804 = vmatmul.mubr.f32.gmra.mrb[0].mxu0 %v1737
  %v1805 = vpop.f32.mrb[0].mxu0
  %v1806 = vadd.f32 0.0, %v1805
  %v1807 = vpop.f32.mrb[0].mxu0
  %v1808 = vadd.f32 0.0, %v1807
  %1809 = vdwg.mxu0
  %1810 = vmatprep.subr.mxu0 %v1580
  %1811 = vmatpush1.msra.mxu0 %v1579
  %1812 = vmatprep.subr.mxu0 0.0
  %1813 = vmatpush1.msra.mxu0 0.0
  %1814 = vmatprep.subr.mxu0 0.0
  %1815 = vmatpush1.msra.mxu0 0.0
  %1816 = vmatprep.subr.mxu0 0.0
  %1817 = vmatpush1.msra.mxu0 0.0
  %1818 = vmatprep.subr.mxu0 0.0
  %1819 = vmatpush1.msra.mxu0 0.0
  %1820 = vmatprep.subr.mxu0 0.0
  %1821 = vmatpush1.msra.mxu0 0.0
  %1822 = vmatprep.subr.mxu0 0.0
  %1823 = vmatpush1.msra.mxu0 0.0
  %1824 = vmatprep.subr.mxu0 0.0
  %1825 = vmatpush1.msra.mxu0 0.0
  %1826 = vmatprep.subr.mxu0 0.0
  %1827 = vmatpush1.msra.mxu0 0.0
  %1828 = vmatprep.subr.mxu0 0.0
  %1829 = vmatpush1.msra.mxu0 0.0
  %1830 = vmatprep.subr.mxu0 0.0
  %1831 = vmatpush1.msra.mxu0 0.0
  %1832 = vmatprep.subr.mxu0 0.0
  %1833 = vmatpush1.msra.mxu0 0.0
  %1834 = vmatprep.subr.mxu0 0.0
  %1835 = vmatpush1.msra.mxu0 0.0
  %1836 = vmatprep.subr.mxu0 0.0
  %1837 = vmatpush1.msra.mxu0 0.0
  %1838 = vmatprep.subr.mxu0 0.0
  %1839 = vmatpush1.msra.mxu0 0.0
  %1840 = vmatprep.subr.mxu0 0.0
  %1841 = vmatpush1.msra.mxu0 0.0
  %1842 = vmatprep.subr.mxu0 0.0
  %1843 = vmatpush1.msra.mxu0 0.0
  %1844 = vmatprep.subr.mxu0 0.0
  %1845 = vmatpush1.msra.mxu0 0.0
  %1846 = vmatprep.subr.mxu0 0.0
  %1847 = vmatpush1.msra.mxu0 0.0
  %1848 = vmatprep.subr.mxu0 0.0
  %1849 = vmatpush1.msra.mxu0 0.0
  %1850 = vmatprep.subr.mxu0 0.0
  %1851 = vmatpush1.msra.mxu0 0.0
  %1852 = vmatprep.subr.mxu0 0.0
  %1853 = vmatpush1.msra.mxu0 0.0
  %1854 = vmatprep.subr.mxu0 0.0
  %1855 = vmatpush1.msra.mxu0 0.0
  %1856 = vmatprep.subr.mxu0 0.0
  %1857 = vmatpush1.msra.mxu0 0.0
  %1858 = vmatprep.subr.mxu0 0.0
  %1859 = vmatpush1.msra.mxu0 0.0
  %1860 = vmatprep.subr.mxu0 0.0
  %1861 = vmatpush1.msra.mxu0 0.0
  %1862 = vmatprep.subr.mxu0 0.0
  %1863 = vmatpush1.msra.mxu0 0.0
  %1864 = vmatprep.subr.mxu0 0.0
  %1865 = vmatpush1.msra.mxu0 0.0
  %1866 = vmatprep.subr.mxu0 0.0
  %1867 = vmatpush1.msra.mxu0 0.0
  %1868 = vmatprep.subr.mxu0 0.0
  %1869 = vmatpush1.msra.mxu0 0.0
  %1870 = vmatprep.subr.mxu0 0.0
  %1871 = vmatpush1.msra.mxu0 0.0
  %1872 = vmatprep.subr.mxu0 0.0
  %1873 = vmatpush1.msra.mxu0 0.0
  %1874 = vmatprep.mubr.f32.mxu0 0.0
  %1875 = vmatmul.mubr.f32.gmra.mrb[0].mxu0 %v1737
  %v1876 = vpop.f32.mrb[0].mxu0
  %v1877 = vadd.f32 0.0, %v1876
  %v1878 = vpop.f32.mrb[0].mxu0
  %v1879 = vadd.f32 0.0, %v1878
  %1880 = vdwg.mxu0
  %1881 = vrot.lane.b32.xlu0 %v1806, 127
  %v1882 = vpop.permute.xlu0 %1881
  %1883 = vrot.lane.b32.xlu0 %v1808, 127
  %v1884 = vpop.permute.xlu0 %1883
  %1885 = vrot.lane.b32.xlu0 %v1877, 127
  %v1886 = vpop.permute.xlu0 %1885
  %1887 = vrot.lane.b32.xlu0 %v1879, 127
  %v1888 = vpop.permute.xlu0 %1887
  %v1889 = vsel %vm199, %v1886, %v1888
  %v1890 = vsel %vm199, %v1884, %v1886
  %v1891 = vsel %vm199, %v1882, %v1884
  %v1892 = vsel %vm199, %v1888, %v1882
  %v1893 = vadd.f32 %v1659, %v1891
  %v1894 = vadd.f32 %v1661, %v1890
  %v1895 = vadd.f32 %v1730, %v1889
  %v1896 = vadd.f32 %v1732, %v1892
  %s1897 = scalar_lea.vmem %s2, 16
  %v1898 = vld [vmem:[%s1897] sm:$0xff]
  %v1900 = vsel %vm1588, %v1898, 0
  %1902 = vmatprep.subr.mxu0 %v1578
  %1903 = vmatpush1.msra.mxu0 %v1577
  %1904 = vmatprep.subr.mxu0 0.0
  %1905 = vmatpush1.msra.mxu0 0.0
  %1906 = vmatprep.subr.mxu0 0.0
  %1907 = vmatpush1.msra.mxu0 0.0
  %1908 = vmatprep.subr.mxu0 0.0
  %1909 = vmatpush1.msra.mxu0 0.0
  %1910 = vmatprep.subr.mxu0 0.0
  %1911 = vmatpush1.msra.mxu0 0.0
  %1912 = vmatprep.subr.mxu0 0.0
  %1913 = vmatpush1.msra.mxu0 0.0
  %1914 = vmatprep.subr.mxu0 0.0
  %1915 = vmatpush1.msra.mxu0 0.0
  %1916 = vmatprep.subr.mxu0 0.0
  %1917 = vmatpush1.msra.mxu0 0.0
  %1918 = vmatprep.subr.mxu0 0.0
  %1919 = vmatpush1.msra.mxu0 0.0
  %1920 = vmatprep.subr.mxu0 0.0
  %1921 = vmatpush1.msra.mxu0 0.0
  %1922 = vmatprep.subr.mxu0 0.0
  %1923 = vmatpush1.msra.mxu0 0.0
  %1924 = vmatprep.subr.mxu0 0.0
  %1925 = vmatpush1.msra.mxu0 0.0
  %1926 = vmatprep.subr.mxu0 0.0
  %1927 = vmatpush1.msra.mxu0 0.0
  %1928 = vmatprep.subr.mxu0 0.0
  %1929 = vmatpush1.msra.mxu0 0.0
  %1930 = vmatprep.subr.mxu0 0.0
  %1931 = vmatpush1.msra.mxu0 0.0
  %1932 = vmatprep.subr.mxu0 0.0
  %1933 = vmatpush1.msra.mxu0 0.0
  %1934 = vmatprep.subr.mxu0 0.0
  %1935 = vmatpush1.msra.mxu0 0.0
  %1936 = vmatprep.subr.mxu0 0.0
  %1937 = vmatpush1.msra.mxu0 0.0
  %1938 = vmatprep.subr.mxu0 0.0
  %1939 = vmatpush1.msra.mxu0 0.0
  %1940 = vmatprep.subr.mxu0 0.0
  %1941 = vmatpush1.msra.mxu0 0.0
  %1942 = vmatprep.subr.mxu0 0.0
  %1943 = vmatpush1.msra.mxu0 0.0
  %1944 = vmatprep.subr.mxu0 0.0
  %1945 = vmatpush1.msra.mxu0 0.0
  %1946 = vmatprep.subr.mxu0 0.0
  %1947 = vmatpush1.msra.mxu0 0.0
  %1948 = vmatprep.subr.mxu0 0.0
  %1949 = vmatpush1.msra.mxu0 0.0
  %1950 = vmatprep.subr.mxu0 0.0
  %1951 = vmatpush1.msra.mxu0 0.0
  %1952 = vmatprep.subr.mxu0 0.0
  %1953 = vmatpush1.msra.mxu0 0.0
  %1954 = vmatprep.subr.mxu0 0.0
  %1955 = vmatpush1.msra.mxu0 0.0
  %1956 = vmatprep.subr.mxu0 0.0
  %1957 = vmatpush1.msra.mxu0 0.0
  %1958 = vmatprep.subr.mxu0 0.0
  %1959 = vmatpush1.msra.mxu0 0.0
  %1960 = vmatprep.subr.mxu0 0.0
  %1961 = vmatpush1.msra.mxu0 0.0
  %1962 = vmatprep.subr.mxu0 0.0
  %1963 = vmatpush1.msra.mxu0 0.0
  %1964 = vmatprep.subr.mxu0 0.0
  %1965 = vmatpush1.msra.mxu0 0.0
  %1966 = vmatprep.mubr.f32.mxu0 0.0
  %1967 = vmatmul.mubr.f32.gmra.mrb[0].mxu0 %v1900
  %v1968 = vpop.f32.mrb[0].mxu0
  %v1969 = vadd.f32 0.0, %v1968
  %v1970 = vpop.f32.mrb[0].mxu0
  %v1971 = vadd.f32 0.0, %v1970
  %1972 = vdwg.mxu0
  %1973 = vmatprep.subr.mxu0 %v1580
  %1974 = vmatpush1.msra.mxu0 %v1579
  %1975 = vmatprep.subr.mxu0 0.0
  %1976 = vmatpush1.msra.mxu0 0.0
  %1977 = vmatprep.subr.mxu0 0.0
  %1978 = vmatpush1.msra.mxu0 0.0
  %1979 = vmatprep.subr.mxu0 0.0
  %1980 = vmatpush1.msra.mxu0 0.0
  %1981 = vmatprep.subr.mxu0 0.0
  %1982 = vmatpush1.msra.mxu0 0.0
  %1983 = vmatprep.subr.mxu0 0.0
  %1984 = vmatpush1.msra.mxu0 0.0
  %1985 = vmatprep.subr.mxu0 0.0
  %1986 = vmatpush1.msra.mxu0 0.0
  %1987 = vmatprep.subr.mxu0 0.0
  %1988 = vmatpush1.msra.mxu0 0.0
  %1989 = vmatprep.subr.mxu0 0.0
  %1990 = vmatpush1.msra.mxu0 0.0
  %1991 = vmatprep.subr.mxu0 0.0
  %1992 = vmatpush1.msra.mxu0 0.0
  %1993 = vmatprep.subr.mxu0 0.0
  %1994 = vmatpush1.msra.mxu0 0.0
  %1995 = vmatprep.subr.mxu0 0.0
  %1996 = vmatpush1.msra.mxu0 0.0
  %1997 = vmatprep.subr.mxu0 0.0
  %1998 = vmatpush1.msra.mxu0 0.0
  %1999 = vmatprep.subr.mxu0 0.0
  %2000 = vmatpush1.msra.mxu0 0.0
  %2001 = vmatprep.subr.mxu0 0.0
  %2002 = vmatpush1.msra.mxu0 0.0
  %2003 = vmatprep.subr.mxu0 0.0
  %2004 = vmatpush1.msra.mxu0 0.0
  %2005 = vmatprep.subr.mxu0 0.0
  %2006 = vmatpush1.msra.mxu0 0.0
  %2007 = vmatprep.subr.mxu0 0.0
  %2008 = vmatpush1.msra.mxu0 0.0
  %2009 = vmatprep.subr.mxu0 0.0
  %2010 = vmatpush1.msra.mxu0 0.0
  %2011 = vmatprep.subr.mxu0 0.0
  %2012 = vmatpush1.msra.mxu0 0.0
  %2013 = vmatprep.subr.mxu0 0.0
  %2014 = vmatpush1.msra.mxu0 0.0
  %2015 = vmatprep.subr.mxu0 0.0
  %2016 = vmatpush1.msra.mxu0 0.0
  %2017 = vmatprep.subr.mxu0 0.0
  %2018 = vmatpush1.msra.mxu0 0.0
  %2019 = vmatprep.subr.mxu0 0.0
  %2020 = vmatpush1.msra.mxu0 0.0
  %2021 = vmatprep.subr.mxu0 0.0
  %2022 = vmatpush1.msra.mxu0 0.0
  %2023 = vmatprep.subr.mxu0 0.0
  %2024 = vmatpush1.msra.mxu0 0.0
  %2025 = vmatprep.subr.mxu0 0.0
  %2026 = vmatpush1.msra.mxu0 0.0
  %2027 = vmatprep.subr.mxu0 0.0
  %2028 = vmatpush1.msra.mxu0 0.0
  %2029 = vmatprep.subr.mxu0 0.0
  %2030 = vmatpush1.msra.mxu0 0.0
  %2031 = vmatprep.subr.mxu0 0.0
  %2032 = vmatpush1.msra.mxu0 0.0
  %2033 = vmatprep.subr.mxu0 0.0
  %2034 = vmatpush1.msra.mxu0 0.0
  %2035 = vmatprep.subr.mxu0 0.0
  %2036 = vmatpush1.msra.mxu0 0.0
  %2037 = vmatprep.mubr.f32.mxu0 0.0
  %2038 = vmatmul.mubr.f32.gmra.mrb[0].mxu0 %v1900
  %v2039 = vpop.f32.mrb[0].mxu0
  %v2040 = vadd.f32 0.0, %v2039
  %v2041 = vpop.f32.mrb[0].mxu0
  %v2042 = vadd.f32 0.0, %v2041
  %2043 = vdwg.mxu0
  %2044 = vrot.lane.b32.xlu0 %v1969, 126
  %v2045 = vpop.permute.xlu0 %2044
  %2046 = vrot.lane.b32.xlu0 %v1971, 126
  %v2047 = vpop.permute.xlu0 %2046
  %2048 = vrot.lane.b32.xlu0 %v2040, 126
  %v2049 = vpop.permute.xlu0 %2048
  %2050 = vrot.lane.b32.xlu0 %v2042, 126
  %v2051 = vpop.permute.xlu0 %2050
  %v2052 = vsel %vm504, %v2049, %v2051
  %v2053 = vsel %vm504, %v2047, %v2049
  %v2054 = vsel %vm504, %v2045, %v2047
  %v2055 = vsel %vm504, %v2051, %v2045
  %v2056 = vadd.f32 %v1893, %v2054
  %v2057 = vadd.f32 %v1894, %v2053
  %v2058 = vadd.f32 %v1895, %v2052
  %v2059 = vadd.f32 %v1896, %v2055
  %s2060 = scalar_lea.vmem %s2, 24
  %v2061 = vld [vmem:[%s2060] sm:$0xff]
  %v2063 = vsel %vm1588, %v2061, 0
  %2065 = vmatprep.subr.mxu0 %v1578
  %2066 = vmatpush1.msra.mxu0 %v1577
  %2067 = vmatprep.subr.mxu0 0.0
  %2068 = vmatpush1.msra.mxu0 0.0
  %2069 = vmatprep.subr.mxu0 0.0
  %2070 = vmatpush1.msra.mxu0 0.0
  %2071 = vmatprep.subr.mxu0 0.0
  %2072 = vmatpush1.msra.mxu0 0.0
  %2073 = vmatprep.subr.mxu0 0.0
  %2074 = vmatpush1.msra.mxu0 0.0
  %2075 = vmatprep.subr.mxu0 0.0
  %2076 = vmatpush1.msra.mxu0 0.0
  %2077 = vmatprep.subr.mxu0 0.0
  %2078 = vmatpush1.msra.mxu0 0.0
  %2079 = vmatprep.subr.mxu0 0.0
  %2080 = vmatpush1.msra.mxu0 0.0
  %2081 = vmatprep.subr.mxu0 0.0
  %2082 = vmatpush1.msra.mxu0 0.0
  %2083 = vmatprep.subr.mxu0 0.0
  %2084 = vmatpush1.msra.mxu0 0.0
  %2085 = vmatprep.subr.mxu0 0.0
  %2086 = vmatpush1.msra.mxu0 0.0
  %2087 = vmatprep.subr.mxu0 0.0
  %2088 = vmatpush1.msra.mxu0 0.0
  %2089 = vmatprep.subr.mxu0 0.0
  %2090 = vmatpush1.msra.mxu0 0.0
  %2091 = vmatprep.subr.mxu0 0.0
  %2092 = vmatpush1.msra.mxu0 0.0
  %2093 = vmatprep.subr.mxu0 0.0
  %2094 = vmatpush1.msra.mxu0 0.0
  %2095 = vmatprep.subr.mxu0 0.0
  %2096 = vmatpush1.msra.mxu0 0.0
  %2097 = vmatprep.subr.mxu0 0.0
  %2098 = vmatpush1.msra.mxu0 0.0
  %2099 = vmatprep.subr.mxu0 0.0
  %2100 = vmatpush1.msra.mxu0 0.0
  %2101 = vmatprep.subr.mxu0 0.0
  %2102 = vmatpush1.msra.mxu0 0.0
  %2103 = vmatprep.subr.mxu0 0.0
  %2104 = vmatpush1.msra.mxu0 0.0
  %2105 = vmatprep.subr.mxu0 0.0
  %2106 = vmatpush1.msra.mxu0 0.0
  %2107 = vmatprep.subr.mxu0 0.0
  %2108 = vmatpush1.msra.mxu0 0.0
  %2109 = vmatprep.subr.mxu0 0.0
  %2110 = vmatpush1.msra.mxu0 0.0
  %2111 = vmatprep.subr.mxu0 0.0
  %2112 = vmatpush1.msra.mxu0 0.0
  %2113 = vmatprep.subr.mxu0 0.0
  %2114 = vmatpush1.msra.mxu0 0.0
  %2115 = vmatprep.subr.mxu0 0.0
  %2116 = vmatpush1.msra.mxu0 0.0
  %2117 = vmatprep.subr.mxu0 0.0
  %2118 = vmatpush1.msra.mxu0 0.0
  %2119 = vmatprep.subr.mxu0 0.0
  %2120 = vmatpush1.msra.mxu0 0.0
  %2121 = vmatprep.subr.mxu0 0.0
  %2122 = vmatpush1.msra.mxu0 0.0
  %2123 = vmatprep.subr.mxu0 0.0
  %2124 = vmatpush1.msra.mxu0 0.0
  %2125 = vmatprep.subr.mxu0 0.0
  %2126 = vmatpush1.msra.mxu0 0.0
  %2127 = vmatprep.subr.mxu0 0.0
  %2128 = vmatpush1.msra.mxu0 0.0
  %2129 = vmatprep.mubr.f32.mxu0 0.0
  %2130 = vmatmul.mubr.f32.gmra.mrb[0].mxu0 %v2063
  %v2131 = vpop.f32.mrb[0].mxu0
  %v2132 = vadd.f32 0.0, %v2131
  %v2133 = vpop.f32.mrb[0].mxu0
  %v2134 = vadd.f32 0.0, %v2133
  %2135 = vdwg.mxu0
  %2136 = vmatprep.subr.mxu0 %v1580
  %2137 = vmatpush1.msra.mxu0 %v1579
  %2138 = vmatprep.subr.mxu0 0.0
  %2139 = vmatpush1.msra.mxu0 0.0
  %2140 = vmatprep.subr.mxu0 0.0
  %2141 = vmatpush1.msra.mxu0 0.0
  %2142 = vmatprep.subr.mxu0 0.0
  %2143 = vmatpush1.msra.mxu0 0.0
  %2144 = vmatprep.subr.mxu0 0.0
  %2145 = vmatpush1.msra.mxu0 0.0
  %2146 = vmatprep.subr.mxu0 0.0
  %2147 = vmatpush1.msra.mxu0 0.0
  %2148 = vmatprep.subr.mxu0 0.0
  %2149 = vmatpush1.msra.mxu0 0.0
  %2150 = vmatprep.subr.mxu0 0.0
  %2151 = vmatpush1.msra.mxu0 0.0
  %2152 = vmatprep.subr.mxu0 0.0
  %2153 = vmatpush1.msra.mxu0 0.0
  %2154 = vmatprep.subr.mxu0 0.0
  %2155 = vmatpush1.msra.mxu0 0.0
  %2156 = vmatprep.subr.mxu0 0.0
  %2157 = vmatpush1.msra.mxu0 0.0
  %2158 = vmatprep.subr.mxu0 0.0
  %2159 = vmatpush1.msra.mxu0 0.0
  %2160 = vmatprep.subr.mxu0 0.0
  %2161 = vmatpush1.msra.mxu0 0.0
  %2162 = vmatprep.subr.mxu0 0.0
  %2163 = vmatpush1.msra.mxu0 0.0
  %2164 = vmatprep.subr.mxu0 0.0
  %2165 = vmatpush1.msra.mxu0 0.0
  %2166 = vmatprep.subr.mxu0 0.0
  %2167 = vmatpush1.msra.mxu0 0.0
  %2168 = vmatprep.subr.mxu0 0.0
  %2169 = vmatpush1.msra.mxu0 0.0
  %2170 = vmatprep.subr.mxu0 0.0
  %2171 = vmatpush1.msra.mxu0 0.0
  %2172 = vmatprep.subr.mxu0 0.0
  %2173 = vmatpush1.msra.mxu0 0.0
  %2174 = vmatprep.subr.mxu0 0.0
  %2175 = vmatpush1.msra.mxu0 0.0
  %2176 = vmatprep.subr.mxu0 0.0
  %2177 = vmatpush1.msra.mxu0 0.0
  %2178 = vmatprep.subr.mxu0 0.0
  %2179 = vmatpush1.msra.mxu0 0.0
  %2180 = vmatprep.subr.mxu0 0.0
  %2181 = vmatpush1.msra.mxu0 0.0
  %2182 = vmatprep.subr.mxu0 0.0
  %2183 = vmatpush1.msra.mxu0 0.0
  %2184 = vmatprep.subr.mxu0 0.0
  %2185 = vmatpush1.msra.mxu0 0.0
  %2186 = vmatprep.subr.mxu0 0.0
  %2187 = vmatpush1.msra.mxu0 0.0
  %2188 = vmatprep.subr.mxu0 0.0
  %2189 = vmatpush1.msra.mxu0 0.0
  %2190 = vmatprep.subr.mxu0 0.0
  %2191 = vmatpush1.msra.mxu0 0.0
  %2192 = vmatprep.subr.mxu0 0.0
  %2193 = vmatpush1.msra.mxu0 0.0
  %2194 = vmatprep.subr.mxu0 0.0
  %2195 = vmatpush1.msra.mxu0 0.0
  %2196 = vmatprep.subr.mxu0 0.0
  %2197 = vmatpush1.msra.mxu0 0.0
  %2198 = vmatprep.subr.mxu0 0.0
  %2199 = vmatpush1.msra.mxu0 0.0
  %2200 = vmatprep.mubr.f32.mxu0 0.0
  %2201 = vmatmul.mubr.f32.gmra.mrb[0].mxu0 %v2063
  %v2202 = vpop.f32.mrb[0].mxu0
  %v2203 = vadd.f32 0.0, %v2202
  %v2204 = vpop.f32.mrb[0].mxu0
  %v2205 = vadd.f32 0.0, %v2204
  %2206 = vdwg.mxu0
  %2207 = vrot.lane.b32.xlu0 %v2132, 112
  %v2208 = vpop.permute.xlu0 %2207
  %2209 = vrot.lane.b32.xlu0 %v2134, 112
  %v2210 = vpop.permute.xlu0 %2209
  %2211 = vrot.lane.b32.xlu0 %v2203, 112
  %v2212 = vpop.permute.xlu0 %2211
  %2213 = vrot.lane.b32.xlu0 %v2205, 112
  %v2214 = vpop.permute.xlu0 %2213
  %v2215 = vsel %vm668, %v2212, %v2214
  %v2216 = vsel %vm668, %v2210, %v2212
  %v2217 = vsel %vm668, %v2208, %v2210
  %v2218 = vsel %vm668, %v2214, %v2208
  %v2219 = vadd.f32 %v2056, %v2217
  %v2220 = vadd.f32 %v2057, %v2216
  %v2221 = vadd.f32 %v2058, %v2215
  %v2222 = vadd.f32 %v2059, %v2218
  %s2223 = scalar_lea.vmem %s2, 32
  %v2224 = vld [vmem:[%s2223] sm:$0xff]
  %v2226 = vsel %vm1588, %v2224, 0
  %2228 = vmatprep.subr.mxu0 %v1578
  %2229 = vmatpush1.msra.mxu0 %v1577
  %2230 = vmatprep.subr.mxu0 0.0
  %2231 = vmatpush1.msra.mxu0 0.0
  %2232 = vmatprep.subr.mxu0 0.0
  %2233 = vmatpush1.msra.mxu0 0.0
  %2234 = vmatprep.subr.mxu0 0.0
  %2235 = vmatpush1.msra.mxu0 0.0
  %2236 = vmatprep.subr.mxu0 0.0
  %2237 = vmatpush1.msra.mxu0 0.0
  %2238 = vmatprep.subr.mxu0 0.0
  %2239 = vmatpush1.msra.mxu0 0.0
  %2240 = vmatprep.subr.mxu0 0.0
  %2241 = vmatpush1.msra.mxu0 0.0
  %2242 = vmatprep.subr.mxu0 0.0
  %2243 = vmatpush1.msra.mxu0 0.0
  %2244 = vmatprep.subr.mxu0 0.0
  %2245 = vmatpush1.msra.mxu0 0.0
  %2246 = vmatprep.subr.mxu0 0.0
  %2247 = vmatpush1.msra.mxu0 0.0
  %2248 = vmatprep.subr.mxu0 0.0
  %2249 = vmatpush1.msra.mxu0 0.0
  %2250 = vmatprep.subr.mxu0 0.0
  %2251 = vmatpush1.msra.mxu0 0.0
  %2252 = vmatprep.subr.mxu0 0.0
  %2253 = vmatpush1.msra.mxu0 0.0
  %2254 = vmatprep.subr.mxu0 0.0
  %2255 = vmatpush1.msra.mxu0 0.0
  %2256 = vmatprep.subr.mxu0 0.0
  %2257 = vmatpush1.msra.mxu0 0.0
  %2258 = vmatprep.subr.mxu0 0.0
  %2259 = vmatpush1.msra.mxu0 0.0
  %2260 = vmatprep.subr.mxu0 0.0
  %2261 = vmatpush1.msra.mxu0 0.0
  %2262 = vmatprep.subr.mxu0 0.0
  %2263 = vmatpush1.msra.mxu0 0.0
  %2264 = vmatprep.subr.mxu0 0.0
  %2265 = vmatpush1.msra.mxu0 0.0
  %2266 = vmatprep.subr.mxu0 0.0
  %2267 = vmatpush1.msra.mxu0 0.0
  %2268 = vmatprep.subr.mxu0 0.0
  %2269 = vmatpush1.msra.mxu0 0.0
  %2270 = vmatprep.subr.mxu0 0.0
  %2271 = vmatpush1.msra.mxu0 0.0
  %2272 = vmatprep.subr.mxu0 0.0
  %2273 = vmatpush1.msra.mxu0 0.0
  %2274 = vmatprep.subr.mxu0 0.0
  %2275 = vmatpush1.msra.mxu0 0.0
  %2276 = vmatprep.subr.mxu0 0.0
  %2277 = vmatpush1.msra.mxu0 0.0
  %2278 = vmatprep.subr.mxu0 0.0
  %2279 = vmatpush1.msra.mxu0 0.0
  %2280 = vmatprep.subr.mxu0 0.0
  %2281 = vmatpush1.msra.mxu0 0.0
  %2282 = vmatprep.subr.mxu0 0.0
  %2283 = vmatpush1.msra.mxu0 0.0
  %2284 = vmatprep.subr.mxu0 0.0
  %2285 = vmatpush1.msra.mxu0 0.0
  %2286 = vmatprep.subr.mxu0 0.0
  %2287 = vmatpush1.msra.mxu0 0.0
  %2288 = vmatprep.subr.mxu0 0.0
  %2289 = vmatpush1.msra.mxu0 0.0
  %2290 = vmatprep.subr.mxu0 0.0
  %2291 = vmatpush1.msra.mxu0 0.0
  %2292 = vmatprep.mubr.f32.mxu0 0.0
  %2293 = vmatmul.mubr.f32.gmra.mrb[0].mxu0 %v2226
  %v2294 = vpop.f32.mrb[0].mxu0
  %v2295 = vadd.f32 0.0, %v2294
  %v2296 = vpop.f32.mrb[0].mxu0
  %v2297 = vadd.f32 0.0, %v2296
  %2298 = vdwg.mxu0
  %2299 = vmatprep.subr.mxu0 %v1580
  %2300 = vmatpush1.msra.mxu0 %v1579
  %2301 = vmatprep.subr.mxu0 0.0
  %2302 = vmatpush1.msra.mxu0 0.0
  %2303 = vmatprep.subr.mxu0 0.0
  %2304 = vmatpush1.msra.mxu0 0.0
  %2305 = vmatprep.subr.mxu0 0.0
  %2306 = vmatpush1.msra.mxu0 0.0
  %2307 = vmatprep.subr.mxu0 0.0
  %2308 = vmatpush1.msra.mxu0 0.0
  %2309 = vmatprep.subr.mxu0 0.0
  %2310 = vmatpush1.msra.mxu0 0.0
  %2311 = vmatprep.subr.mxu0 0.0
  %2312 = vmatpush1.msra.mxu0 0.0
  %2313 = vmatprep.subr.mxu0 0.0
  %2314 = vmatpush1.msra.mxu0 0.0
  %2315 = vmatprep.subr.mxu0 0.0
  %2316 = vmatpush1.msra.mxu0 0.0
  %2317 = vmatprep.subr.mxu0 0.0
  %2318 = vmatpush1.msra.mxu0 0.0
  %2319 = vmatprep.subr.mxu0 0.0
  %2320 = vmatpush1.msra.mxu0 0.0
  %2321 = vmatprep.subr.mxu0 0.0
  %2322 = vmatpush1.msra.mxu0 0.0
  %2323 = vmatprep.subr.mxu0 0.0
  %2324 = vmatpush1.msra.mxu0 0.0
  %2325 = vmatprep.subr.mxu0 0.0
  %2326 = vmatpush1.msra.mxu0 0.0
  %2327 = vmatprep.subr.mxu0 0.0
  %2328 = vmatpush1.msra.mxu0 0.0
  %2329 = vmatprep.subr.mxu0 0.0
  %2330 = vmatpush1.msra.mxu0 0.0
  %2331 = vmatprep.subr.mxu0 0.0
  %2332 = vmatpush1.msra.mxu0 0.0
  %2333 = vmatprep.subr.mxu0 0.0
  %2334 = vmatpush1.msra.mxu0 0.0
  %2335 = vmatprep.subr.mxu0 0.0
  %2336 = vmatpush1.msra.mxu0 0.0
  %2337 = vmatprep.subr.mxu0 0.0
  %2338 = vmatpush1.msra.mxu0 0.0
  %2339 = vmatprep.subr.mxu0 0.0
  %2340 = vmatpush1.msra.mxu0 0.0
  %2341 = vmatprep.subr.mxu0 0.0
  %2342 = vmatpush1.msra.mxu0 0.0
  %2343 = vmatprep.subr.mxu0 0.0
  %2344 = vmatpush1.msra.mxu0 0.0
  %2345 = vmatprep.subr.mxu0 0.0
  %2346 = vmatpush1.msra.mxu0 0.0
  %2347 = vmatprep.subr.mxu0 0.0
  %2348 = vmatpush1.msra.mxu0 0.0
  %2349 = vmatprep.subr.mxu0 0.0
  %2350 = vmatpush1.msra.mxu0 0.0
  %2351 = vmatprep.subr.mxu0 0.0
  %2352 = vmatpush1.msra.mxu0 0.0
  %2353 = vmatprep.subr.mxu0 0.0
  %2354 = vmatpush1.msra.mxu0 0.0
  %2355 = vmatprep.subr.mxu0 0.0
  %2356 = vmatpush1.msra.mxu0 0.0
  %2357 = vmatprep.subr.mxu0 0.0
  %2358 = vmatpush1.msra.mxu0 0.0
  %2359 = vmatprep.subr.mxu0 0.0
  %2360 = vmatpush1.msra.mxu0 0.0
  %2361 = vmatprep.subr.mxu0 0.0
  %2362 = vmatpush1.msra.mxu0 0.0
  %2363 = vmatprep.mubr.f32.mxu0 0.0
  %2364 = vmatmul.mubr.f32.gmra.mrb[0].mxu0 %v2226
  %v2365 = vpop.f32.mrb[0].mxu0
  %v2366 = vadd.f32 0.0, %v2365
  %v2367 = vpop.f32.mrb[0].mxu0
  %v2368 = vadd.f32 0.0, %v2367
  %2369 = vdwg.mxu0
  %2370 = vrot.lane.b32.xlu0 %v2295, 111
  %v2371 = vpop.permute.xlu0 %2370
  %2372 = vrot.lane.b32.xlu0 %v2297, 111
  %v2373 = vpop.permute.xlu0 %2372
  %2374 = vrot.lane.b32.xlu0 %v2366, 111
  %v2375 = vpop.permute.xlu0 %2374
  %2376 = vrot.lane.b32.xlu0 %v2368, 111
  %v2377 = vpop.permute.xlu0 %2376
  %v2378 = vsel %vm832, %v2375, %v2377
  %v2379 = vsel %vm832, %v2373, %v2375
  %v2380 = vsel %vm832, %v2371, %v2373
  %v2381 = vsel %vm832, %v2377, %v2371
  %v2382 = vadd.f32 %v2219, %v2380
  %v2383 = vadd.f32 %v2220, %v2379
  %v2384 = vadd.f32 %v2221, %v2378
  %v2385 = vadd.f32 %v2222, %v2381
  %s2386 = scalar_lea.vmem %s2, 40
  %v2387 = vld [vmem:[%s2386] sm:$0xff]
  %v2389 = vsel %vm1588, %v2387, 0
  %2391 = vmatprep.subr.mxu0 %v1578
  %2392 = vmatpush1.msra.mxu0 %v1577
  %2393 = vmatprep.subr.mxu0 0.0
  %2394 = vmatpush1.msra.mxu0 0.0
  %2395 = vmatprep.subr.mxu0 0.0
  %2396 = vmatpush1.msra.mxu0 0.0
  %2397 = vmatprep.subr.mxu0 0.0
  %2398 = vmatpush1.msra.mxu0 0.0
  %2399 = vmatprep.subr.mxu0 0.0
  %2400 = vmatpush1.msra.mxu0 0.0
  %2401 = vmatprep.subr.mxu0 0.0
  %2402 = vmatpush1.msra.mxu0 0.0
  %2403 = vmatprep.subr.mxu0 0.0
  %2404 = vmatpush1.msra.mxu0 0.0
  %2405 = vmatprep.subr.mxu0 0.0
  %2406 = vmatpush1.msra.mxu0 0.0
  %2407 = vmatprep.subr.mxu0 0.0
  %2408 = vmatpush1.msra.mxu0 0.0
  %2409 = vmatprep.subr.mxu0 0.0
  %2410 = vmatpush1.msra.mxu0 0.0
  %2411 = vmatprep.subr.mxu0 0.0
  %2412 = vmatpush1.msra.mxu0 0.0
  %2413 = vmatprep.subr.mxu0 0.0
  %2414 = vmatpush1.msra.mxu0 0.0
  %2415 = vmatprep.subr.mxu0 0.0
  %2416 = vmatpush1.msra.mxu0 0.0
  %2417 = vmatprep.subr.mxu0 0.0
  %2418 = vmatpush1.msra.mxu0 0.0
  %2419 = vmatprep.subr.mxu0 0.0
  %2420 = vmatpush1.msra.mxu0 0.0
  %2421 = vmatprep.subr.mxu0 0.0
  %2422 = vmatpush1.msra.mxu0 0.0
  %2423 = vmatprep.subr.mxu0 0.0
  %2424 = vmatpush1.msra.mxu0 0.0
  %2425 = vmatprep.subr.mxu0 0.0
  %2426 = vmatpush1.msra.mxu0 0.0
  %2427 = vmatprep.subr.mxu0 0.0
  %2428 = vmatpush1.msra.mxu0 0.0
  %2429 = vmatprep.subr.mxu0 0.0
  %2430 = vmatpush1.msra.mxu0 0.0
  %2431 = vmatprep.subr.mxu0 0.0
  %2432 = vmatpush1.msra.mxu0 0.0
  %2433 = vmatprep.subr.mxu0 0.0
  %2434 = vmatpush1.msra.mxu0 0.0
  %2435 = vmatprep.subr.mxu0 0.0
  %2436 = vmatpush1.msra.mxu0 0.0
  %2437 = vmatprep.subr.mxu0 0.0
  %2438 = vmatpush1.msra.mxu0 0.0
  %2439 = vmatprep.subr.mxu0 0.0
  %2440 = vmatpush1.msra.mxu0 0.0
  %2441 = vmatprep.subr.mxu0 0.0
  %2442 = vmatpush1.msra.mxu0 0.0
  %2443 = vmatprep.subr.mxu0 0.0
  %2444 = vmatpush1.msra.mxu0 0.0
  %2445 = vmatprep.subr.mxu0 0.0
  %2446 = vmatpush1.msra.mxu0 0.0
  %2447 = vmatprep.subr.mxu0 0.0
  %2448 = vmatpush1.msra.mxu0 0.0
  %2449 = vmatprep.subr.mxu0 0.0
  %2450 = vmatpush1.msra.mxu0 0.0
  %2451 = vmatprep.subr.mxu0 0.0
  %2452 = vmatpush1.msra.mxu0 0.0
  %2453 = vmatprep.subr.mxu0 0.0
  %2454 = vmatpush1.msra.mxu0 0.0
  %2455 = vmatprep.mubr.f32.mxu0 0.0
  %2456 = vmatmul.mubr.f32.gmra.mrb[0].mxu0 %v2389
  %v2457 = vpop.f32.mrb[0].mxu0
  %v2458 = vadd.f32 0.0, %v2457
  %v2459 = vpop.f32.mrb[0].mxu0
  %v2460 = vadd.f32 0.0, %v2459
  %2461 = vdwg.mxu0
  %2462 = vmatprep.subr.mxu0 %v1580
  %2463 = vmatpush1.msra.mxu0 %v1579
  %2464 = vmatprep.subr.mxu0 0.0
  %2465 = vmatpush1.msra.mxu0 0.0
  %2466 = vmatprep.subr.mxu0 0.0
  %2467 = vmatpush1.msra.mxu0 0.0
  %2468 = vmatprep.subr.mxu0 0.0
  %2469 = vmatpush1.msra.mxu0 0.0
  %2470 = vmatprep.subr.mxu0 0.0
  %2471 = vmatpush1.msra.mxu0 0.0
  %2472 = vmatprep.subr.mxu0 0.0
  %2473 = vmatpush1.msra.mxu0 0.0
  %2474 = vmatprep.subr.mxu0 0.0
  %2475 = vmatpush1.msra.mxu0 0.0
  %2476 = vmatprep.subr.mxu0 0.0
  %2477 = vmatpush1.msra.mxu0 0.0
  %2478 = vmatprep.subr.mxu0 0.0
  %2479 = vmatpush1.msra.mxu0 0.0
  %2480 = vmatprep.subr.mxu0 0.0
  %2481 = vmatpush1.msra.mxu0 0.0
  %2482 = vmatprep.subr.mxu0 0.0
  %2483 = vmatpush1.msra.mxu0 0.0
  %2484 = vmatprep.subr.mxu0 0.0
  %2485 = vmatpush1.msra.mxu0 0.0
  %2486 = vmatprep.subr.mxu0 0.0
  %2487 = vmatpush1.msra.mxu0 0.0
  %2488 = vmatprep.subr.mxu0 0.0
  %2489 = vmatpush1.msra.mxu0 0.0
  %2490 = vmatprep.subr.mxu0 0.0
  %2491 = vmatpush1.msra.mxu0 0.0
  %2492 = vmatprep.subr.mxu0 0.0
  %2493 = vmatpush1.msra.mxu0 0.0
  %2494 = vmatprep.subr.mxu0 0.0
  %2495 = vmatpush1.msra.mxu0 0.0
  %2496 = vmatprep.subr.mxu0 0.0
  %2497 = vmatpush1.msra.mxu0 0.0
  %2498 = vmatprep.subr.mxu0 0.0
  %2499 = vmatpush1.msra.mxu0 0.0
  %2500 = vmatprep.subr.mxu0 0.0
  %2501 = vmatpush1.msra.mxu0 0.0
  %2502 = vmatprep.subr.mxu0 0.0
  %2503 = vmatpush1.msra.mxu0 0.0
  %2504 = vmatprep.subr.mxu0 0.0
  %2505 = vmatpush1.msra.mxu0 0.0
  %2506 = vmatprep.subr.mxu0 0.0
  %2507 = vmatpush1.msra.mxu0 0.0
  %2508 = vmatprep.subr.mxu0 0.0
  %2509 = vmatpush1.msra.mxu0 0.0
  %2510 = vmatprep.subr.mxu0 0.0
  %2511 = vmatpush1.msra.mxu0 0.0
  %2512 = vmatprep.subr.mxu0 0.0
  %2513 = vmatpush1.msra.mxu0 0.0
  %2514 = vmatprep.subr.mxu0 0.0
  %2515 = vmatpush1.msra.mxu0 0.0
  %2516 = vmatprep.subr.mxu0 0.0
  %2517 = vmatpush1.msra.mxu0 0.0
  %2518 = vmatprep.subr.mxu0 0.0
  %2519 = vmatpush1.msra.mxu0 0.0
  %2520 = vmatprep.subr.mxu0 0.0
  %2521 = vmatpush1.msra.mxu0 0.0
  %2522 = vmatprep.subr.mxu0 0.0
  %2523 = vmatpush1.msra.mxu0 0.0
  %2524 = vmatprep.subr.mxu0 0.0
  %2525 = vmatpush1.msra.mxu0 0.0
  %2526 = vmatprep.mubr.f32.mxu0 0.0
  %2527 = vmatmul.mubr.f32.gmra.mrb[0].mxu0 %v2389
  %v2528 = vpop.f32.mrb[0].mxu0
  %v2529 = vadd.f32 0.0, %v2528
  %v2530 = vpop.f32.mrb[0].mxu0
  %v2531 = vadd.f32 0.0, %v2530
  %2532 = vdwg.mxu0
  %2533 = vrot.lane.b32.xlu0 %v2458, 110
  %v2534 = vpop.permute.xlu0 %2533
  %2535 = vrot.lane.b32.xlu0 %v2460, 110
  %v2536 = vpop.permute.xlu0 %2535
  %2537 = vrot.lane.b32.xlu0 %v2529, 110
  %v2538 = vpop.permute.xlu0 %2537
  %2539 = vrot.lane.b32.xlu0 %v2531, 110
  %v2540 = vpop.permute.xlu0 %2539
  %v2541 = vsel %vm996, %v2538, %v2540
  %v2542 = vsel %vm996, %v2536, %v2538
  %v2543 = vsel %vm996, %v2534, %v2536
  %v2544 = vsel %vm996, %v2540, %v2534
  %v2545 = vadd.f32 %v2382, %v2543
  %v2546 = vadd.f32 %v2383, %v2542
  %v2547 = vadd.f32 %v2384, %v2541
  %v2548 = vadd.f32 %v2385, %v2544
  %s2549 = scalar_lea.vmem %s2, 48
  %v2550 = vld [vmem:[%s2549] sm:$0xff]
  %v2552 = vsel %vm1588, %v2550, 0
  %2554 = vmatprep.subr.mxu0 %v1578
  %2555 = vmatpush1.msra.mxu0 %v1577
  %2556 = vmatprep.subr.mxu0 0.0
  %2557 = vmatpush1.msra.mxu0 0.0
  %2558 = vmatprep.subr.mxu0 0.0
  %2559 = vmatpush1.msra.mxu0 0.0
  %2560 = vmatprep.subr.mxu0 0.0
  %2561 = vmatpush1.msra.mxu0 0.0
  %2562 = vmatprep.subr.mxu0 0.0
  %2563 = vmatpush1.msra.mxu0 0.0
  %2564 = vmatprep.subr.mxu0 0.0
  %2565 = vmatpush1.msra.mxu0 0.0
  %2566 = vmatprep.subr.mxu0 0.0
  %2567 = vmatpush1.msra.mxu0 0.0
  %2568 = vmatprep.subr.mxu0 0.0
  %2569 = vmatpush1.msra.mxu0 0.0
  %2570 = vmatprep.subr.mxu0 0.0
  %2571 = vmatpush1.msra.mxu0 0.0
  %2572 = vmatprep.subr.mxu0 0.0
  %2573 = vmatpush1.msra.mxu0 0.0
  %2574 = vmatprep.subr.mxu0 0.0
  %2575 = vmatpush1.msra.mxu0 0.0
  %2576 = vmatprep.subr.mxu0 0.0
  %2577 = vmatpush1.msra.mxu0 0.0
  %2578 = vmatprep.subr.mxu0 0.0
  %2579 = vmatpush1.msra.mxu0 0.0
  %2580 = vmatprep.subr.mxu0 0.0
  %2581 = vmatpush1.msra.mxu0 0.0
  %2582 = vmatprep.subr.mxu0 0.0
  %2583 = vmatpush1.msra.mxu0 0.0
  %2584 = vmatprep.subr.mxu0 0.0
  %2585 = vmatpush1.msra.mxu0 0.0
  %2586 = vmatprep.subr.mxu0 0.0
  %2587 = vmatpush1.msra.mxu0 0.0
  %2588 = vmatprep.subr.mxu0 0.0
  %2589 = vmatpush1.msra.mxu0 0.0
  %2590 = vmatprep.subr.mxu0 0.0
  %2591 = vmatpush1.msra.mxu0 0.0
  %2592 = vmatprep.subr.mxu0 0.0
  %2593 = vmatpush1.msra.mxu0 0.0
  %2594 = vmatprep.subr.mxu0 0.0
  %2595 = vmatpush1.msra.mxu0 0.0
  %2596 = vmatprep.subr.mxu0 0.0
  %2597 = vmatpush1.msra.mxu0 0.0
  %2598 = vmatprep.subr.mxu0 0.0
  %2599 = vmatpush1.msra.mxu0 0.0
  %2600 = vmatprep.subr.mxu0 0.0
  %2601 = vmatpush1.msra.mxu0 0.0
  %2602 = vmatprep.subr.mxu0 0.0
  %2603 = vmatpush1.msra.mxu0 0.0
  %2604 = vmatprep.subr.mxu0 0.0
  %2605 = vmatpush1.msra.mxu0 0.0
  %2606 = vmatprep.subr.mxu0 0.0
  %2607 = vmatpush1.msra.mxu0 0.0
  %2608 = vmatprep.subr.mxu0 0.0
  %2609 = vmatpush1.msra.mxu0 0.0
  %2610 = vmatprep.subr.mxu0 0.0
  %2611 = vmatpush1.msra.mxu0 0.0
  %2612 = vmatprep.subr.mxu0 0.0
  %2613 = vmatpush1.msra.mxu0 0.0
  %2614 = vmatprep.subr.mxu0 0.0
  %2615 = vmatpush1.msra.mxu0 0.0
  %2616 = vmatprep.subr.mxu0 0.0
  %2617 = vmatpush1.msra.mxu0 0.0
  %2618 = vmatprep.mubr.f32.mxu0 0.0
  %2619 = vmatmul.mubr.f32.gmra.mrb[0].mxu0 %v2552
  %v2620 = vpop.f32.mrb[0].mxu0
  %v2621 = vadd.f32 0.0, %v2620
  %v2622 = vpop.f32.mrb[0].mxu0
  %v2623 = vadd.f32 0.0, %v2622
  %2624 = vdwg.mxu0
  %2625 = vmatprep.subr.mxu0 %v1580
  %2626 = vmatpush1.msra.mxu0 %v1579
  %2627 = vmatprep.subr.mxu0 0.0
  %2628 = vmatpush1.msra.mxu0 0.0
  %2629 = vmatprep.subr.mxu0 0.0
  %2630 = vmatpush1.msra.mxu0 0.0
  %2631 = vmatprep.subr.mxu0 0.0
  %2632 = vmatpush1.msra.mxu0 0.0
  %2633 = vmatprep.subr.mxu0 0.0
  %2634 = vmatpush1.msra.mxu0 0.0
  %2635 = vmatprep.subr.mxu0 0.0
  %2636 = vmatpush1.msra.mxu0 0.0
  %2637 = vmatprep.subr.mxu0 0.0
  %2638 = vmatpush1.msra.mxu0 0.0
  %2639 = vmatprep.subr.mxu0 0.0
  %2640 = vmatpush1.msra.mxu0 0.0
  %2641 = vmatprep.subr.mxu0 0.0
  %2642 = vmatpush1.msra.mxu0 0.0
  %2643 = vmatprep.subr.mxu0 0.0
  %2644 = vmatpush1.msra.mxu0 0.0
  %2645 = vmatprep.subr.mxu0 0.0
  %2646 = vmatpush1.msra.mxu0 0.0
  %2647 = vmatprep.subr.mxu0 0.0
  %2648 = vmatpush1.msra.mxu0 0.0
  %2649 = vmatprep.subr.mxu0 0.0
  %2650 = vmatpush1.msra.mxu0 0.0
  %2651 = vmatprep.subr.mxu0 0.0
  %2652 = vmatpush1.msra.mxu0 0.0
  %2653 = vmatprep.subr.mxu0 0.0
  %2654 = vmatpush1.msra.mxu0 0.0
  %2655 = vmatprep.subr.mxu0 0.0
  %2656 = vmatpush1.msra.mxu0 0.0
  %2657 = vmatprep.subr.mxu0 0.0
  %2658 = vmatpush1.msra.mxu0 0.0
  %2659 = vmatprep.subr.mxu0 0.0
  %2660 = vmatpush1.msra.mxu0 0.0
  %2661 = vmatprep.subr.mxu0 0.0
  %2662 = vmatpush1.msra.mxu0 0.0
  %2663 = vmatprep.subr.mxu0 0.0
  %2664 = vmatpush1.msra.mxu0 0.0
  %2665 = vmatprep.subr.mxu0 0.0
  %2666 = vmatpush1.msra.mxu0 0.0
  %2667 = vmatprep.subr.mxu0 0.0
  %2668 = vmatpush1.msra.mxu0 0.0
  %2669 = vmatprep.subr.mxu0 0.0
  %2670 = vmatpush1.msra.mxu0 0.0
  %2671 = vmatprep.subr.mxu0 0.0
  %2672 = vmatpush1.msra.mxu0 0.0
  %2673 = vmatprep.subr.mxu0 0.0
  %2674 = vmatpush1.msra.mxu0 0.0
  %2675 = vmatprep.subr.mxu0 0.0
  %2676 = vmatpush1.msra.mxu0 0.0
  %2677 = vmatprep.subr.mxu0 0.0
  %2678 = vmatpush1.msra.mxu0 0.0
  %2679 = vmatprep.subr.mxu0 0.0
  %2680 = vmatpush1.msra.mxu0 0.0
  %2681 = vmatprep.subr.mxu0 0.0
  %2682 = vmatpush1.msra.mxu0 0.0
  %2683 = vmatprep.subr.mxu0 0.0
  %2684 = vmatpush1.msra.mxu0 0.0
  %2685 = vmatprep.subr.mxu0 0.0
  %2686 = vmatpush1.msra.mxu0 0.0
  %2687 = vmatprep.subr.mxu0 0.0
  %2688 = vmatpush1.msra.mxu0 0.0
  %2689 = vmatprep.mubr.f32.mxu0 0.0
  %2690 = vmatmul.mubr.f32.gmra.mrb[0].mxu0 %v2552
  %v2691 = vpop.f32.mrb[0].mxu0
  %v2692 = vadd.f32 0.0, %v2691
  %v2693 = vpop.f32.mrb[0].mxu0
  %v2694 = vadd.f32 0.0, %v2693
  %2695 = vdwg.mxu0
  %2696 = vrot.lane.b32.xlu0 %v2621, 96
  %v2697 = vpop.permute.xlu0 %2696
  %2698 = vrot.lane.b32.xlu0 %v2623, 96
  %v2699 = vpop.permute.xlu0 %2698
  %2700 = vrot.lane.b32.xlu0 %v2692, 96
  %v2701 = vpop.permute.xlu0 %2700
  %2702 = vrot.lane.b32.xlu0 %v2694, 96
  %v2703 = vpop.permute.xlu0 %2702
  %v2704 = vsel %vm1160, %v2701, %v2703
  %v2705 = vsel %vm1160, %v2699, %v2701
  %v2706 = vsel %vm1160, %v2697, %v2699
  %v2707 = vsel %vm1160, %v2703, %v2697
  %v2708 = vadd.f32 %v2545, %v2706
  %v2709 = vadd.f32 %v2546, %v2705
  %v2710 = vadd.f32 %v2547, %v2704
  %v2711 = vadd.f32 %v2548, %v2707
  %s2712 = scalar_lea.vmem %s2, 56
  %v2713 = vld [vmem:[%s2712] sm:$0xff]
  %v2715 = vsel %vm1588, %v2713, 0
  %2717 = vmatprep.subr.mxu0 %v1578
  %2718 = vmatpush1.msra.mxu0 %v1577
  %2719 = vmatprep.subr.mxu0 0.0
  %2720 = vmatpush1.msra.mxu0 0.0
  %2721 = vmatprep.subr.mxu0 0.0
  %2722 = vmatpush1.msra.mxu0 0.0
  %2723 = vmatprep.subr.mxu0 0.0
  %2724 = vmatpush1.msra.mxu0 0.0
  %2725 = vmatprep.subr.mxu0 0.0
  %2726 = vmatpush1.msra.mxu0 0.0
  %2727 = vmatprep.subr.mxu0 0.0
  %2728 = vmatpush1.msra.mxu0 0.0
  %2729 = vmatprep.subr.mxu0 0.0
  %2730 = vmatpush1.msra.mxu0 0.0
  %2731 = vmatprep.subr.mxu0 0.0
  %2732 = vmatpush1.msra.mxu0 0.0
  %2733 = vmatprep.subr.mxu0 0.0
  %2734 = vmatpush1.msra.mxu0 0.0
  %2735 = vmatprep.subr.mxu0 0.0
  %2736 = vmatpush1.msra.mxu0 0.0
  %2737 = vmatprep.subr.mxu0 0.0
  %2738 = vmatpush1.msra.mxu0 0.0
  %2739 = vmatprep.subr.mxu0 0.0
  %2740 = vmatpush1.msra.mxu0 0.0
  %2741 = vmatprep.subr.mxu0 0.0
  %2742 = vmatpush1.msra.mxu0 0.0
  %2743 = vmatprep.subr.mxu0 0.0
  %2744 = vmatpush1.msra.mxu0 0.0
  %2745 = vmatprep.subr.mxu0 0.0
  %2746 = vmatpush1.msra.mxu0 0.0
  %2747 = vmatprep.subr.mxu0 0.0
  %2748 = vmatpush1.msra.mxu0 0.0
  %2749 = vmatprep.subr.mxu0 0.0
  %2750 = vmatpush1.msra.mxu0 0.0
  %2751 = vmatprep.subr.mxu0 0.0
  %2752 = vmatpush1.msra.mxu0 0.0
  %2753 = vmatprep.subr.mxu0 0.0
  %2754 = vmatpush1.msra.mxu0 0.0
  %2755 = vmatprep.subr.mxu0 0.0
  %2756 = vmatpush1.msra.mxu0 0.0
  %2757 = vmatprep.subr.mxu0 0.0
  %2758 = vmatpush1.msra.mxu0 0.0
  %2759 = vmatprep.subr.mxu0 0.0
  %2760 = vmatpush1.msra.mxu0 0.0
  %2761 = vmatprep.subr.mxu0 0.0
  %2762 = vmatpush1.msra.mxu0 0.0
  %2763 = vmatprep.subr.mxu0 0.0
  %2764 = vmatpush1.msra.mxu0 0.0
  %2765 = vmatprep.subr.mxu0 0.0
  %2766 = vmatpush1.msra.mxu0 0.0
  %2767 = vmatprep.subr.mxu0 0.0
  %2768 = vmatpush1.msra.mxu0 0.0
  %2769 = vmatprep.subr.mxu0 0.0
  %2770 = vmatpush1.msra.mxu0 0.0
  %2771 = vmatprep.subr.mxu0 0.0
  %2772 = vmatpush1.msra.mxu0 0.0
  %2773 = vmatprep.subr.mxu0 0.0
  %2774 = vmatpush1.msra.mxu0 0.0
  %2775 = vmatprep.subr.mxu0 0.0
  %2776 = vmatpush1.msra.mxu0 0.0
  %2777 = vmatprep.subr.mxu0 0.0
  %2778 = vmatpush1.msra.mxu0 0.0
  %2779 = vmatprep.subr.mxu0 0.0
  %2780 = vmatpush1.msra.mxu0 0.0
  %2781 = vmatprep.mubr.f32.mxu0 0.0
  %2782 = vmatmul.mubr.f32.gmra.mrb[0].mxu0 %v2715
  %v2783 = vpop.f32.mrb[0].mxu0
  %v2784 = vadd.f32 0.0, %v2783
  %v2785 = vpop.f32.mrb[0].mxu0
  %v2786 = vadd.f32 0.0, %v2785
  %2787 = vdwg.mxu0
  %2788 = vmatprep.subr.mxu0 %v1580
  %2789 = vmatpush1.msra.mxu0 %v1579
  %2790 = vmatprep.subr.mxu0 0.0
  %2791 = vmatpush1.msra.mxu0 0.0
  %2792 = vmatprep.subr.mxu0 0.0
  %2793 = vmatpush1.msra.mxu0 0.0
  %2794 = vmatprep.subr.mxu0 0.0
  %2795 = vmatpush1.msra.mxu0 0.0
  %2796 = vmatprep.subr.mxu0 0.0
  %2797 = vmatpush1.msra.mxu0 0.0
  %2798 = vmatprep.subr.mxu0 0.0
  %2799 = vmatpush1.msra.mxu0 0.0
  %2800 = vmatprep.subr.mxu0 0.0
  %2801 = vmatpush1.msra.mxu0 0.0
  %2802 = vmatprep.subr.mxu0 0.0
  %2803 = vmatpush1.msra.mxu0 0.0
  %2804 = vmatprep.subr.mxu0 0.0
  %2805 = vmatpush1.msra.mxu0 0.0
  %2806 = vmatprep.subr.mxu0 0.0
  %2807 = vmatpush1.msra.mxu0 0.0
  %2808 = vmatprep.subr.mxu0 0.0
  %2809 = vmatpush1.msra.mxu0 0.0
  %2810 = vmatprep.subr.mxu0 0.0
  %2811 = vmatpush1.msra.mxu0 0.0
  %2812 = vmatprep.subr.mxu0 0.0
  %2813 = vmatpush1.msra.mxu0 0.0
  %2814 = vmatprep.subr.mxu0 0.0
  %2815 = vmatpush1.msra.mxu0 0.0
  %2816 = vmatprep.subr.mxu0 0.0
  %2817 = vmatpush1.msra.mxu0 0.0
  %2818 = vmatprep.subr.mxu0 0.0
  %2819 = vmatpush1.msra.mxu0 0.0
  %2820 = vmatprep.subr.mxu0 0.0
  %2821 = vmatpush1.msra.mxu0 0.0
  %2822 = vmatprep.subr.mxu0 0.0
  %2823 = vmatpush1.msra.mxu0 0.0
  %2824 = vmatprep.subr.mxu0 0.0
  %2825 = vmatpush1.msra.mxu0 0.0
  %2826 = vmatprep.subr.mxu0 0.0
  %2827 = vmatpush1.msra.mxu0 0.0
  %2828 = vmatprep.subr.mxu0 0.0
  %2829 = vmatpush1.msra.mxu0 0.0
  %2830 = vmatprep.subr.mxu0 0.0
  %2831 = vmatpush1.msra.mxu0 0.0
  %2832 = vmatprep.subr.mxu0 0.0
  %2833 = vmatpush1.msra.mxu0 0.0
  %2834 = vmatprep.subr.mxu0 0.0
  %2835 = vmatpush1.msra.mxu0 0.0
  %2836 = vmatprep.subr.mxu0 0.0
  %2837 = vmatpush1.msra.mxu0 0.0
  %2838 = vmatprep.subr.mxu0 0.0
  %2839 = vmatpush1.msra.mxu0 0.0
  %2840 = vmatprep.subr.mxu0 0.0
  %2841 = vmatpush1.msra.mxu0 0.0
  %2842 = vmatprep.subr.mxu0 0.0
  %2843 = vmatpush1.msra.mxu0 0.0
  %2844 = vmatprep.subr.mxu0 0.0
  %2845 = vmatpush1.msra.mxu0 0.0
  %2846 = vmatprep.subr.mxu0 0.0
  %2847 = vmatpush1.msra.mxu0 0.0
  %2848 = vmatprep.subr.mxu0 0.0
  %2849 = vmatpush1.msra.mxu0 0.0
  %2850 = vmatprep.subr.mxu0 0.0
  %2851 = vmatpush1.msra.mxu0 0.0
  %2852 = vmatprep.mubr.f32.mxu0 0.0
  %2853 = vmatmul.mubr.f32.gmra.mrb[0].mxu0 %v2715
  %v2854 = vpop.f32.mrb[0].mxu0
  %v2855 = vadd.f32 0.0, %v2854
  %v2856 = vpop.f32.mrb[0].mxu0
  %v2857 = vadd.f32 0.0, %v2856
  %2858 = vdwg.mxu0
  %2859 = vrot.lane.b32.xlu0 %v2784, 95
  %v2860 = vpop.permute.xlu0 %2859
  %2861 = vrot.lane.b32.xlu0 %v2786, 95
  %v2862 = vpop.permute.xlu0 %2861
  %2863 = vrot.lane.b32.xlu0 %v2855, 95
  %v2864 = vpop.permute.xlu0 %2863
  %2865 = vrot.lane.b32.xlu0 %v2857, 95
  %v2866 = vpop.permute.xlu0 %2865
  %v2867 = vsel %vm1324, %v2864, %v2866
  %v2868 = vsel %vm1324, %v2862, %v2864
  %v2869 = vsel %vm1324, %v2860, %v2862
  %v2870 = vsel %vm1324, %v2866, %v2860
  %v2871 = vadd.f32 %v2708, %v2869
  %v2872 = vadd.f32 %v2709, %v2868
  %v2873 = vadd.f32 %v2710, %v2867
  %v2874 = vadd.f32 %v2711, %v2870
  %s2875 = scalar_lea.vmem %s2, 64
  %v2876 = vld [vmem:[%s2875] sm:$0xff]
  %v2878 = vsel %vm1588, %v2876, 0
  %2880 = vmatprep.subr.mxu0 %v1578
  %2881 = vmatpush1.msra.mxu0 %v1577
  %2882 = vmatprep.subr.mxu0 0.0
  %2883 = vmatpush1.msra.mxu0 0.0
  %2884 = vmatprep.subr.mxu0 0.0
  %2885 = vmatpush1.msra.mxu0 0.0
  %2886 = vmatprep.subr.mxu0 0.0
  %2887 = vmatpush1.msra.mxu0 0.0
  %2888 = vmatprep.subr.mxu0 0.0
  %2889 = vmatpush1.msra.mxu0 0.0
  %2890 = vmatprep.subr.mxu0 0.0
  %2891 = vmatpush1.msra.mxu0 0.0
  %2892 = vmatprep.subr.mxu0 0.0
  %2893 = vmatpush1.msra.mxu0 0.0
  %2894 = vmatprep.subr.mxu0 0.0
  %2895 = vmatpush1.msra.mxu0 0.0
  %2896 = vmatprep.subr.mxu0 0.0
  %2897 = vmatpush1.msra.mxu0 0.0
  %2898 = vmatprep.subr.mxu0 0.0
  %2899 = vmatpush1.msra.mxu0 0.0
  %2900 = vmatprep.subr.mxu0 0.0
  %2901 = vmatpush1.msra.mxu0 0.0
  %2902 = vmatprep.subr.mxu0 0.0
  %2903 = vmatpush1.msra.mxu0 0.0
  %2904 = vmatprep.subr.mxu0 0.0
  %2905 = vmatpush1.msra.mxu0 0.0
  %2906 = vmatprep.subr.mxu0 0.0
  %2907 = vmatpush1.msra.mxu0 0.0
  %2908 = vmatprep.subr.mxu0 0.0
  %2909 = vmatpush1.msra.mxu0 0.0
  %2910 = vmatprep.subr.mxu0 0.0
  %2911 = vmatpush1.msra.mxu0 0.0
  %2912 = vmatprep.subr.mxu0 0.0
  %2913 = vmatpush1.msra.mxu0 0.0
  %2914 = vmatprep.subr.mxu0 0.0
  %2915 = vmatpush1.msra.mxu0 0.0
  %2916 = vmatprep.subr.mxu0 0.0
  %2917 = vmatpush1.msra.mxu0 0.0
  %2918 = vmatprep.subr.mxu0 0.0
  %2919 = vmatpush1.msra.mxu0 0.0
  %2920 = vmatprep.subr.mxu0 0.0
  %2921 = vmatpush1.msra.mxu0 0.0
  %2922 = vmatprep.subr.mxu0 0.0
  %2923 = vmatpush1.msra.mxu0 0.0
  %2924 = vmatprep.subr.mxu0 0.0
  %2925 = vmatpush1.msra.mxu0 0.0
  %2926 = vmatprep.subr.mxu0 0.0
  %2927 = vmatpush1.msra.mxu0 0.0
  %2928 = vmatprep.subr.mxu0 0.0
  %2929 = vmatpush1.msra.mxu0 0.0
  %2930 = vmatprep.subr.mxu0 0.0
  %2931 = vmatpush1.msra.mxu0 0.0
  %2932 = vmatprep.subr.mxu0 0.0
  %2933 = vmatpush1.msra.mxu0 0.0
  %2934 = vmatprep.subr.mxu0 0.0
  %2935 = vmatpush1.msra.mxu0 0.0
  %2936 = vmatprep.subr.mxu0 0.0
  %2937 = vmatpush1.msra.mxu0 0.0
  %2938 = vmatprep.subr.mxu0 0.0
  %2939 = vmatpush1.msra.mxu0 0.0
  %2940 = vmatprep.subr.mxu0 0.0
  %2941 = vmatpush1.msra.mxu0 0.0
  %2942 = vmatprep.subr.mxu0 0.0
  %2943 = vmatpush1.msra.mxu0 0.0
  %2944 = vmatprep.mubr.f32.mxu0 0.0
  %2945 = vmatmul.mubr.f32.gmra.mrb[0].mxu0 %v2878
  %v2946 = vpop.f32.mrb[0].mxu0
  %v2947 = vadd.f32 0.0, %v2946
  %v2948 = vpop.f32.mrb[0].mxu0
  %v2949 = vadd.f32 0.0, %v2948
  %2950 = vdwg.mxu0
  %2951 = vmatprep.subr.mxu0 %v1580
  %2952 = vmatpush1.msra.mxu0 %v1579
  %2953 = vmatprep.subr.mxu0 0.0
  %2954 = vmatpush1.msra.mxu0 0.0
  %2955 = vmatprep.subr.mxu0 0.0
  %2956 = vmatpush1.msra.mxu0 0.0
  %2957 = vmatprep.subr.mxu0 0.0
  %2958 = vmatpush1.msra.mxu0 0.0
  %2959 = vmatprep.subr.mxu0 0.0
  %2960 = vmatpush1.msra.mxu0 0.0
  %2961 = vmatprep.subr.mxu0 0.0
  %2962 = vmatpush1.msra.mxu0 0.0
  %2963 = vmatprep.subr.mxu0 0.0
  %2964 = vmatpush1.msra.mxu0 0.0
  %2965 = vmatprep.subr.mxu0 0.0
  %2966 = vmatpush1.msra.mxu0 0.0
  %2967 = vmatprep.subr.mxu0 0.0
  %2968 = vmatpush1.msra.mxu0 0.0
  %2969 = vmatprep.subr.mxu0 0.0
  %2970 = vmatpush1.msra.mxu0 0.0
  %2971 = vmatprep.subr.mxu0 0.0
  %2972 = vmatpush1.msra.mxu0 0.0
  %2973 = vmatprep.subr.mxu0 0.0
  %2974 = vmatpush1.msra.mxu0 0.0
  %2975 = vmatprep.subr.mxu0 0.0
  %2976 = vmatpush1.msra.mxu0 0.0
  %2977 = vmatprep.subr.mxu0 0.0
  %2978 = vmatpush1.msra.mxu0 0.0
  %2979 = vmatprep.subr.mxu0 0.0
  %2980 = vmatpush1.msra.mxu0 0.0
  %2981 = vmatprep.subr.mxu0 0.0
  %2982 = vmatpush1.msra.mxu0 0.0
  %2983 = vmatprep.subr.mxu0 0.0
  %2984 = vmatpush1.msra.mxu0 0.0
  %2985 = vmatprep.subr.mxu0 0.0
  %2986 = vmatpush1.msra.mxu0 0.0
  %2987 = vmatprep.subr.mxu0 0.0
  %2988 = vmatpush1.msra.mxu0 0.0
  %2989 = vmatprep.subr.mxu0 0.0
  %2990 = vmatpush1.msra.mxu0 0.0
  %2991 = vmatprep.subr.mxu0 0.0
  %2992 = vmatpush1.msra.mxu0 0.0
  %2993 = vmatprep.subr.mxu0 0.0
  %2994 = vmatpush1.msra.mxu0 0.0
  %2995 = vmatprep.subr.mxu0 0.0
  %2996 = vmatpush1.msra.mxu0 0.0
  %2997 = vmatprep.subr.mxu0 0.0
  %2998 = vmatpush1.msra.mxu0 0.0
  %2999 = vmatprep.subr.mxu0 0.0
  %3000 = vmatpush1.msra.mxu0 0.0
  %3001 = vmatprep.subr.mxu0 0.0
  %3002 = vmatpush1.msra.mxu0 0.0
  %3003 = vmatprep.subr.mxu0 0.0
  %3004 = vmatpush1.msra.mxu0 0.0
  %3005 = vmatprep.subr.mxu0 0.0
  %3006 = vmatpush1.msra.mxu0 0.0
  %3007 = vmatprep.subr.mxu0 0.0
  %3008 = vmatpush1.msra.mxu0 0.0
  %3009 = vmatprep.subr.mxu0 0.0
  %3010 = vmatpush1.msra.mxu0 0.0
  %3011 = vmatprep.subr.mxu0 0.0
  %3012 = vmatpush1.msra.mxu0 0.0
  %3013 = vmatprep.subr.mxu0 0.0
  %3014 = vmatpush1.msra.mxu0 0.0
  %3015 = vmatprep.mubr.f32.mxu0 0.0
  %3016 = vmatmul.mubr.f32.gmra.mrb[0].mxu0 %v2878
  %v3017 = vpop.f32.mrb[0].mxu0
  %v3018 = vadd.f32 0.0, %v3017
  %v3019 = vpop.f32.mrb[0].mxu0
  %v3020 = vadd.f32 0.0, %v3019
  %3021 = vdwg.mxu0
  %3022 = vrot.lane.b32.xlu0 %v2947, 94
  %v3023 = vpop.permute.xlu0 %3022
  %3024 = vrot.lane.b32.xlu0 %v2949, 94
  %v3025 = vpop.permute.xlu0 %3024
  %3026 = vrot.lane.b32.xlu0 %v3018, 94
  %v3027 = vpop.permute.xlu0 %3026
  %3028 = vrot.lane.b32.xlu0 %v3020, 94
  %v3029 = vpop.permute.xlu0 %3028
  %v3030 = vsel %vm1488, %v3027, %v3029
  %v3031 = vsel %vm1488, %v3025, %v3027
  %v3032 = vsel %vm1488, %v3023, %v3025
  %v3033 = vsel %vm1488, %v3029, %v3023
  %v3034 = vadd.f32 %v2871, %v3032
  %v3035 = vadd.f32 %v2872, %v3031
  %v3036 = vadd.f32 %v2873, %v3030
  %v3037 = vadd.f32 %v2874, %v3033
  %3038 = vrot.lane.b32.xlu0 %v3034, 112
  %v3039 = vpop.permute.xlu0 %3038
  %3040 = vrot.lane.b32.xlu0 %v3035, 112
  %v3041 = vpop.permute.xlu0 %3040
  %3042 = vrot.lane.b32.xlu0 %v3036, 112
  %v3043 = vpop.permute.xlu0 %3042
  %3044 = vrot.lane.b32.xlu0 %v3037, 112
  %v3045 = vpop.permute.xlu0 %3044
  %v3046 = vsel %vm668, %v3043, %v3045
  %v3047 = vsel %vm668, %v3041, %v3043
  %v3048 = vsel %vm668, %v3039, %v3041
  %v3049 = vsel %vm668, %v3045, %v3039
  %v3050 = vmax.f32 %v3034, %v3048
  %v3051 = vmax.f32 %v3035, %v3047
  %v3052 = vmax.f32 %v3036, %v3046
  %v3053 = vmax.f32 %v3037, %v3049
  %3054 = vrot.lane.b32.xlu0 %v3050, 127
  %v3055 = vpop.permute.xlu0 %3054
  %3056 = vrot.lane.b32.xlu0 %v3051, 127
  %v3057 = vpop.permute.xlu0 %3056
  %3058 = vrot.lane.b32.xlu0 %v3052, 127
  %v3059 = vpop.permute.xlu0 %3058
  %3060 = vrot.lane.b32.xlu0 %v3053, 127
  %v3061 = vpop.permute.xlu0 %3060
  %v3062 = vsel %vm199, %v3059, %v3061
  %v3063 = vsel %vm199, %v3057, %v3059
  %v3064 = vsel %vm199, %v3055, %v3057
  %v3065 = vsel %vm199, %v3061, %v3055
  %v3066 = vmax.f32 %v3050, %v3064
  %v3067 = vmax.f32 %v3051, %v3063
  %v3068 = vmax.f32 %v3052, %v3062
  %v3069 = vmax.f32 %v3053, %v3065
  %3070 = vst [vmem:[%s7] sm:$0xff] %v3034
  %3071 = vst [vmem:[%s7 + $0x8] sm:$0xff] %v3035
  %3072 = vst [vmem:[%s6] sm:$0xff] %v3066
  %3073 = vst [vmem:[%s6 + $0x8] sm:$0xff] %v3067
  %s3074 = scalar_lea.vmem %s7, 16
  %3075 = vst [vmem:[%s3074] sm:$0xff] %v3036
  %3076 = vst [vmem:[%s3074 + $0x8] sm:$0xff] %v3037
  %s3077 = scalar_lea.vmem %s6, 16
  %3078 = vst [vmem:[%s3077] sm:$0xff] %v3068
  %3079 = vst [vmem:[%s3077 + $0x8] sm:$0xff] %v3069
  // Predicated region
  $region26: #{downstep_forward.1} parent=0 // pred_check
    _
  $region27: #{downstep_forward.1} parent=0 // pred_check_branch
    %3081 = sbr.rel (0) target = $region29
  $region28: #{downstep_forward.1} parent=0 // pred_region
    _
  $region29: #{downstep_forward.1} parent=0 // pred_fallthru
    _
  // Predicated region
  $region30: #{downstep_forward.1} parent=0 // pred_check
    _
  $region31: #{downstep_forward.1} parent=0 // pred_check_branch
    %3083 = sbr.rel (0) target = $region33
  $region32: #{downstep_forward.1} parent=0 // pred_region
    _
  $region33: #{downstep_forward.1} parent=0 // pred_fallthru
    _
  // Predicated region
  $region34: #{downstep_forward.1} parent=0 // pred_check
    _
  $region35: #{downstep_forward.1} parent=0 // pred_check_branch
    %3085 = sbr.rel (0) target = $region37
  $region36: #{downstep_forward.1} parent=0 // pred_region
    _
  $region37: #{downstep_forward.1} parent=0 // pred_fallthru
    _
  // Predicated region
  $region38: #{downstep_forward.1} parent=0 // pred_check
    _
  $region39: #{downstep_forward.1} parent=0 // pred_check_branch
    %3087 = sbr.rel (0) target = $region41
  $region40: #{downstep_forward.1} parent=0 // pred_region
    _
  $region41: #{downstep_forward.1} parent=0 // pred_fallthru
    _

</llo_original>
